<compile_context>
chip_gen: v6e
topology: v6e:2x2x1
jax: 0.10.0
libtpu: 0.0.40
codegen_flags: <defaults>
</compile_context>

<pallas_src>
import functools

import jax
import jax.numpy as jnp
from jax import lax
from jax.experimental import pallas as pl
from jax.experimental.pallas import tpu as pltpu


# ----------------------------------------------------------------------------
# Bidirectional LSTM layer core (both directions fused), whole sequence
# ----------------------------------------------------------------------------
def _bilstm_core(x_ref, wih_ref, whh_ref, b_ref, out_ref, gin_sc,
                 *, hidden_size, seq_len):
    H = hidden_size
    T = seq_len
    B = x_ref.shape[1]
    Din = x_ref.shape[2]
    G = 8 * H   # fused gate width: [ i | f | g | o ], each 2H = [fwd | bwd]

    # ---- Input projection for the WHOLE sequence, BOTH directions: one MXU
    #      pass (T*B, Din) @ (Din, 8H). Bias add hoisted out of the recurrence.
    x_flat = x_ref[...].reshape(T * B, Din)
    gin_sc[...] = (jnp.dot(x_flat, wih_ref[...],
                           preferred_element_type=jnp.float32)
                   + b_ref[...]).reshape(T, B, G)

    w_blk = whh_ref[...]   # (2H, 8H) block-diagonal recurrent weights

    # Lane masks, hoisted out of the loop (JAX does not CSE broadcasts).
    col = lax.broadcasted_iota(jnp.int32, (B, G), 1)
    fwd_cols = (col % (2 * H)) < H              # fwd-direction columns of every gate
    g_cols = (col >= 4 * H) & (col < 6 * H)     # g-gate columns -> tanh, rest sigmoid

    def body(t, carry):
        h, c = carry                            # (B, 2H) each, layout [fwd | bwd]
        tb = T - 1 - t
        # fwd gates consume gin at time t, bwd gates consume gin at time T-1-t.
        gin_t = jnp.where(fwd_cols, gin_sc[t], gin_sc[tb])
        # Single recurrent matmul per step for both directions: (B,2H)@(2H,8H).
        gates = gin_t + jnp.dot(h, w_blk, preferred_element_type=jnp.float32)
        # Two EUP passes over the whole gates tile instead of per-gate slices.
        act = jnp.where(g_cols, jnp.tanh(gates), jax.nn.sigmoid(gates))
        i = act[:, 0 * H:2 * H]
        f = act[:, 2 * H:4 * H]
        g = act[:, 4 * H:6 * H]
        o = act[:, 6 * H:8 * H]
        c_new = f * c + i * g
        h_new = o * jnp.tanh(c_new)
        # Direct per-step writeback: no scratch slabs, no final concatenate.
        out_ref[t, :, 0:H] = h_new[:, 0:H]
        out_ref[tb, :, H:2 * H] = h_new[:, H:2 * H]
        return (h_new, c_new)

    zero = jnp.zeros((B, 2 * H), jnp.float32)
    unroll = True if T <= 16 else 8
    h, c = lax.fori_loop(0, T, body, (zero, zero), unroll=unroll)
    return h, c


def _bilstm_layer_kernel(x_ref, wih_ref, whh_ref, b_ref,
                         out_ref, gin_sc, *, hidden_size, seq_len):
    _bilstm_core(x_ref, wih_ref, whh_ref, b_ref, out_ref, gin_sc,
                 hidden_size=hidden_size, seq_len=seq_len)


def _bilstm_layer_fc_kernel(x_ref, wih_ref, whh_ref, b_ref, wfc_ref, bfc_ref,
                            out_ref, hc_ref, gin_sc, *, hidden_size, seq_len):
    h, c = _bilstm_core(x_ref, wih_ref, whh_ref, b_ref, out_ref, gin_sc,
                        hidden_size=hidden_size, seq_len=seq_len)
    # Fused fc_hidden / fc_cell epilogue: one block-diagonal matmul on the
    # final carries already live in vregs. Output cols [:H]=hidden, [H:]=cell.
    fc_in = jnp.concatenate([h, c], axis=-1)        # (B, 4H)
    hc_ref[...] = (jnp.dot(fc_in, wfc_ref[...],
                           preferred_element_type=jnp.float32) + bfc_ref[...])


def bilstm_layer(x_seq, w_ih, w_hh_blk, bias, hidden_size, fc_w=None, fc_b=None):
    """One bidirectional LSTM layer over the full sequence in ONE pallas_call.

    x_seq    : (T, B, Din) f32
    w_ih     : (Din, 8H)   fused fwd+bwd input weights (gate layout i|f|g|o, each [fwd|bwd])
    w_hh_blk : (2H, 8H)    block-diagonal recurrent weights
    bias     : (1, 8H)
    fc_w     : (4H, 2H) block-diag [[Wh,0],[0,Wc]]   (layer-0 only)
    fc_b     : (1, 2H)  [bh | bc]                    (layer-0 only)
    returns out (T,B,2H) [, hc (B,2H) = [hidden | cell]]
    """
    T, B, Din = x_seq.shape
    H = hidden_size
    G = 8 * H
    with_fc = fc_w is not None

    flops = 2 * T * B * Din * G + T * 2 * B * (2 * H) * G
    transcendentals = T * B * (2 * G + 2 * H)
    bytes_accessed = 4 * (T * B * Din + Din * G + 2 * H * G + G + T * B * 2 * H)
    if with_fc:
        flops += 2 * B * (4 * H) * (2 * H)
        bytes_accessed += 4 * (4 * H * 2 * H + 2 * H + B * 2 * H)

    in_specs = [
        pl.BlockSpec((T, B, Din), lambda i: (0, 0, 0)),
        pl.BlockSpec((Din, G), lambda i: (0, 0)),
        pl.BlockSpec((2 * H, G), lambda i: (0, 0)),
        pl.BlockSpec((1, G), lambda i: (0, 0)),
    ]
    out_shapes = [jax.ShapeDtypeStruct((T, B, 2 * H), jnp.float32)]
    out_specs = [pl.BlockSpec((T, B, 2 * H), lambda i: (0, 0, 0))]

    if with_fc:
        in_specs += [
            pl.BlockSpec((4 * H, 2 * H), lambda i: (0, 0)),
            pl.BlockSpec((1, 2 * H), lambda i: (0, 0)),
        ]
        out_shapes.append(jax.ShapeDtypeStruct((B, 2 * H), jnp.float32))
        out_specs.append(pl.BlockSpec((B, 2 * H), lambda i: (0, 0)))
        kernel = functools.partial(_bilstm_layer_fc_kernel,
                                   hidden_size=H, seq_len=T)
        args = (x_seq, w_ih, w_hh_blk, bias, fc_w, fc_b)
    else:
        kernel = functools.partial(_bilstm_layer_kernel,
                                   hidden_size=H, seq_len=T)
        args = (x_seq, w_ih, w_hh_blk, bias)

    outs = pl.pallas_call(
        kernel,
        out_shape=tuple(out_shapes),
        grid_spec=pltpu.PrefetchScalarGridSpec(
            num_scalar_prefetch=0,
            grid=(1,),
            in_specs=in_specs,
            out_specs=out_specs,
            scratch_shapes=[pltpu.VMEM((T, B, G), jnp.float32)],  # fused gin
        ),
        compiler_params=pltpu.CompilerParams(
            dimension_semantics=("arbitrary",)),
        cost_estimate=pl.CostEstimate(flops=flops,
                                      transcendentals=transcendentals,
                                      bytes_accessed=bytes_accessed),
    )(*args)

    if with_fc:
        out, hc = outs
        return out, hc
    return outs[0]


# ----------------------------------------------------------------------------
# Parameter init (deterministic, synthetic, PyTorch-like per-direction layout)
# ----------------------------------------------------------------------------
def init_params(key, input_size, embedding_dim, hidden_size, layers_size):
    params = {}
    k = key

    def nrm(k, shape, scale=0.1):
        return (scale * jax.random.normal(k, shape)).astype(jnp.float32)

    k, sub = jax.random.split(k)
    params["embedding"] = nrm(sub, (input_size, embedding_dim))

    H = hidden_size
    for l in range(layers_size):
        d_in = embedding_dim if l == 0 else 2 * hidden_size
        for direction in ("f", "b"):
            k, k1, k2, k3, k4 = jax.random.split(k, 5)
            # stored transposed vs. PyTorch: (Din, 4H) / (H, 4H); gate order i,f,g,o
            params[f"w_ih_l{l}_{direction}"] = nrm(k1, (d_in, 4 * H))
            params[f"w_hh_l{l}_{direction}"] = nrm(k2, (H, 4 * H))
            b_ih = nrm(k3, (4 * H,))
            b_hh = nrm(k4, (4 * H,))
            params[f"b_l{l}_{direction}"] = (b_ih + b_hh).reshape(1, 4 * H)

    k, k1, k2, k3, k4 = jax.random.split(k, 5)
    params["fc_hidden_w"] = nrm(k1, (2 * H, H))
    params["fc_hidden_b"] = nrm(k2, (H,))
    params["fc_cell_w"] = nrm(k3, (2 * H, H))
    params["fc_cell_b"] = nrm(k4, (H,))
    return params


def _interleave_gate_cols(wf, wb, H):
    """(..., 4H) fwd + (..., 4H) bwd -> (..., 8H) with layout i|f|g|o, each [fwd|bwd]."""
    parts = []
    for g in range(4):
        parts.append(wf[..., g * H:(g + 1) * H])
        parts.append(wb[..., g * H:(g + 1) * H])
    return jnp.concatenate(parts, axis=-1)


def fuse_params(params, hidden_size, layers_size):
    """Build the fused kernel-side weight layouts ONCE (host-side concatenation)."""
    H = hidden_size
    fused = {"embedding": params["embedding"]}
    for l in range(layers_size):
        fused[f"w_ih_l{l}"] = _interleave_gate_cols(
            params[f"w_ih_l{l}_f"], params[f"w_ih_l{l}_b"], H)          # (Din, 8H)
        zf = jnp.zeros_like(params[f"w_hh_l{l}_f"])
        top = _interleave_gate_cols(params[f"w_hh_l{l}_f"], zf, H)
        bot = _interleave_gate_cols(zf, params[f"w_hh_l{l}_b"], H)
        fused[f"w_hh_l{l}"] = jnp.concatenate([top, bot], axis=0)       # (2H, 8H)
        fused[f"b_l{l}"] = _interleave_gate_cols(
            params[f"b_l{l}_f"], params[f"b_l{l}_b"], H)                # (1, 8H)
    zh = jnp.zeros((2 * H, H), jnp.float32)
    fused["fc_w"] = jnp.concatenate(
        [jnp.concatenate([params["fc_hidden_w"], zh], axis=1),
         jnp.concatenate([zh, params["fc_cell_w"]], axis=1)], axis=0)   # (4H, 2H)
    fused["fc_b"] = jnp.concatenate(
        [params["fc_hidden_b"], params["fc_cell_b"]]).reshape(1, 2 * H)
    return fused


# ----------------------------------------------------------------------------
# Encoder forward
# ----------------------------------------------------------------------------
def encoder_forward(x_tokens, params, hidden_size, layers_size):
    T, B = x_tokens.shape
    # Pad batch to a sublane multiple (8); LSTM rows are independent, padded
    # rows are exact no-ops for the real rows and are sliced off below.
    B_pad = ((B + 7) // 8) * 8
    if B_pad != B:
        x_tokens = jnp.pad(x_tokens, ((0, 0), (0, B_pad - B)))

    # Embedding lookup (XLA glue).
    emb = jnp.take(params["embedding"], x_tokens, axis=0)   # (T, B_pad, E)
    # TODO(synk): dropout implemented as identity (eval-mode); training-mode RNG dropout omitted.
    x = emb.astype(jnp.float32)

    hc0 = None
    for l in range(layers_size):
        if l == 0:
            # fc_hidden/fc_cell consume the LAYER-0 fwd/bwd finals
            # (PyTorch hidden[0:1], hidden[1:2]) -> fused into this kernel's epilogue.
            x, hc0 = bilstm_layer(
                x, params["w_ih_l0"], params["w_hh_l0"], params["b_l0"],
                hidden_size, fc_w=params["fc_w"], fc_b=params["fc_b"])
        else:
            x = bilstm_layer(
                x, params[f"w_ih_l{l}"], params[f"w_hh_l{l}"], params[f"b_l{l}"],
                hidden_size)

    encoder_states = x[:, :B]                       # (T, B, 2H)
    hidden = hc0[:B, :hidden_size][None]            # (1, B, H)
    cell = hc0[:B, hidden_size:][None]              # (1, B, H)
    return encoder_states, hidden, cell


# ----------------------------------------------------------------------------
if __name__ == "__main__":
    # Small, module-consistent shapes.
    input_size = 50        # vocab
    embedding_dim = 32
    hidden_size = 32
    layers_size = 2
    dropout_prob = 0.1     # unused (eval-mode identity)

    seq_len = 8
    batch = 2

    key = jax.random.PRNGKey(0)
    kp, kx = jax.random.split(key)
    params = init_params(kp, input_size, embedding_dim, hidden_size, layers_size)
    fused_params = fuse_params(params, hidden_size, layers_size)
    x = jax.random.randint(kx, (seq_len, batch), 0, input_size, dtype=jnp.int32)

    fwd = jax.jit(functools.partial(encoder_forward,
                                    hidden_size=hidden_size,
                                    layers_size=layers_size))
    encoder_states, hidden, cell = fwd(x, fused_params)
    jax.block_until_ready((encoder_states, hidden, cell))

    assert encoder_states.shape == (seq_len, batch, 2 * hidden_size)
    assert hidden.shape == (1, batch, hidden_size)
    assert cell.shape == (1, batch, hidden_size)
    print("KERNEL_OK")
</pallas_src>

<mosaic_0001>
module attributes {stable_mosaic.version = 11 : i64} {
  func.func @_bilstm_layer_kernel(%arg0: i32, %arg1: memref<8x8x64xf32, #tpu.memory_space<vmem>>, %arg2: memref<64x256xf32, #tpu.memory_space<vmem>>, %arg3: memref<64x256xf32, #tpu.memory_space<vmem>>, %arg4: memref<1x256xf32, #tpu.memory_space<vmem>>, %arg5: memref<8x8x64xf32, #tpu.memory_space<vmem>>, %arg6: memref<8x8x256xf32, #tpu.memory_space<vmem>>) attributes {dimension_semantics = [#tpu.dimension_semantics<arbitrary>], iteration_bounds = array<i64: 1>, scalar_prefetch = 0 : i64, scratch_operands = 1 : i64, tpu.core_type = #tpu.core_type<tc>, window_params = [{pipeline_mode = #tpu.pipeline_mode<synchronous>, transform_indices = @transform_0, window_bounds = array<i64: 8, 8, 64>}, {pipeline_mode = #tpu.pipeline_mode<synchronous>, transform_indices = @transform_1, window_bounds = array<i64: 64, 256>}, {pipeline_mode = #tpu.pipeline_mode<synchronous>, transform_indices = @transform_2, window_bounds = array<i64: 64, 256>}, {pipeline_mode = #tpu.pipeline_mode<synchronous>, transform_indices = @transform_3, window_bounds = array<i64: 1, 256>}, {pipeline_mode = #tpu.pipeline_mode<synchronous>, transform_indices = @transform_4, window_bounds = array<i64: 8, 8, 64>}]} {
    %c0 = arith.constant 0 : index
    %c0_0 = arith.constant 0 : index
    %c0_1 = arith.constant 0 : index
    %0 = vector.load %arg1[%c0, %c0_0, %c0_1] : memref<8x8x64xf32, #tpu.memory_space<vmem>>, vector<8x8x64xf32>
    %1 = vector.shape_cast %0 : vector<8x8x64xf32> to vector<64x64xf32>
    %c0_2 = arith.constant 0 : index
    %c0_3 = arith.constant 0 : index
    %2 = vector.load %arg2[%c0_2, %c0_3] : memref<64x256xf32, #tpu.memory_space<vmem>>, vector<64x256xf32>
    %cst = arith.constant dense<0.000000e+00> : vector<64x256xf32>
    %3 = tpu.matmul %1, %2, %cst {dimension_numbers = #tpu.dot_dimension_numbers<[1], [0], [0], [1], [0, 0, 1, 1], [], []>} : vector<64x64xf32>, vector<64x256xf32>, vector<64x256xf32> -> vector<64x256xf32>
    %c0_4 = arith.constant 0 : index
    %c0_5 = arith.constant 0 : index
    %4 = vector.load %arg4[%c0_4, %c0_5] : memref<1x256xf32, #tpu.memory_space<vmem>>, vector<1x256xf32>
    %5 = vector.broadcast %4 : vector<1x256xf32> to vector<64x256xf32>
    %6 = arith.addf %3, %5 : vector<64x256xf32>
    %7 = vector.shape_cast %6 : vector<64x256xf32> to vector<8x8x256xf32>
    %c0_6 = arith.constant 0 : index
    %c0_7 = arith.constant 0 : index
    %c0_8 = arith.constant 0 : index
    %8 = vector.load %arg6[%c0_6, %c0_7, %c0_8] : memref<8x8x256xf32, #tpu.memory_space<vmem>>, vector<8x8x256xf32>
    tpu.vector_store %arg6[%c0_6, %c0_7, %c0_8], %7 {strides = array<i32>} : memref<8x8x256xf32, #tpu.memory_space<vmem>>, vector<8x8x256xf32>,
    %c0_9 = arith.constant 0 : index
    %c0_10 = arith.constant 0 : index
    %9 = vector.load %arg3[%c0_9, %c0_10] : memref<64x256xf32, #tpu.memory_space<vmem>>, vector<64x256xf32>
    %10 = tpu.iota {dimensions = array<i32: 1>} : vector<8x256xi32>
    %c64_i32 = arith.constant 64 : i32
    %c0_i32 = arith.constant 0 : i32
    %11 = arith.cmpi eq, %c64_i32, %c0_i32 : i32
    %c1_i32 = arith.constant 1 : i32
    %12 = arith.select %11, %c1_i32, %c64_i32 : i32
    %13 = vector.broadcast %12 : i32 to vector<8x256xi32>
    %14 = arith.remsi %10, %13 : vector<8x256xi32>
    %c0_i32_11 = arith.constant 0 : i32
    %15 = vector.broadcast %c0_i32_11 : i32 to vector<8x256xi32>
    %16 = arith.cmpi ne, %14, %15 : vector<8x256xi32>
    %c0_i32_12 = arith.constant 0 : i32
    %17 = vector.broadcast %c0_i32_12 : i32 to vector<8x256xi32>
    %18 = arith.cmpi slt, %14, %17 : vector<8x256xi32>
    %c0_i32_13 = arith.constant 0 : i32
    %19 = arith.cmpi slt, %12, %c0_i32_13 : i32
    %20 = vector.broadcast %19 : i1 to vector<8x256xi1>
    %21 = vector.broadcast %20 : vector<8x256xi1> to vector<8x256xi1>
    %22 = arith.xori %18, %21 : vector<8x256xi1>
    %23 = arith.andi %22, %16 : vector<8x256xi1>
    %24 = vector.broadcast %12 : i32 to vector<8x256xi32>
    %25 = arith.addi %14, %24 : vector<8x256xi32>
    %26 = arith.select %23, %25, %14 : vector<8x256xi1>, vector<8x256xi32>
    %c32_i32 = arith.constant 32 : i32
    %27 = vector.broadcast %c32_i32 : i32 to vector<8x256xi32>
    %28 = arith.cmpi slt, %26, %27 : vector<8x256xi32>
    %c128_i32 = arith.constant 128 : i32
    %29 = vector.broadcast %c128_i32 : i32 to vector<8x256xi32>
    %30 = arith.cmpi sge, %10, %29 : vector<8x256xi32>
    %c192_i32 = arith.constant 192 : i32
    %31 = vector.broadcast %c192_i32 : i32 to vector<8x256xi32>
    %32 = arith.cmpi slt, %10, %31 : vector<8x256xi32>
    %33 = arith.andi %30, %32 : vector<8x256xi1>
    %cst_14 = arith.constant 0.000000e+00 : f32
    %34 = vector.broadcast %cst_14 : f32 to vector<8x64xf32>
    %c0_i32_15 = arith.constant 0 : i32
    %c7_i32 = arith.constant 7 : i32
    %35 = arith.subi %c7_i32, %c0_i32_15 : i32
    %36 = arith.index_cast %c0_i32_15 : i32 to index
    %c0_16 = arith.constant 0 : index
    %c0_17 = arith.constant 0 : index
    %37 = vector.load %arg6[%36, %c0_16, %c0_17] : memref<8x8x256xf32, #tpu.memory_space<vmem>>, vector<1x8x256xf32>
    %38 = vector.shape_cast %37 : vector<1x8x256xf32> to vector<8x256xf32>
    %39 = arith.index_cast %35 : i32 to index
    %c0_18 = arith.constant 0 : index
    %c0_19 = arith.constant 0 : index
    %40 = vector.load %arg6[%39, %c0_18, %c0_19] : memref<8x8x256xf32, #tpu.memory_space<vmem>>, vector<1x8x256xf32>
    %41 = vector.shape_cast %40 : vector<1x8x256xf32> to vector<8x256xf32>
    %42 = arith.select %28, %38, %41 : vector<8x256xi1>, vector<8x256xf32>
    %cst_20 = arith.constant dense<0.000000e+00> : vector<8x256xf32>
    %43 = tpu.matmul %34, %9, %cst_20 {dimension_numbers = #tpu.dot_dimension_numbers<[1], [0], [0], [1], [0, 0, 1, 1], [], []>} : vector<8x64xf32>, vector<64x256xf32>, vector<8x256xf32> -> vector<8x256xf32>
    %44 = arith.addf %42, %43 : vector<8x256xf32>
    %45 = math.tanh %44 : vector<8x256xf32>
    %46 = arith.negf %44 : vector<8x256xf32>
    %47 = math.exp %46 : vector<8x256xf32>
    %cst_21 = arith.constant 1.000000e+00 : f32
    %48 = vector.broadcast %cst_21 : f32 to vector<8x256xf32>
    %49 = arith.addf %48, %47 : vector<8x256xf32>
    %50 = arith.divf %48, %49 : vector<8x256xf32>
    %51 = arith.select %33, %45, %50 : vector<8x256xi1>, vector<8x256xf32>
    %52 = vector.extract_strided_slice %51 {offsets = [0, 0], sizes = [8, 64], strides = [1, 1]} : vector<8x256xf32> to vector<8x64xf32>
    %53 = vector.extract_strided_slice %51 {offsets = [0, 64], sizes = [8, 64], strides = [1, 1]} : vector<8x256xf32> to vector<8x64xf32>
    %54 = vector.extract_strided_slice %51 {offsets = [0, 128], sizes = [8, 64], strides = [1, 1]} : vector<8x256xf32> to vector<8x64xf32>
    %55 = vector.extract_strided_slice %51 {offsets = [0, 192], sizes = [8, 64], strides = [1, 1]} : vector<8x256xf32> to vector<8x64xf32>
    %56 = arith.mulf %53, %34 : vector<8x64xf32>
    %57 = arith.mulf %52, %54 : vector<8x64xf32>
    %58 = arith.addf %56, %57 : vector<8x64xf32>
    %59 = math.tanh %58 : vector<8x64xf32>
    %60 = arith.mulf %55, %59 : vector<8x64xf32>
    %61 = vector.extract_strided_slice %60 {offsets = [0, 0], sizes = [8, 32], strides = [1, 1]} : vector<8x64xf32> to vector<8x32xf32>
    %62 = arith.index_cast %c0_i32_15 : i32 to index
    %c0_22 = arith.constant 0 : index
    %c0_23 = arith.constant 0 : index
    %63 = vector.load %arg5[%62, %c0_22, %c0_23] : memref<8x8x64xf32, #tpu.memory_space<vmem>>, vector<1x8x32xf32>
    %64 = vector.shape_cast %63 : vector<1x8x32xf32> to vector<8x32xf32>
    %65 = vector.shape_cast %61 : vector<8x32xf32> to vector<1x8x32xf32>
    tpu.vector_store %arg5[%62, %c0_22, %c0_23], %65 {strides = array<i32>} : memref<8x8x64xf32, #tpu.memory_space<vmem>>, vector<1x8x32xf32>,
    %66 = vector.extract_strided_slice %60 {offsets = [0, 32], sizes = [8, 32], strides = [1, 1]} : vector<8x64xf32> to vector<8x32xf32>
    %67 = arith.index_cast %35 : i32 to index
    %c0_24 = arith.constant 0 : index
    %c32 = arith.constant 32 : index
    %68 = vector.load %arg5[%67, %c0_24, %c32] : memref<8x8x64xf32, #tpu.memory_space<vmem>>, vector<1x8x32xf32>
    %69 = vector.shape_cast %68 : vector<1x8x32xf32> to vector<8x32xf32>
    %70 = vector.shape_cast %66 : vector<8x32xf32> to vector<1x8x32xf32>
    tpu.vector_store %arg5[%67, %c0_24, %c32], %70 {strides = array<i32>} : memref<8x8x64xf32, #tpu.memory_space<vmem>>, vector<1x8x32xf32>,
    %c1_i32_25 = arith.constant 1 : i32
    %c7_i32_26 = arith.constant 7 : i32
    %71 = arith.subi %c7_i32_26, %c1_i32_25 : i32
    %72 = arith.index_cast %c1_i32_25 : i32 to index
    %c0_27 = arith.constant 0 : index
    %c0_28 = arith.constant 0 : index
    %73 = vector.load %arg6[%72, %c0_27, %c0_28] : memref<8x8x256xf32, #tpu.memory_space<vmem>>, vector<1x8x256xf32>
    %74 = vector.shape_cast %73 : vector<1x8x256xf32> to vector<8x256xf32>
    %75 = arith.index_cast %71 : i32 to index
    %c0_29 = arith.constant 0 : index
    %c0_30 = arith.constant 0 : index
    %76 = vector.load %arg6[%75, %c0_29, %c0_30] : memref<8x8x256xf32, #tpu.memory_space<vmem>>, vector<1x8x256xf32>
    %77 = vector.shape_cast %76 : vector<1x8x256xf32> to vector<8x256xf32>
    %78 = arith.select %28, %74, %77 : vector<8x256xi1>, vector<8x256xf32>
    %cst_31 = arith.constant dense<0.000000e+00> : vector<8x256xf32>
    %79 = tpu.matmul %60, %9, %cst_31 {dimension_numbers = #tpu.dot_dimension_numbers<[1], [0], [0], [1], [0, 0, 1, 1], [], []>} : vector<8x64xf32>, vector<64x256xf32>, vector<8x256xf32> -> vector<8x256xf32>
    %80 = arith.addf %78, %79 : vector<8x256xf32>
    %81 = math.tanh %80 : vector<8x256xf32>
    %82 = arith.negf %80 : vector<8x256xf32>
    %83 = math.exp %82 : vector<8x256xf32>
    %cst_32 = arith.constant 1.000000e+00 : f32
    %84 = vector.broadcast %cst_32 : f32 to vector<8x256xf32>
    %85 = arith.addf %84, %83 : vector<8x256xf32>
    %86 = arith.divf %84, %85 : vector<8x256xf32>
    %87 = arith.select %33, %81, %86 : vector<8x256xi1>, vector<8x256xf32>
    %88 = vector.extract_strided_slice %87 {offsets = [0, 0], sizes = [8, 64], strides = [1, 1]} : vector<8x256xf32> to vector<8x64xf32>
    %89 = vector.extract_strided_slice %87 {offsets = [0, 64], sizes = [8, 64], strides = [1, 1]} : vector<8x256xf32> to vector<8x64xf32>
    %90 = vector.extract_strided_slice %87 {offsets = [0, 128], sizes = [8, 64], strides = [1, 1]} : vector<8x256xf32> to vector<8x64xf32>
    %91 = vector.extract_strided_slice %87 {offsets = [0, 192], sizes = [8, 64], strides = [1, 1]} : vector<8x256xf32> to vector<8x64xf32>
    %92 = arith.mulf %89, %58 : vector<8x64xf32>
    %93 = arith.mulf %88, %90 : vector<8x64xf32>
    %94 = arith.addf %92, %93 : vector<8x64xf32>
    %95 = math.tanh %94 : vector<8x64xf32>
    %96 = arith.mulf %91, %95 : vector<8x64xf32>
    %97 = vector.extract_strided_slice %96 {offsets = [0, 0], sizes = [8, 32], strides = [1, 1]} : vector<8x64xf32> to vector<8x32xf32>
    %98 = arith.index_cast %c1_i32_25 : i32 to index
    %c0_33 = arith.constant 0 : index
    %c0_34 = arith.constant 0 : index
    %99 = vector.load %arg5[%98, %c0_33, %c0_34] : memref<8x8x64xf32, #tpu.memory_space<vmem>>, vector<1x8x32xf32>
    %100 = vector.shape_cast %99 : vector<1x8x32xf32> to vector<8x32xf32>
    %101 = vector.shape_cast %97 : vector<8x32xf32> to vector<1x8x32xf32>
    tpu.vector_store %arg5[%98, %c0_33, %c0_34], %101 {strides = array<i32>} : memref<8x8x64xf32, #tpu.memory_space<vmem>>, vector<1x8x32xf32>,
    %102 = vector.extract_strided_slice %96 {offsets = [0, 32], sizes = [8, 32], strides = [1, 1]} : vector<8x64xf32> to vector<8x32xf32>
    %103 = arith.index_cast %71 : i32 to index
    %c0_35 = arith.constant 0 : index
    %c32_36 = arith.constant 32 : index
    %104 = vector.load %arg5[%103, %c0_35, %c32_36] : memref<8x8x64xf32, #tpu.memory_space<vmem>>, vector<1x8x32xf32>
    %105 = vector.shape_cast %104 : vector<1x8x32xf32> to vector<8x32xf32>
    %106 = vector.shape_cast %102 : vector<8x32xf32> to vector<1x8x32xf32>
    tpu.vector_store %arg5[%103, %c0_35, %c32_36], %106 {strides = array<i32>} : memref<8x8x64xf32, #tpu.memory_space<vmem>>, vector<1x8x32xf32>,
    %c2_i32 = arith.constant 2 : i32
    %c7_i32_37 = arith.constant 7 : i32
    %107 = arith.subi %c7_i32_37, %c2_i32 : i32
    %108 = arith.index_cast %c2_i32 : i32 to index
    %c0_38 = arith.constant 0 : index
    %c0_39 = arith.constant 0 : index
    %109 = vector.load %arg6[%108, %c0_38, %c0_39] : memref<8x8x256xf32, #tpu.memory_space<vmem>>, vector<1x8x256xf32>
    %110 = vector.shape_cast %109 : vector<1x8x256xf32> to vector<8x256xf32>
    %111 = arith.index_cast %107 : i32 to index
    %c0_40 = arith.constant 0 : index
    %c0_41 = arith.constant 0 : index
    %112 = vector.load %arg6[%111, %c0_40, %c0_41] : memref<8x8x256xf32, #tpu.memory_space<vmem>>, vector<1x8x256xf32>
    %113 = vector.shape_cast %112 : vector<1x8x256xf32> to vector<8x256xf32>
    %114 = arith.select %28, %110, %113 : vector<8x256xi1>, vector<8x256xf32>
    %cst_42 = arith.constant dense<0.000000e+00> : vector<8x256xf32>
    %115 = tpu.matmul %96, %9, %cst_42 {dimension_numbers = #tpu.dot_dimension_numbers<[1], [0], [0], [1], [0, 0, 1, 1], [], []>} : vector<8x64xf32>, vector<64x256xf32>, vector<8x256xf32> -> vector<8x256xf32>
    %116 = arith.addf %114, %115 : vector<8x256xf32>
    %117 = math.tanh %116 : vector<8x256xf32>
    %118 = arith.negf %116 : vector<8x256xf32>
    %119 = math.exp %118 : vector<8x256xf32>
    %cst_43 = arith.constant 1.000000e+00 : f32
    %120 = vector.broadcast %cst_43 : f32 to vector<8x256xf32>
    %121 = arith.addf %120, %119 : vector<8x256xf32>
    %122 = arith.divf %120, %121 : vector<8x256xf32>
    %123 = arith.select %33, %117, %122 : vector<8x256xi1>, vector<8x256xf32>
    %124 = vector.extract_strided_slice %123 {offsets = [0, 0], sizes = [8, 64], strides = [1, 1]} : vector<8x256xf32> to vector<8x64xf32>
    %125 = vector.extract_strided_slice %123 {offsets = [0, 64], sizes = [8, 64], strides = [1, 1]} : vector<8x256xf32> to vector<8x64xf32>
    %126 = vector.extract_strided_slice %123 {offsets = [0, 128], sizes = [8, 64], strides = [1, 1]} : vector<8x256xf32> to vector<8x64xf32>
    %127 = vector.extract_strided_slice %123 {offsets = [0, 192], sizes = [8, 64], strides = [1, 1]} : vector<8x256xf32> to vector<8x64xf32>
    %128 = arith.mulf %125, %94 : vector<8x64xf32>
    %129 = arith.mulf %124, %126 : vector<8x64xf32>
    %130 = arith.addf %128, %129 : vector<8x64xf32>
    %131 = math.tanh %130 : vector<8x64xf32>
    %132 = arith.mulf %127, %131 : vector<8x64xf32>
    %133 = vector.extract_strided_slice %132 {offsets = [0, 0], sizes = [8, 32], strides = [1, 1]} : vector<8x64xf32> to vector<8x32xf32>
    %134 = arith.index_cast %c2_i32 : i32 to index
    %c0_44 = arith.constant 0 : index
    %c0_45 = arith.constant 0 : index
    %135 = vector.load %arg5[%134, %c0_44, %c0_45] : memref<8x8x64xf32, #tpu.memory_space<vmem>>, vector<1x8x32xf32>
    %136 = vector.shape_cast %135 : vector<1x8x32xf32> to vector<8x32xf32>
    %137 = vector.shape_cast %133 : vector<8x32xf32> to vector<1x8x32xf32>
    tpu.vector_store %arg5[%134, %c0_44, %c0_45], %137 {strides = array<i32>} : memref<8x8x64xf32, #tpu.memory_space<vmem>>, vector<1x8x32xf32>,
    %138 = vector.extract_strided_slice %132 {offsets = [0, 32], sizes = [8, 32], strides = [1, 1]} : vector<8x64xf32> to vector<8x32xf32>
    %139 = arith.index_cast %107 : i32 to index
    %c0_46 = arith.constant 0 : index
    %c32_47 = arith.constant 32 : index
    %140 = vector.load %arg5[%139, %c0_46, %c32_47] : memref<8x8x64xf32, #tpu.memory_space<vmem>>, vector<1x8x32xf32>
    %141 = vector.shape_cast %140 : vector<1x8x32xf32> to vector<8x32xf32>
    %142 = vector.shape_cast %138 : vector<8x32xf32> to vector<1x8x32xf32>
    tpu.vector_store %arg5[%139, %c0_46, %c32_47], %142 {strides = array<i32>} : memref<8x8x64xf32, #tpu.memory_space<vmem>>, vector<1x8x32xf32>,
    %c3_i32 = arith.constant 3 : i32
    %c7_i32_48 = arith.constant 7 : i32
    %143 = arith.subi %c7_i32_48, %c3_i32 : i32
    %144 = arith.index_cast %c3_i32 : i32 to index
    %c0_49 = arith.constant 0 : index
    %c0_50 = arith.constant 0 : index
    %145 = vector.load %arg6[%144, %c0_49, %c0_50] : memref<8x8x256xf32, #tpu.memory_space<vmem>>, vector<1x8x256xf32>
    %146 = vector.shape_cast %145 : vector<1x8x256xf32> to vector<8x256xf32>
    %147 = arith.index_cast %143 : i32 to index
    %c0_51 = arith.constant 0 : index
    %c0_52 = arith.constant 0 : index
    %148 = vector.load %arg6[%147, %c0_51, %c0_52] : memref<8x8x256xf32, #tpu.memory_space<vmem>>, vector<1x8x256xf32>
    %149 = vector.shape_cast %148 : vector<1x8x256xf32> to vector<8x256xf32>
    %150 = arith.select %28, %146, %149 : vector<8x256xi1>, vector<8x256xf32>
    %cst_53 = arith.constant dense<0.000000e+00> : vector<8x256xf32>
    %151 = tpu.matmul %132, %9, %cst_53 {dimension_numbers = #tpu.dot_dimension_numbers<[1], [0], [0], [1], [0, 0, 1, 1], [], []>} : vector<8x64xf32>, vector<64x256xf32>, vector<8x256xf32> -> vector<8x256xf32>
    %152 = arith.addf %150, %151 : vector<8x256xf32>
    %153 = math.tanh %152 : vector<8x256xf32>
    %154 = arith.negf %152 : vector<8x256xf32>
    %155 = math.exp %154 : vector<8x256xf32>
    %cst_54 = arith.constant 1.000000e+00 : f32
    %156 = vector.broadcast %cst_54 : f32 to vector<8x256xf32>
    %157 = arith.addf %156, %155 : vector<8x256xf32>
    %158 = arith.divf %156, %157 : vector<8x256xf32>
    %159 = arith.select %33, %153, %158 : vector<8x256xi1>, vector<8x256xf32>
    %160 = vector.extract_strided_slice %159 {offsets = [0, 0], sizes = [8, 64], strides = [1, 1]} : vector<8x256xf32> to vector<8x64xf32>
    %161 = vector.extract_strided_slice %159 {offsets = [0, 64], sizes = [8, 64], strides = [1, 1]} : vector<8x256xf32> to vector<8x64xf32>
    %162 = vector.extract_strided_slice %159 {offsets = [0, 128], sizes = [8, 64], strides = [1, 1]} : vector<8x256xf32> to vector<8x64xf32>
    %163 = vector.extract_strided_slice %159 {offsets = [0, 192], sizes = [8, 64], strides = [1, 1]} : vector<8x256xf32> to vector<8x64xf32>
    %164 = arith.mulf %161, %130 : vector<8x64xf32>
    %165 = arith.mulf %160, %162 : vector<8x64xf32>
    %166 = arith.addf %164, %165 : vector<8x64xf32>
    %167 = math.tanh %166 : vector<8x64xf32>
    %168 = arith.mulf %163, %167 : vector<8x64xf32>
    %169 = vector.extract_strided_slice %168 {offsets = [0, 0], sizes = [8, 32], strides = [1, 1]} : vector<8x64xf32> to vector<8x32xf32>
    %170 = arith.index_cast %c3_i32 : i32 to index
    %c0_55 = arith.constant 0 : index
    %c0_56 = arith.constant 0 : index
    %171 = vector.load %arg5[%170, %c0_55, %c0_56] : memref<8x8x64xf32, #tpu.memory_space<vmem>>, vector<1x8x32xf32>
    %172 = vector.shape_cast %171 : vector<1x8x32xf32> to vector<8x32xf32>
    %173 = vector.shape_cast %169 : vector<8x32xf32> to vector<1x8x32xf32>
    tpu.vector_store %arg5[%170, %c0_55, %c0_56], %173 {strides = array<i32>} : memref<8x8x64xf32, #tpu.memory_space<vmem>>, vector<1x8x32xf32>,
    %174 = vector.extract_strided_slice %168 {offsets = [0, 32], sizes = [8, 32], strides = [1, 1]} : vector<8x64xf32> to vector<8x32xf32>
    %175 = arith.index_cast %143 : i32 to index
    %c0_57 = arith.constant 0 : index
    %c32_58 = arith.constant 32 : index
    %176 = vector.load %arg5[%175, %c0_57, %c32_58] : memref<8x8x64xf32, #tpu.memory_space<vmem>>, vector<1x8x32xf32>
    %177 = vector.shape_cast %176 : vector<1x8x32xf32> to vector<8x32xf32>
    %178 = vector.shape_cast %174 : vector<8x32xf32> to vector<1x8x32xf32>
    tpu.vector_store %arg5[%175, %c0_57, %c32_58], %178 {strides = array<i32>} : memref<8x8x64xf32, #tpu.memory_space<vmem>>, vector<1x8x32xf32>,
    %c4_i32 = arith.constant 4 : i32
    %c7_i32_59 = arith.constant 7 : i32
    %179 = arith.subi %c7_i32_59, %c4_i32 : i32
    %180 = arith.index_cast %c4_i32 : i32 to index
    %c0_60 = arith.constant 0 : index
    %c0_61 = arith.constant 0 : index
    %181 = vector.load %arg6[%180, %c0_60, %c0_61] : memref<8x8x256xf32, #tpu.memory_space<vmem>>, vector<1x8x256xf32>
    %182 = vector.shape_cast %181 : vector<1x8x256xf32> to vector<8x256xf32>
    %183 = arith.index_cast %179 : i32 to index
    %c0_62 = arith.constant 0 : index
    %c0_63 = arith.constant 0 : index
    %184 = vector.load %arg6[%183, %c0_62, %c0_63] : memref<8x8x256xf32, #tpu.memory_space<vmem>>, vector<1x8x256xf32>
    %185 = vector.shape_cast %184 : vector<1x8x256xf32> to vector<8x256xf32>
    %186 = arith.select %28, %182, %185 : vector<8x256xi1>, vector<8x256xf32>
    %cst_64 = arith.constant dense<0.000000e+00> : vector<8x256xf32>
    %187 = tpu.matmul %168, %9, %cst_64 {dimension_numbers = #tpu.dot_dimension_numbers<[1], [0], [0], [1], [0, 0, 1, 1], [], []>} : vector<8x64xf32>, vector<64x256xf32>, vector<8x256xf32> -> vector<8x256xf32>
    %188 = arith.addf %186, %187 : vector<8x256xf32>
    %189 = math.tanh %188 : vector<8x256xf32>
    %190 = arith.negf %188 : vector<8x256xf32>
    %191 = math.exp %190 : vector<8x256xf32>
    %cst_65 = arith.constant 1.000000e+00 : f32
    %192 = vector.broadcast %cst_65 : f32 to vector<8x256xf32>
    %193 = arith.addf %192, %191 : vector<8x256xf32>
    %194 = arith.divf %192, %193 : vector<8x256xf32>
    %195 = arith.select %33, %189, %194 : vector<8x256xi1>, vector<8x256xf32>
    %196 = vector.extract_strided_slice %195 {offsets = [0, 0], sizes = [8, 64], strides = [1, 1]} : vector<8x256xf32> to vector<8x64xf32>
    %197 = vector.extract_strided_slice %195 {offsets = [0, 64], sizes = [8, 64], strides = [1, 1]} : vector<8x256xf32> to vector<8x64xf32>
    %198 = vector.extract_strided_slice %195 {offsets = [0, 128], sizes = [8, 64], strides = [1, 1]} : vector<8x256xf32> to vector<8x64xf32>
    %199 = vector.extract_strided_slice %195 {offsets = [0, 192], sizes = [8, 64], strides = [1, 1]} : vector<8x256xf32> to vector<8x64xf32>
    %200 = arith.mulf %197, %166 : vector<8x64xf32>
    %201 = arith.mulf %196, %198 : vector<8x64xf32>
    %202 = arith.addf %200, %201 : vector<8x64xf32>
    %203 = math.tanh %202 : vector<8x64xf32>
    %204 = arith.mulf %199, %203 : vector<8x64xf32>
    %205 = vector.extract_strided_slice %204 {offsets = [0, 0], sizes = [8, 32], strides = [1, 1]} : vector<8x64xf32> to vector<8x32xf32>
    %206 = arith.index_cast %c4_i32 : i32 to index
    %c0_66 = arith.constant 0 : index
    %c0_67 = arith.constant 0 : index
    %207 = vector.load %arg5[%206, %c0_66, %c0_67] : memref<8x8x64xf32, #tpu.memory_space<vmem>>, vector<1x8x32xf32>
    %208 = vector.shape_cast %207 : vector<1x8x32xf32> to vector<8x32xf32>
    %209 = vector.shape_cast %205 : vector<8x32xf32> to vector<1x8x32xf32>
    tpu.vector_store %arg5[%206, %c0_66, %c0_67], %209 {strides = array<i32>} : memref<8x8x64xf32, #tpu.memory_space<vmem>>, vector<1x8x32xf32>,
    %210 = vector.extract_strided_slice %204 {offsets = [0, 32], sizes = [8, 32], strides = [1, 1]} : vector<8x64xf32> to vector<8x32xf32>
    %211 = arith.index_cast %179 : i32 to index
    %c0_68 = arith.constant 0 : index
    %c32_69 = arith.constant 32 : index
    %212 = vector.load %arg5[%211, %c0_68, %c32_69] : memref<8x8x64xf32, #tpu.memory_space<vmem>>, vector<1x8x32xf32>
    %213 = vector.shape_cast %212 : vector<1x8x32xf32> to vector<8x32xf32>
    %214 = vector.shape_cast %210 : vector<8x32xf32> to vector<1x8x32xf32>
    tpu.vector_store %arg5[%211, %c0_68, %c32_69], %214 {strides = array<i32>} : memref<8x8x64xf32, #tpu.memory_space<vmem>>, vector<1x8x32xf32>,
    %c5_i32 = arith.constant 5 : i32
    %c7_i32_70 = arith.constant 7 : i32
    %215 = arith.subi %c7_i32_70, %c5_i32 : i32
    %216 = arith.index_cast %c5_i32 : i32 to index
    %c0_71 = arith.constant 0 : index
    %c0_72 = arith.constant 0 : index
    %217 = vector.load %arg6[%216, %c0_71, %c0_72] : memref<8x8x256xf32, #tpu.memory_space<vmem>>, vector<1x8x256xf32>
    %218 = vector.shape_cast %217 : vector<1x8x256xf32> to vector<8x256xf32>
    %219 = arith.index_cast %215 : i32 to index
    %c0_73 = arith.constant 0 : index
    %c0_74 = arith.constant 0 : index
    %220 = vector.load %arg6[%219, %c0_73, %c0_74] : memref<8x8x256xf32, #tpu.memory_space<vmem>>, vector<1x8x256xf32>
    %221 = vector.shape_cast %220 : vector<1x8x256xf32> to vector<8x256xf32>
    %222 = arith.select %28, %218, %221 : vector<8x256xi1>, vector<8x256xf32>
    %cst_75 = arith.constant dense<0.000000e+00> : vector<8x256xf32>
    %223 = tpu.matmul %204, %9, %cst_75 {dimension_numbers = #tpu.dot_dimension_numbers<[1], [0], [0], [1], [0, 0, 1, 1], [], []>} : vector<8x64xf32>, vector<64x256xf32>, vector<8x256xf32> -> vector<8x256xf32>
    %224 = arith.addf %222, %223 : vector<8x256xf32>
    %225 = math.tanh %224 : vector<8x256xf32>
    %226 = arith.negf %224 : vector<8x256xf32>
    %227 = math.exp %226 : vector<8x256xf32>
    %cst_76 = arith.constant 1.000000e+00 : f32
    %228 = vector.broadcast %cst_76 : f32 to vector<8x256xf32>
    %229 = arith.addf %228, %227 : vector<8x256xf32>
    %230 = arith.divf %228, %229 : vector<8x256xf32>
    %231 = arith.select %33, %225, %230 : vector<8x256xi1>, vector<8x256xf32>
    %232 = vector.extract_strided_slice %231 {offsets = [0, 0], sizes = [8, 64], strides = [1, 1]} : vector<8x256xf32> to vector<8x64xf32>
    %233 = vector.extract_strided_slice %231 {offsets = [0, 64], sizes = [8, 64], strides = [1, 1]} : vector<8x256xf32> to vector<8x64xf32>
    %234 = vector.extract_strided_slice %231 {offsets = [0, 128], sizes = [8, 64], strides = [1, 1]} : vector<8x256xf32> to vector<8x64xf32>
    %235 = vector.extract_strided_slice %231 {offsets = [0, 192], sizes = [8, 64], strides = [1, 1]} : vector<8x256xf32> to vector<8x64xf32>
    %236 = arith.mulf %233, %202 : vector<8x64xf32>
    %237 = arith.mulf %232, %234 : vector<8x64xf32>
    %238 = arith.addf %236, %237 : vector<8x64xf32>
    %239 = math.tanh %238 : vector<8x64xf32>
    %240 = arith.mulf %235, %239 : vector<8x64xf32>
    %241 = vector.extract_strided_slice %240 {offsets = [0, 0], sizes = [8, 32], strides = [1, 1]} : vector<8x64xf32> to vector<8x32xf32>
    %242 = arith.index_cast %c5_i32 : i32 to index
    %c0_77 = arith.constant 0 : index
    %c0_78 = arith.constant 0 : index
    %243 = vector.load %arg5[%242, %c0_77, %c0_78] : memref<8x8x64xf32, #tpu.memory_space<vmem>>, vector<1x8x32xf32>
    %244 = vector.shape_cast %243 : vector<1x8x32xf32> to vector<8x32xf32>
    %245 = vector.shape_cast %241 : vector<8x32xf32> to vector<1x8x32xf32>
    tpu.vector_store %arg5[%242, %c0_77, %c0_78], %245 {strides = array<i32>} : memref<8x8x64xf32, #tpu.memory_space<vmem>>, vector<1x8x32xf32>,
    %246 = vector.extract_strided_slice %240 {offsets = [0, 32], sizes = [8, 32], strides = [1, 1]} : vector<8x64xf32> to vector<8x32xf32>
    %247 = arith.index_cast %215 : i32 to index
    %c0_79 = arith.constant 0 : index
    %c32_80 = arith.constant 32 : index
    %248 = vector.load %arg5[%247, %c0_79, %c32_80] : memref<8x8x64xf32, #tpu.memory_space<vmem>>, vector<1x8x32xf32>
    %249 = vector.shape_cast %248 : vector<1x8x32xf32> to vector<8x32xf32>
    %250 = vector.shape_cast %246 : vector<8x32xf32> to vector<1x8x32xf32>
    tpu.vector_store %arg5[%247, %c0_79, %c32_80], %250 {strides = array<i32>} : memref<8x8x64xf32, #tpu.memory_space<vmem>>, vector<1x8x32xf32>,
    %c6_i32 = arith.constant 6 : i32
    %c7_i32_81 = arith.constant 7 : i32
    %251 = arith.subi %c7_i32_81, %c6_i32 : i32
    %252 = arith.index_cast %c6_i32 : i32 to index
    %c0_82 = arith.constant 0 : index
    %c0_83 = arith.constant 0 : index
    %253 = vector.load %arg6[%252, %c0_82, %c0_83] : memref<8x8x256xf32, #tpu.memory_space<vmem>>, vector<1x8x256xf32>
    %254 = vector.shape_cast %253 : vector<1x8x256xf32> to vector<8x256xf32>
    %255 = arith.index_cast %251 : i32 to index
    %c0_84 = arith.constant 0 : index
    %c0_85 = arith.constant 0 : index
    %256 = vector.load %arg6[%255, %c0_84, %c0_85] : memref<8x8x256xf32, #tpu.memory_space<vmem>>, vector<1x8x256xf32>
    %257 = vector.shape_cast %256 : vector<1x8x256xf32> to vector<8x256xf32>
    %258 = arith.select %28, %254, %257 : vector<8x256xi1>, vector<8x256xf32>
    %cst_86 = arith.constant dense<0.000000e+00> : vector<8x256xf32>
    %259 = tpu.matmul %240, %9, %cst_86 {dimension_numbers = #tpu.dot_dimension_numbers<[1], [0], [0], [1], [0, 0, 1, 1], [], []>} : vector<8x64xf32>, vector<64x256xf32>, vector<8x256xf32> -> vector<8x256xf32>
    %260 = arith.addf %258, %259 : vector<8x256xf32>
    %261 = math.tanh %260 : vector<8x256xf32>
    %262 = arith.negf %260 : vector<8x256xf32>
    %263 = math.exp %262 : vector<8x256xf32>
    %cst_87 = arith.constant 1.000000e+00 : f32
    %264 = vector.broadcast %cst_87 : f32 to vector<8x256xf32>
    %265 = arith.addf %264, %263 : vector<8x256xf32>
    %266 = arith.divf %264, %265 : vector<8x256xf32>
    %267 = arith.select %33, %261, %266 : vector<8x256xi1>, vector<8x256xf32>
    %268 = vector.extract_strided_slice %267 {offsets = [0, 0], sizes = [8, 64], strides = [1, 1]} : vector<8x256xf32> to vector<8x64xf32>
    %269 = vector.extract_strided_slice %267 {offsets = [0, 64], sizes = [8, 64], strides = [1, 1]} : vector<8x256xf32> to vector<8x64xf32>
    %270 = vector.extract_strided_slice %267 {offsets = [0, 128], sizes = [8, 64], strides = [1, 1]} : vector<8x256xf32> to vector<8x64xf32>
    %271 = vector.extract_strided_slice %267 {offsets = [0, 192], sizes = [8, 64], strides = [1, 1]} : vector<8x256xf32> to vector<8x64xf32>
    %272 = arith.mulf %269, %238 : vector<8x64xf32>
    %273 = arith.mulf %268, %270 : vector<8x64xf32>
    %274 = arith.addf %272, %273 : vector<8x64xf32>
    %275 = math.tanh %274 : vector<8x64xf32>
    %276 = arith.mulf %271, %275 : vector<8x64xf32>
    %277 = vector.extract_strided_slice %276 {offsets = [0, 0], sizes = [8, 32], strides = [1, 1]} : vector<8x64xf32> to vector<8x32xf32>
    %278 = arith.index_cast %c6_i32 : i32 to index
    %c0_88 = arith.constant 0 : index
    %c0_89 = arith.constant 0 : index
    %279 = vector.load %arg5[%278, %c0_88, %c0_89] : memref<8x8x64xf32, #tpu.memory_space<vmem>>, vector<1x8x32xf32>
    %280 = vector.shape_cast %279 : vector<1x8x32xf32> to vector<8x32xf32>
    %281 = vector.shape_cast %277 : vector<8x32xf32> to vector<1x8x32xf32>
    tpu.vector_store %arg5[%278, %c0_88, %c0_89], %281 {strides = array<i32>} : memref<8x8x64xf32, #tpu.memory_space<vmem>>, vector<1x8x32xf32>,
    %282 = vector.extract_strided_slice %276 {offsets = [0, 32], sizes = [8, 32], strides = [1, 1]} : vector<8x64xf32> to vector<8x32xf32>
    %283 = arith.index_cast %251 : i32 to index
    %c0_90 = arith.constant 0 : index
    %c32_91 = arith.constant 32 : index
    %284 = vector.load %arg5[%283, %c0_90, %c32_91] : memref<8x8x64xf32, #tpu.memory_space<vmem>>, vector<1x8x32xf32>
    %285 = vector.shape_cast %284 : vector<1x8x32xf32> to vector<8x32xf32>
    %286 = vector.shape_cast %282 : vector<8x32xf32> to vector<1x8x32xf32>
    tpu.vector_store %arg5[%283, %c0_90, %c32_91], %286 {strides = array<i32>} : memref<8x8x64xf32, #tpu.memory_space<vmem>>, vector<1x8x32xf32>,
    %c7_i32_92 = arith.constant 7 : i32
    %c7_i32_93 = arith.constant 7 : i32
    %287 = arith.subi %c7_i32_93, %c7_i32_92 : i32
    %288 = arith.index_cast %c7_i32_92 : i32 to index
    %c0_94 = arith.constant 0 : index
    %c0_95 = arith.constant 0 : index
    %289 = vector.load %arg6[%288, %c0_94, %c0_95] : memref<8x8x256xf32, #tpu.memory_space<vmem>>, vector<1x8x256xf32>
    %290 = vector.shape_cast %289 : vector<1x8x256xf32> to vector<8x256xf32>
    %291 = arith.index_cast %287 : i32 to index
    %c0_96 = arith.constant 0 : index
    %c0_97 = arith.constant 0 : index
    %292 = vector.load %arg6[%291, %c0_96, %c0_97] : memref<8x8x256xf32, #tpu.memory_space<vmem>>, vector<1x8x256xf32>
    %293 = vector.shape_cast %292 : vector<1x8x256xf32> to vector<8x256xf32>
    %294 = arith.select %28, %290, %293 : vector<8x256xi1>, vector<8x256xf32>
    %cst_98 = arith.constant dense<0.000000e+00> : vector<8x256xf32>
    %295 = tpu.matmul %276, %9, %cst_98 {dimension_numbers = #tpu.dot_dimension_numbers<[1], [0], [0], [1], [0, 0, 1, 1], [], []>} : vector<8x64xf32>, vector<64x256xf32>, vector<8x256xf32> -> vector<8x256xf32>
    %296 = arith.addf %294, %295 : vector<8x256xf32>
    %297 = math.tanh %296 : vector<8x256xf32>
    %298 = arith.negf %296 : vector<8x256xf32>
    %299 = math.exp %298 : vector<8x256xf32>
    %cst_99 = arith.constant 1.000000e+00 : f32
    %300 = vector.broadcast %cst_99 : f32 to vector<8x256xf32>
    %301 = arith.addf %300, %299 : vector<8x256xf32>
    %302 = arith.divf %300, %301 : vector<8x256xf32>
    %303 = arith.select %33, %297, %302 : vector<8x256xi1>, vector<8x256xf32>
    %304 = vector.extract_strided_slice %303 {offsets = [0, 0], sizes = [8, 64], strides = [1, 1]} : vector<8x256xf32> to vector<8x64xf32>
    %305 = vector.extract_strided_slice %303 {offsets = [0, 64], sizes = [8, 64], strides = [1, 1]} : vector<8x256xf32> to vector<8x64xf32>
    %306 = vector.extract_strided_slice %303 {offsets = [0, 128], sizes = [8, 64], strides = [1, 1]} : vector<8x256xf32> to vector<8x64xf32>
    %307 = vector.extract_strided_slice %303 {offsets = [0, 192], sizes = [8, 64], strides = [1, 1]} : vector<8x256xf32> to vector<8x64xf32>
    %308 = arith.mulf %305, %274 : vector<8x64xf32>
    %309 = arith.mulf %304, %306 : vector<8x64xf32>
    %310 = arith.addf %308, %309 : vector<8x64xf32>
    %311 = math.tanh %310 : vector<8x64xf32>
    %312 = arith.mulf %307, %311 : vector<8x64xf32>
    %313 = vector.extract_strided_slice %312 {offsets = [0, 0], sizes = [8, 32], strides = [1, 1]} : vector<8x64xf32> to vector<8x32xf32>
    %314 = arith.index_cast %c7_i32_92 : i32 to index
    %c0_100 = arith.constant 0 : index
    %c0_101 = arith.constant 0 : index
    %315 = vector.load %arg5[%314, %c0_100, %c0_101] : memref<8x8x64xf32, #tpu.memory_space<vmem>>, vector<1x8x32xf32>
    %316 = vector.shape_cast %315 : vector<1x8x32xf32> to vector<8x32xf32>
    %317 = vector.shape_cast %313 : vector<8x32xf32> to vector<1x8x32xf32>
    tpu.vector_store %arg5[%314, %c0_100, %c0_101], %317 {strides = array<i32>} : memref<8x8x64xf32, #tpu.memory_space<vmem>>, vector<1x8x32xf32>,
    %318 = vector.extract_strided_slice %312 {offsets = [0, 32], sizes = [8, 32], strides = [1, 1]} : vector<8x64xf32> to vector<8x32xf32>
    %319 = arith.index_cast %287 : i32 to index
    %c0_102 = arith.constant 0 : index
    %c32_103 = arith.constant 32 : index
    %320 = vector.load %arg5[%319, %c0_102, %c32_103] : memref<8x8x64xf32, #tpu.memory_space<vmem>>, vector<1x8x32xf32>
    %321 = vector.shape_cast %320 : vector<1x8x32xf32> to vector<8x32xf32>
    %322 = vector.shape_cast %318 : vector<8x32xf32> to vector<1x8x32xf32>
    tpu.vector_store %arg5[%319, %c0_102, %c32_103], %322 {strides = array<i32>} : memref<8x8x64xf32, #tpu.memory_space<vmem>>, vector<1x8x32xf32>,
    %c8_i32 = arith.constant 8 : i32
    return
  }
  func.func @transform_0(%arg0: i32) -> (i32, i32, i32) {
    %c0_i32 = arith.constant 0 : i32
    %c0_i32_0 = arith.constant 0 : i32
    %c0_i32_1 = arith.constant 0 : i32
    %c0_i32_2 = arith.constant 0 : i32
    return %c0_i32, %c0_i32_0, %c0_i32_1 : i32, i32, i32
  }
  func.func @transform_1(%arg0: i32) -> (i32, i32) {
    %c0_i32 = arith.constant 0 : i32
    %c0_i32_0 = arith.constant 0 : i32
    %c0_i32_1 = arith.constant 0 : i32
    return %c0_i32, %c0_i32_0 : i32, i32
  }
  func.func @transform_2(%arg0: i32) -> (i32, i32) {
    %c0_i32 = arith.constant 0 : i32
    %c0_i32_0 = arith.constant 0 : i32
    %c0_i32_1 = arith.constant 0 : i32
    return %c0_i32, %c0_i32_0 : i32, i32
  }
  func.func @transform_3(%arg0: i32) -> (i32, i32) {
    %c0_i32 = arith.constant 0 : i32
    %c0_i32_0 = arith.constant 0 : i32
    %c0_i32_1 = arith.constant 0 : i32
    return %c0_i32, %c0_i32_0 : i32, i32
  }
  func.func @transform_4(%arg0: i32) -> (i32, i32, i32) {
    %c0_i32 = arith.constant 0 : i32
    %c0_i32_0 = arith.constant 0 : i32
    %c0_i32_1 = arith.constant 0 : i32
    %c0_i32_2 = arith.constant 0 : i32
    return %c0_i32, %c0_i32_0, %c0_i32_1 : i32, i32, i32
  }
}

module attributes {stable_mosaic.version = 11 : i64} {
  func.func @_bilstm_layer_fc_kernel(%arg0: i32, %arg1: memref<8x8x32xf32, #tpu.memory_space<vmem>>, %arg2: memref<32x256xf32, #tpu.memory_space<vmem>>, %arg3: memref<64x256xf32, #tpu.memory_space<vmem>>, %arg4: memref<1x256xf32, #tpu.memory_space<vmem>>, %arg5: memref<128x64xf32, #tpu.memory_space<vmem>>, %arg6: memref<1x64xf32, #tpu.memory_space<vmem>>, %arg7: memref<8x8x64xf32, #tpu.memory_space<vmem>>, %arg8: memref<8x64xf32, #tpu.memory_space<vmem>>, %arg9: memref<8x8x256xf32, #tpu.memory_space<vmem>>) attributes {dimension_semantics = [#tpu.dimension_semantics<arbitrary>], iteration_bounds = array<i64: 1>, scalar_prefetch = 0 : i64, scratch_operands = 1 : i64, tpu.core_type = #tpu.core_type<tc>, window_params = [{pipeline_mode = #tpu.pipeline_mode<synchronous>, transform_indices = @transform_0, window_bounds = array<i64: 8, 8, 32>}, {pipeline_mode = #tpu.pipeline_mode<synchronous>, transform_indices = @transform_1, window_bounds = array<i64: 32, 256>}, {pipeline_mode = #tpu.pipeline_mode<synchronous>, transform_indices = @transform_2, window_bounds = array<i64: 64, 256>}, {pipeline_mode = #tpu.pipeline_mode<synchronous>, transform_indices = @transform_3, window_bounds = array<i64: 1, 256>}, {pipeline_mode = #tpu.pipeline_mode<synchronous>, transform_indices = @transform_4, window_bounds = array<i64: 128, 64>}, {pipeline_mode = #tpu.pipeline_mode<synchronous>, transform_indices = @transform_5, window_bounds = array<i64: 1, 64>}, {pipeline_mode = #tpu.pipeline_mode<synchronous>, transform_indices = @transform_6, window_bounds = array<i64: 8, 8, 64>}, {pipeline_mode = #tpu.pipeline_mode<synchronous>, transform_indices = @transform_7, window_bounds = array<i64: 8, 64>}]} {
    %c0 = arith.constant 0 : index
    %c0_0 = arith.constant 0 : index
    %c0_1 = arith.constant 0 : index
    %0 = vector.load %arg1[%c0, %c0_0, %c0_1] : memref<8x8x32xf32, #tpu.memory_space<vmem>>, vector<8x8x32xf32>
    %1 = vector.shape_cast %0 : vector<8x8x32xf32> to vector<64x32xf32>
    %c0_2 = arith.constant 0 : index
    %c0_3 = arith.constant 0 : index
    %2 = vector.load %arg2[%c0_2, %c0_3] : memref<32x256xf32, #tpu.memory_space<vmem>>, vector<32x256xf32>
    %cst = arith.constant dense<0.000000e+00> : vector<64x256xf32>
    %3 = tpu.matmul %1, %2, %cst {dimension_numbers = #tpu.dot_dimension_numbers<[1], [0], [0], [1], [0, 0, 1, 1], [], []>} : vector<64x32xf32>, vector<32x256xf32>, vector<64x256xf32> -> vector<64x256xf32>
    %c0_4 = arith.constant 0 : index
    %c0_5 = arith.constant 0 : index
    %4 = vector.load %arg4[%c0_4, %c0_5] : memref<1x256xf32, #tpu.memory_space<vmem>>, vector<1x256xf32>
    %5 = vector.broadcast %4 : vector<1x256xf32> to vector<64x256xf32>
    %6 = arith.addf %3, %5 : vector<64x256xf32>
    %7 = vector.shape_cast %6 : vector<64x256xf32> to vector<8x8x256xf32>
    %c0_6 = arith.constant 0 : index
    %c0_7 = arith.constant 0 : index
    %c0_8 = arith.constant 0 : index
    %8 = vector.load %arg9[%c0_6, %c0_7, %c0_8] : memref<8x8x256xf32, #tpu.memory_space<vmem>>, vector<8x8x256xf32>
    tpu.vector_store %arg9[%c0_6, %c0_7, %c0_8], %7 {strides = array<i32>} : memref<8x8x256xf32, #tpu.memory_space<vmem>>, vector<8x8x256xf32>,
    %c0_9 = arith.constant 0 : index
    %c0_10 = arith.constant 0 : index
    %9 = vector.load %arg3[%c0_9, %c0_10] : memref<64x256xf32, #tpu.memory_space<vmem>>, vector<64x256xf32>
    %10 = tpu.iota {dimensions = array<i32: 1>} : vector<8x256xi32>
    %c64_i32 = arith.constant 64 : i32
    %c0_i32 = arith.constant 0 : i32
    %11 = arith.cmpi eq, %c64_i32, %c0_i32 : i32
    %c1_i32 = arith.constant 1 : i32
    %12 = arith.select %11, %c1_i32, %c64_i32 : i32
    %13 = vector.broadcast %12 : i32 to vector<8x256xi32>
    %14 = arith.remsi %10, %13 : vector<8x256xi32>
    %c0_i32_11 = arith.constant 0 : i32
    %15 = vector.broadcast %c0_i32_11 : i32 to vector<8x256xi32>
    %16 = arith.cmpi ne, %14, %15 : vector<8x256xi32>
    %c0_i32_12 = arith.constant 0 : i32
    %17 = vector.broadcast %c0_i32_12 : i32 to vector<8x256xi32>
    %18 = arith.cmpi slt, %14, %17 : vector<8x256xi32>
    %c0_i32_13 = arith.constant 0 : i32
    %19 = arith.cmpi slt, %12, %c0_i32_13 : i32
    %20 = vector.broadcast %19 : i1 to vector<8x256xi1>
    %21 = vector.broadcast %20 : vector<8x256xi1> to vector<8x256xi1>
    %22 = arith.xori %18, %21 : vector<8x256xi1>
    %23 = arith.andi %22, %16 : vector<8x256xi1>
    %24 = vector.broadcast %12 : i32 to vector<8x256xi32>
    %25 = arith.addi %14, %24 : vector<8x256xi32>
    %26 = arith.select %23, %25, %14 : vector<8x256xi1>, vector<8x256xi32>
    %c32_i32 = arith.constant 32 : i32
    %27 = vector.broadcast %c32_i32 : i32 to vector<8x256xi32>
    %28 = arith.cmpi slt, %26, %27 : vector<8x256xi32>
    %c128_i32 = arith.constant 128 : i32
    %29 = vector.broadcast %c128_i32 : i32 to vector<8x256xi32>
    %30 = arith.cmpi sge, %10, %29 : vector<8x256xi32>
    %c192_i32 = arith.constant 192 : i32
    %31 = vector.broadcast %c192_i32 : i32 to vector<8x256xi32>
    %32 = arith.cmpi slt, %10, %31 : vector<8x256xi32>
    %33 = arith.andi %30, %32 : vector<8x256xi1>
    %cst_14 = arith.constant 0.000000e+00 : f32
    %34 = vector.broadcast %cst_14 : f32 to vector<8x64xf32>
    %c0_i32_15 = arith.constant 0 : i32
    %c7_i32 = arith.constant 7 : i32
    %35 = arith.subi %c7_i32, %c0_i32_15 : i32
    %36 = arith.index_cast %c0_i32_15 : i32 to index
    %c0_16 = arith.constant 0 : index
    %c0_17 = arith.constant 0 : index
    %37 = vector.load %arg9[%36, %c0_16, %c0_17] : memref<8x8x256xf32, #tpu.memory_space<vmem>>, vector<1x8x256xf32>
    %38 = vector.shape_cast %37 : vector<1x8x256xf32> to vector<8x256xf32>
    %39 = arith.index_cast %35 : i32 to index
    %c0_18 = arith.constant 0 : index
    %c0_19 = arith.constant 0 : index
    %40 = vector.load %arg9[%39, %c0_18, %c0_19] : memref<8x8x256xf32, #tpu.memory_space<vmem>>, vector<1x8x256xf32>
    %41 = vector.shape_cast %40 : vector<1x8x256xf32> to vector<8x256xf32>
    %42 = arith.select %28, %38, %41 : vector<8x256xi1>, vector<8x256xf32>
    %cst_20 = arith.constant dense<0.000000e+00> : vector<8x256xf32>
    %43 = tpu.matmul %34, %9, %cst_20 {dimension_numbers = #tpu.dot_dimension_numbers<[1], [0], [0], [1], [0, 0, 1, 1], [], []>} : vector<8x64xf32>, vector<64x256xf32>, vector<8x256xf32> -> vector<8x256xf32>
    %44 = arith.addf %42, %43 : vector<8x256xf32>
    %45 = math.tanh %44 : vector<8x256xf32>
    %46 = arith.negf %44 : vector<8x256xf32>
    %47 = math.exp %46 : vector<8x256xf32>
    %cst_21 = arith.constant 1.000000e+00 : f32
    %48 = vector.broadcast %cst_21 : f32 to vector<8x256xf32>
    %49 = arith.addf %48, %47 : vector<8x256xf32>
    %50 = arith.divf %48, %49 : vector<8x256xf32>
    %51 = arith.select %33, %45, %50 : vector<8x256xi1>, vector<8x256xf32>
    %52 = vector.extract_strided_slice %51 {offsets = [0, 0], sizes = [8, 64], strides = [1, 1]} : vector<8x256xf32> to vector<8x64xf32>
    %53 = vector.extract_strided_slice %51 {offsets = [0, 64], sizes = [8, 64], strides = [1, 1]} : vector<8x256xf32> to vector<8x64xf32>
    %54 = vector.extract_strided_slice %51 {offsets = [0, 128], sizes = [8, 64], strides = [1, 1]} : vector<8x256xf32> to vector<8x64xf32>
    %55 = vector.extract_strided_slice %51 {offsets = [0, 192], sizes = [8, 64], strides = [1, 1]} : vector<8x256xf32> to vector<8x64xf32>
    %56 = arith.mulf %53, %34 : vector<8x64xf32>
    %57 = arith.mulf %52, %54 : vector<8x64xf32>
    %58 = arith.addf %56, %57 : vector<8x64xf32>
    %59 = math.tanh %58 : vector<8x64xf32>
    %60 = arith.mulf %55, %59 : vector<8x64xf32>
    %61 = vector.extract_strided_slice %60 {offsets = [0, 0], sizes = [8, 32], strides = [1, 1]} : vector<8x64xf32> to vector<8x32xf32>
    %62 = arith.index_cast %c0_i32_15 : i32 to index
    %c0_22 = arith.constant 0 : index
    %c0_23 = arith.constant 0 : index
    %63 = vector.load %arg7[%62, %c0_22, %c0_23] : memref<8x8x64xf32, #tpu.memory_space<vmem>>, vector<1x8x32xf32>
    %64 = vector.shape_cast %63 : vector<1x8x32xf32> to vector<8x32xf32>
    %65 = vector.shape_cast %61 : vector<8x32xf32> to vector<1x8x32xf32>
    tpu.vector_store %arg7[%62, %c0_22, %c0_23], %65 {strides = array<i32>} : memref<8x8x64xf32, #tpu.memory_space<vmem>>, vector<1x8x32xf32>,
    %66 = vector.extract_strided_slice %60 {offsets = [0, 32], sizes = [8, 32], strides = [1, 1]} : vector<8x64xf32> to vector<8x32xf32>
    %67 = arith.index_cast %35 : i32 to index
    %c0_24 = arith.constant 0 : index
    %c32 = arith.constant 32 : index
    %68 = vector.load %arg7[%67, %c0_24, %c32] : memref<8x8x64xf32, #tpu.memory_space<vmem>>, vector<1x8x32xf32>
    %69 = vector.shape_cast %68 : vector<1x8x32xf32> to vector<8x32xf32>
    %70 = vector.shape_cast %66 : vector<8x32xf32> to vector<1x8x32xf32>
    tpu.vector_store %arg7[%67, %c0_24, %c32], %70 {strides = array<i32>} : memref<8x8x64xf32, #tpu.memory_space<vmem>>, vector<1x8x32xf32>,
    %c1_i32_25 = arith.constant 1 : i32
    %c7_i32_26 = arith.constant 7 : i32
    %71 = arith.subi %c7_i32_26, %c1_i32_25 : i32
    %72 = arith.index_cast %c1_i32_25 : i32 to index
    %c0_27 = arith.constant 0 : index
    %c0_28 = arith.constant 0 : index
    %73 = vector.load %arg9[%72, %c0_27, %c0_28] : memref<8x8x256xf32, #tpu.memory_space<vmem>>, vector<1x8x256xf32>
    %74 = vector.shape_cast %73 : vector<1x8x256xf32> to vector<8x256xf32>
    %75 = arith.index_cast %71 : i32 to index
    %c0_29 = arith.constant 0 : index
    %c0_30 = arith.constant 0 : index
    %76 = vector.load %arg9[%75, %c0_29, %c0_30] : memref<8x8x256xf32, #tpu.memory_space<vmem>>, vector<1x8x256xf32>
    %77 = vector.shape_cast %76 : vector<1x8x256xf32> to vector<8x256xf32>
    %78 = arith.select %28, %74, %77 : vector<8x256xi1>, vector<8x256xf32>
    %cst_31 = arith.constant dense<0.000000e+00> : vector<8x256xf32>
    %79 = tpu.matmul %60, %9, %cst_31 {dimension_numbers = #tpu.dot_dimension_numbers<[1], [0], [0], [1], [0, 0, 1, 1], [], []>} : vector<8x64xf32>, vector<64x256xf32>, vector<8x256xf32> -> vector<8x256xf32>
    %80 = arith.addf %78, %79 : vector<8x256xf32>
    %81 = math.tanh %80 : vector<8x256xf32>
    %82 = arith.negf %80 : vector<8x256xf32>
    %83 = math.exp %82 : vector<8x256xf32>
    %cst_32 = arith.constant 1.000000e+00 : f32
    %84 = vector.broadcast %cst_32 : f32 to vector<8x256xf32>
    %85 = arith.addf %84, %83 : vector<8x256xf32>
    %86 = arith.divf %84, %85 : vector<8x256xf32>
    %87 = arith.select %33, %81, %86 : vector<8x256xi1>, vector<8x256xf32>
    %88 = vector.extract_strided_slice %87 {offsets = [0, 0], sizes = [8, 64], strides = [1, 1]} : vector<8x256xf32> to vector<8x64xf32>
    %89 = vector.extract_strided_slice %87 {offsets = [0, 64], sizes = [8, 64], strides = [1, 1]} : vector<8x256xf32> to vector<8x64xf32>
    %90 = vector.extract_strided_slice %87 {offsets = [0, 128], sizes = [8, 64], strides = [1, 1]} : vector<8x256xf32> to vector<8x64xf32>
    %91 = vector.extract_strided_slice %87 {offsets = [0, 192], sizes = [8, 64], strides = [1, 1]} : vector<8x256xf32> to vector<8x64xf32>
    %92 = arith.mulf %89, %58 : vector<8x64xf32>
    %93 = arith.mulf %88, %90 : vector<8x64xf32>
    %94 = arith.addf %92, %93 : vector<8x64xf32>
    %95 = math.tanh %94 : vector<8x64xf32>
    %96 = arith.mulf %91, %95 : vector<8x64xf32>
    %97 = vector.extract_strided_slice %96 {offsets = [0, 0], sizes = [8, 32], strides = [1, 1]} : vector<8x64xf32> to vector<8x32xf32>
    %98 = arith.index_cast %c1_i32_25 : i32 to index
    %c0_33 = arith.constant 0 : index
    %c0_34 = arith.constant 0 : index
    %99 = vector.load %arg7[%98, %c0_33, %c0_34] : memref<8x8x64xf32, #tpu.memory_space<vmem>>, vector<1x8x32xf32>
    %100 = vector.shape_cast %99 : vector<1x8x32xf32> to vector<8x32xf32>
    %101 = vector.shape_cast %97 : vector<8x32xf32> to vector<1x8x32xf32>
    tpu.vector_store %arg7[%98, %c0_33, %c0_34], %101 {strides = array<i32>} : memref<8x8x64xf32, #tpu.memory_space<vmem>>, vector<1x8x32xf32>,
    %102 = vector.extract_strided_slice %96 {offsets = [0, 32], sizes = [8, 32], strides = [1, 1]} : vector<8x64xf32> to vector<8x32xf32>
    %103 = arith.index_cast %71 : i32 to index
    %c0_35 = arith.constant 0 : index
    %c32_36 = arith.constant 32 : index
    %104 = vector.load %arg7[%103, %c0_35, %c32_36] : memref<8x8x64xf32, #tpu.memory_space<vmem>>, vector<1x8x32xf32>
    %105 = vector.shape_cast %104 : vector<1x8x32xf32> to vector<8x32xf32>
    %106 = vector.shape_cast %102 : vector<8x32xf32> to vector<1x8x32xf32>
    tpu.vector_store %arg7[%103, %c0_35, %c32_36], %106 {strides = array<i32>} : memref<8x8x64xf32, #tpu.memory_space<vmem>>, vector<1x8x32xf32>,
    %c2_i32 = arith.constant 2 : i32
    %c7_i32_37 = arith.constant 7 : i32
    %107 = arith.subi %c7_i32_37, %c2_i32 : i32
    %108 = arith.index_cast %c2_i32 : i32 to index
    %c0_38 = arith.constant 0 : index
    %c0_39 = arith.constant 0 : index
    %109 = vector.load %arg9[%108, %c0_38, %c0_39] : memref<8x8x256xf32, #tpu.memory_space<vmem>>, vector<1x8x256xf32>
    %110 = vector.shape_cast %109 : vector<1x8x256xf32> to vector<8x256xf32>
    %111 = arith.index_cast %107 : i32 to index
    %c0_40 = arith.constant 0 : index
    %c0_41 = arith.constant 0 : index
    %112 = vector.load %arg9[%111, %c0_40, %c0_41] : memref<8x8x256xf32, #tpu.memory_space<vmem>>, vector<1x8x256xf32>
    %113 = vector.shape_cast %112 : vector<1x8x256xf32> to vector<8x256xf32>
    %114 = arith.select %28, %110, %113 : vector<8x256xi1>, vector<8x256xf32>
    %cst_42 = arith.constant dense<0.000000e+00> : vector<8x256xf32>
    %115 = tpu.matmul %96, %9, %cst_42 {dimension_numbers = #tpu.dot_dimension_numbers<[1], [0], [0], [1], [0, 0, 1, 1], [], []>} : vector<8x64xf32>, vector<64x256xf32>, vector<8x256xf32> -> vector<8x256xf32>
    %116 = arith.addf %114, %115 : vector<8x256xf32>
    %117 = math.tanh %116 : vector<8x256xf32>
    %118 = arith.negf %116 : vector<8x256xf32>
    %119 = math.exp %118 : vector<8x256xf32>
    %cst_43 = arith.constant 1.000000e+00 : f32
    %120 = vector.broadcast %cst_43 : f32 to vector<8x256xf32>
    %121 = arith.addf %120, %119 : vector<8x256xf32>
    %122 = arith.divf %120, %121 : vector<8x256xf32>
    %123 = arith.select %33, %117, %122 : vector<8x256xi1>, vector<8x256xf32>
    %124 = vector.extract_strided_slice %123 {offsets = [0, 0], sizes = [8, 64], strides = [1, 1]} : vector<8x256xf32> to vector<8x64xf32>
    %125 = vector.extract_strided_slice %123 {offsets = [0, 64], sizes = [8, 64], strides = [1, 1]} : vector<8x256xf32> to vector<8x64xf32>
    %126 = vector.extract_strided_slice %123 {offsets = [0, 128], sizes = [8, 64], strides = [1, 1]} : vector<8x256xf32> to vector<8x64xf32>
    %127 = vector.extract_strided_slice %123 {offsets = [0, 192], sizes = [8, 64], strides = [1, 1]} : vector<8x256xf32> to vector<8x64xf32>
    %128 = arith.mulf %125, %94 : vector<8x64xf32>
    %129 = arith.mulf %124, %126 : vector<8x64xf32>
    %130 = arith.addf %128, %129 : vector<8x64xf32>
    %131 = math.tanh %130 : vector<8x64xf32>
    %132 = arith.mulf %127, %131 : vector<8x64xf32>
    %133 = vector.extract_strided_slice %132 {offsets = [0, 0], sizes = [8, 32], strides = [1, 1]} : vector<8x64xf32> to vector<8x32xf32>
    %134 = arith.index_cast %c2_i32 : i32 to index
    %c0_44 = arith.constant 0 : index
    %c0_45 = arith.constant 0 : index
    %135 = vector.load %arg7[%134, %c0_44, %c0_45] : memref<8x8x64xf32, #tpu.memory_space<vmem>>, vector<1x8x32xf32>
    %136 = vector.shape_cast %135 : vector<1x8x32xf32> to vector<8x32xf32>
    %137 = vector.shape_cast %133 : vector<8x32xf32> to vector<1x8x32xf32>
    tpu.vector_store %arg7[%134, %c0_44, %c0_45], %137 {strides = array<i32>} : memref<8x8x64xf32, #tpu.memory_space<vmem>>, vector<1x8x32xf32>,
    %138 = vector.extract_strided_slice %132 {offsets = [0, 32], sizes = [8, 32], strides = [1, 1]} : vector<8x64xf32> to vector<8x32xf32>
    %139 = arith.index_cast %107 : i32 to index
    %c0_46 = arith.constant 0 : index
    %c32_47 = arith.constant 32 : index
    %140 = vector.load %arg7[%139, %c0_46, %c32_47] : memref<8x8x64xf32, #tpu.memory_space<vmem>>, vector<1x8x32xf32>
    %141 = vector.shape_cast %140 : vector<1x8x32xf32> to vector<8x32xf32>
    %142 = vector.shape_cast %138 : vector<8x32xf32> to vector<1x8x32xf32>
    tpu.vector_store %arg7[%139, %c0_46, %c32_47], %142 {strides = array<i32>} : memref<8x8x64xf32, #tpu.memory_space<vmem>>, vector<1x8x32xf32>,
    %c3_i32 = arith.constant 3 : i32
    %c7_i32_48 = arith.constant 7 : i32
    %143 = arith.subi %c7_i32_48, %c3_i32 : i32
    %144 = arith.index_cast %c3_i32 : i32 to index
    %c0_49 = arith.constant 0 : index
    %c0_50 = arith.constant 0 : index
    %145 = vector.load %arg9[%144, %c0_49, %c0_50] : memref<8x8x256xf32, #tpu.memory_space<vmem>>, vector<1x8x256xf32>
    %146 = vector.shape_cast %145 : vector<1x8x256xf32> to vector<8x256xf32>
    %147 = arith.index_cast %143 : i32 to index
    %c0_51 = arith.constant 0 : index
    %c0_52 = arith.constant 0 : index
    %148 = vector.load %arg9[%147, %c0_51, %c0_52] : memref<8x8x256xf32, #tpu.memory_space<vmem>>, vector<1x8x256xf32>
    %149 = vector.shape_cast %148 : vector<1x8x256xf32> to vector<8x256xf32>
    %150 = arith.select %28, %146, %149 : vector<8x256xi1>, vector<8x256xf32>
    %cst_53 = arith.constant dense<0.000000e+00> : vector<8x256xf32>
    %151 = tpu.matmul %132, %9, %cst_53 {dimension_numbers = #tpu.dot_dimension_numbers<[1], [0], [0], [1], [0, 0, 1, 1], [], []>} : vector<8x64xf32>, vector<64x256xf32>, vector<8x256xf32> -> vector<8x256xf32>
    %152 = arith.addf %150, %151 : vector<8x256xf32>
    %153 = math.tanh %152 : vector<8x256xf32>
    %154 = arith.negf %152 : vector<8x256xf32>
    %155 = math.exp %154 : vector<8x256xf32>
    %cst_54 = arith.constant 1.000000e+00 : f32
    %156 = vector.broadcast %cst_54 : f32 to vector<8x256xf32>
    %157 = arith.addf %156, %155 : vector<8x256xf32>
    %158 = arith.divf %156, %157 : vector<8x256xf32>
    %159 = arith.select %33, %153, %158 : vector<8x256xi1>, vector<8x256xf32>
    %160 = vector.extract_strided_slice %159 {offsets = [0, 0], sizes = [8, 64], strides = [1, 1]} : vector<8x256xf32> to vector<8x64xf32>
    %161 = vector.extract_strided_slice %159 {offsets = [0, 64], sizes = [8, 64], strides = [1, 1]} : vector<8x256xf32> to vector<8x64xf32>
    %162 = vector.extract_strided_slice %159 {offsets = [0, 128], sizes = [8, 64], strides = [1, 1]} : vector<8x256xf32> to vector<8x64xf32>
    %163 = vector.extract_strided_slice %159 {offsets = [0, 192], sizes = [8, 64], strides = [1, 1]} : vector<8x256xf32> to vector<8x64xf32>
    %164 = arith.mulf %161, %130 : vector<8x64xf32>
    %165 = arith.mulf %160, %162 : vector<8x64xf32>
    %166 = arith.addf %164, %165 : vector<8x64xf32>
    %167 = math.tanh %166 : vector<8x64xf32>
    %168 = arith.mulf %163, %167 : vector<8x64xf32>
    %169 = vector.extract_strided_slice %168 {offsets = [0, 0], sizes = [8, 32], strides = [1, 1]} : vector<8x64xf32> to vector<8x32xf32>
    %170 = arith.index_cast %c3_i32 : i32 to index
    %c0_55 = arith.constant 0 : index
    %c0_56 = arith.constant 0 : index
    %171 = vector.load %arg7[%170, %c0_55, %c0_56] : memref<8x8x64xf32, #tpu.memory_space<vmem>>, vector<1x8x32xf32>
    %172 = vector.shape_cast %171 : vector<1x8x32xf32> to vector<8x32xf32>
    %173 = vector.shape_cast %169 : vector<8x32xf32> to vector<1x8x32xf32>
    tpu.vector_store %arg7[%170, %c0_55, %c0_56], %173 {strides = array<i32>} : memref<8x8x64xf32, #tpu.memory_space<vmem>>, vector<1x8x32xf32>,
    %174 = vector.extract_strided_slice %168 {offsets = [0, 32], sizes = [8, 32], strides = [1, 1]} : vector<8x64xf32> to vector<8x32xf32>
    %175 = arith.index_cast %143 : i32 to index
    %c0_57 = arith.constant 0 : index
    %c32_58 = arith.constant 32 : index
    %176 = vector.load %arg7[%175, %c0_57, %c32_58] : memref<8x8x64xf32, #tpu.memory_space<vmem>>, vector<1x8x32xf32>
    %177 = vector.shape_cast %176 : vector<1x8x32xf32> to vector<8x32xf32>
    %178 = vector.shape_cast %174 : vector<8x32xf32> to vector<1x8x32xf32>
    tpu.vector_store %arg7[%175, %c0_57, %c32_58], %178 {strides = array<i32>} : memref<8x8x64xf32, #tpu.memory_space<vmem>>, vector<1x8x32xf32>,
    %c4_i32 = arith.constant 4 : i32
    %c7_i32_59 = arith.constant 7 : i32
    %179 = arith.subi %c7_i32_59, %c4_i32 : i32
    %180 = arith.index_cast %c4_i32 : i32 to index
    %c0_60 = arith.constant 0 : index
    %c0_61 = arith.constant 0 : index
    %181 = vector.load %arg9[%180, %c0_60, %c0_61] : memref<8x8x256xf32, #tpu.memory_space<vmem>>, vector<1x8x256xf32>
    %182 = vector.shape_cast %181 : vector<1x8x256xf32> to vector<8x256xf32>
    %183 = arith.index_cast %179 : i32 to index
    %c0_62 = arith.constant 0 : index
    %c0_63 = arith.constant 0 : index
    %184 = vector.load %arg9[%183, %c0_62, %c0_63] : memref<8x8x256xf32, #tpu.memory_space<vmem>>, vector<1x8x256xf32>
    %185 = vector.shape_cast %184 : vector<1x8x256xf32> to vector<8x256xf32>
    %186 = arith.select %28, %182, %185 : vector<8x256xi1>, vector<8x256xf32>
    %cst_64 = arith.constant dense<0.000000e+00> : vector<8x256xf32>
    %187 = tpu.matmul %168, %9, %cst_64 {dimension_numbers = #tpu.dot_dimension_numbers<[1], [0], [0], [1], [0, 0, 1, 1], [], []>} : vector<8x64xf32>, vector<64x256xf32>, vector<8x256xf32> -> vector<8x256xf32>
    %188 = arith.addf %186, %187 : vector<8x256xf32>
    %189 = math.tanh %188 : vector<8x256xf32>
    %190 = arith.negf %188 : vector<8x256xf32>
    %191 = math.exp %190 : vector<8x256xf32>
    %cst_65 = arith.constant 1.000000e+00 : f32
    %192 = vector.broadcast %cst_65 : f32 to vector<8x256xf32>
    %193 = arith.addf %192, %191 : vector<8x256xf32>
    %194 = arith.divf %192, %193 : vector<8x256xf32>
    %195 = arith.select %33, %189, %194 : vector<8x256xi1>, vector<8x256xf32>
    %196 = vector.extract_strided_slice %195 {offsets = [0, 0], sizes = [8, 64], strides = [1, 1]} : vector<8x256xf32> to vector<8x64xf32>
    %197 = vector.extract_strided_slice %195 {offsets = [0, 64], sizes = [8, 64], strides = [1, 1]} : vector<8x256xf32> to vector<8x64xf32>
    %198 = vector.extract_strided_slice %195 {offsets = [0, 128], sizes = [8, 64], strides = [1, 1]} : vector<8x256xf32> to vector<8x64xf32>
    %199 = vector.extract_strided_slice %195 {offsets = [0, 192], sizes = [8, 64], strides = [1, 1]} : vector<8x256xf32> to vector<8x64xf32>
    %200 = arith.mulf %197, %166 : vector<8x64xf32>
    %201 = arith.mulf %196, %198 : vector<8x64xf32>
    %202 = arith.addf %200, %201 : vector<8x64xf32>
    %203 = math.tanh %202 : vector<8x64xf32>
    %204 = arith.mulf %199, %203 : vector<8x64xf32>
    %205 = vector.extract_strided_slice %204 {offsets = [0, 0], sizes = [8, 32], strides = [1, 1]} : vector<8x64xf32> to vector<8x32xf32>
    %206 = arith.index_cast %c4_i32 : i32 to index
    %c0_66 = arith.constant 0 : index
    %c0_67 = arith.constant 0 : index
    %207 = vector.load %arg7[%206, %c0_66, %c0_67] : memref<8x8x64xf32, #tpu.memory_space<vmem>>, vector<1x8x32xf32>
    %208 = vector.shape_cast %207 : vector<1x8x32xf32> to vector<8x32xf32>
    %209 = vector.shape_cast %205 : vector<8x32xf32> to vector<1x8x32xf32>
    tpu.vector_store %arg7[%206, %c0_66, %c0_67], %209 {strides = array<i32>} : memref<8x8x64xf32, #tpu.memory_space<vmem>>, vector<1x8x32xf32>,
    %210 = vector.extract_strided_slice %204 {offsets = [0, 32], sizes = [8, 32], strides = [1, 1]} : vector<8x64xf32> to vector<8x32xf32>
    %211 = arith.index_cast %179 : i32 to index
    %c0_68 = arith.constant 0 : index
    %c32_69 = arith.constant 32 : index
    %212 = vector.load %arg7[%211, %c0_68, %c32_69] : memref<8x8x64xf32, #tpu.memory_space<vmem>>, vector<1x8x32xf32>
    %213 = vector.shape_cast %212 : vector<1x8x32xf32> to vector<8x32xf32>
    %214 = vector.shape_cast %210 : vector<8x32xf32> to vector<1x8x32xf32>
    tpu.vector_store %arg7[%211, %c0_68, %c32_69], %214 {strides = array<i32>} : memref<8x8x64xf32, #tpu.memory_space<vmem>>, vector<1x8x32xf32>,
    %c5_i32 = arith.constant 5 : i32
    %c7_i32_70 = arith.constant 7 : i32
    %215 = arith.subi %c7_i32_70, %c5_i32 : i32
    %216 = arith.index_cast %c5_i32 : i32 to index
    %c0_71 = arith.constant 0 : index
    %c0_72 = arith.constant 0 : index
    %217 = vector.load %arg9[%216, %c0_71, %c0_72] : memref<8x8x256xf32, #tpu.memory_space<vmem>>, vector<1x8x256xf32>
    %218 = vector.shape_cast %217 : vector<1x8x256xf32> to vector<8x256xf32>
    %219 = arith.index_cast %215 : i32 to index
    %c0_73 = arith.constant 0 : index
    %c0_74 = arith.constant 0 : index
    %220 = vector.load %arg9[%219, %c0_73, %c0_74] : memref<8x8x256xf32, #tpu.memory_space<vmem>>, vector<1x8x256xf32>
    %221 = vector.shape_cast %220 : vector<1x8x256xf32> to vector<8x256xf32>
    %222 = arith.select %28, %218, %221 : vector<8x256xi1>, vector<8x256xf32>
    %cst_75 = arith.constant dense<0.000000e+00> : vector<8x256xf32>
    %223 = tpu.matmul %204, %9, %cst_75 {dimension_numbers = #tpu.dot_dimension_numbers<[1], [0], [0], [1], [0, 0, 1, 1], [], []>} : vector<8x64xf32>, vector<64x256xf32>, vector<8x256xf32> -> vector<8x256xf32>
    %224 = arith.addf %222, %223 : vector<8x256xf32>
    %225 = math.tanh %224 : vector<8x256xf32>
    %226 = arith.negf %224 : vector<8x256xf32>
    %227 = math.exp %226 : vector<8x256xf32>
    %cst_76 = arith.constant 1.000000e+00 : f32
    %228 = vector.broadcast %cst_76 : f32 to vector<8x256xf32>
    %229 = arith.addf %228, %227 : vector<8x256xf32>
    %230 = arith.divf %228, %229 : vector<8x256xf32>
    %231 = arith.select %33, %225, %230 : vector<8x256xi1>, vector<8x256xf32>
    %232 = vector.extract_strided_slice %231 {offsets = [0, 0], sizes = [8, 64], strides = [1, 1]} : vector<8x256xf32> to vector<8x64xf32>
    %233 = vector.extract_strided_slice %231 {offsets = [0, 64], sizes = [8, 64], strides = [1, 1]} : vector<8x256xf32> to vector<8x64xf32>
    %234 = vector.extract_strided_slice %231 {offsets = [0, 128], sizes = [8, 64], strides = [1, 1]} : vector<8x256xf32> to vector<8x64xf32>
    %235 = vector.extract_strided_slice %231 {offsets = [0, 192], sizes = [8, 64], strides = [1, 1]} : vector<8x256xf32> to vector<8x64xf32>
    %236 = arith.mulf %233, %202 : vector<8x64xf32>
    %237 = arith.mulf %232, %234 : vector<8x64xf32>
    %238 = arith.addf %236, %237 : vector<8x64xf32>
    %239 = math.tanh %238 : vector<8x64xf32>
    %240 = arith.mulf %235, %239 : vector<8x64xf32>
    %241 = vector.extract_strided_slice %240 {offsets = [0, 0], sizes = [8, 32], strides = [1, 1]} : vector<8x64xf32> to vector<8x32xf32>
    %242 = arith.index_cast %c5_i32 : i32 to index
    %c0_77 = arith.constant 0 : index
    %c0_78 = arith.constant 0 : index
    %243 = vector.load %arg7[%242, %c0_77, %c0_78] : memref<8x8x64xf32, #tpu.memory_space<vmem>>, vector<1x8x32xf32>
    %244 = vector.shape_cast %243 : vector<1x8x32xf32> to vector<8x32xf32>
    %245 = vector.shape_cast %241 : vector<8x32xf32> to vector<1x8x32xf32>
    tpu.vector_store %arg7[%242, %c0_77, %c0_78], %245 {strides = array<i32>} : memref<8x8x64xf32, #tpu.memory_space<vmem>>, vector<1x8x32xf32>,
    %246 = vector.extract_strided_slice %240 {offsets = [0, 32], sizes = [8, 32], strides = [1, 1]} : vector<8x64xf32> to vector<8x32xf32>
    %247 = arith.index_cast %215 : i32 to index
    %c0_79 = arith.constant 0 : index
    %c32_80 = arith.constant 32 : index
    %248 = vector.load %arg7[%247, %c0_79, %c32_80] : memref<8x8x64xf32, #tpu.memory_space<vmem>>, vector<1x8x32xf32>
    %249 = vector.shape_cast %248 : vector<1x8x32xf32> to vector<8x32xf32>
    %250 = vector.shape_cast %246 : vector<8x32xf32> to vector<1x8x32xf32>
    tpu.vector_store %arg7[%247, %c0_79, %c32_80], %250 {strides = array<i32>} : memref<8x8x64xf32, #tpu.memory_space<vmem>>, vector<1x8x32xf32>,
    %c6_i32 = arith.constant 6 : i32
    %c7_i32_81 = arith.constant 7 : i32
    %251 = arith.subi %c7_i32_81, %c6_i32 : i32
    %252 = arith.index_cast %c6_i32 : i32 to index
    %c0_82 = arith.constant 0 : index
    %c0_83 = arith.constant 0 : index
    %253 = vector.load %arg9[%252, %c0_82, %c0_83] : memref<8x8x256xf32, #tpu.memory_space<vmem>>, vector<1x8x256xf32>
    %254 = vector.shape_cast %253 : vector<1x8x256xf32> to vector<8x256xf32>
    %255 = arith.index_cast %251 : i32 to index
    %c0_84 = arith.constant 0 : index
    %c0_85 = arith.constant 0 : index
    %256 = vector.load %arg9[%255, %c0_84, %c0_85] : memref<8x8x256xf32, #tpu.memory_space<vmem>>, vector<1x8x256xf32>
    %257 = vector.shape_cast %256 : vector<1x8x256xf32> to vector<8x256xf32>
    %258 = arith.select %28, %254, %257 : vector<8x256xi1>, vector<8x256xf32>
    %cst_86 = arith.constant dense<0.000000e+00> : vector<8x256xf32>
    %259 = tpu.matmul %240, %9, %cst_86 {dimension_numbers = #tpu.dot_dimension_numbers<[1], [0], [0], [1], [0, 0, 1, 1], [], []>} : vector<8x64xf32>, vector<64x256xf32>, vector<8x256xf32> -> vector<8x256xf32>
    %260 = arith.addf %258, %259 : vector<8x256xf32>
    %261 = math.tanh %260 : vector<8x256xf32>
    %262 = arith.negf %260 : vector<8x256xf32>
    %263 = math.exp %262 : vector<8x256xf32>
    %cst_87 = arith.constant 1.000000e+00 : f32
    %264 = vector.broadcast %cst_87 : f32 to vector<8x256xf32>
    %265 = arith.addf %264, %263 : vector<8x256xf32>
    %266 = arith.divf %264, %265 : vector<8x256xf32>
    %267 = arith.select %33, %261, %266 : vector<8x256xi1>, vector<8x256xf32>
    %268 = vector.extract_strided_slice %267 {offsets = [0, 0], sizes = [8, 64], strides = [1, 1]} : vector<8x256xf32> to vector<8x64xf32>
    %269 = vector.extract_strided_slice %267 {offsets = [0, 64], sizes = [8, 64], strides = [1, 1]} : vector<8x256xf32> to vector<8x64xf32>
    %270 = vector.extract_strided_slice %267 {offsets = [0, 128], sizes = [8, 64], strides = [1, 1]} : vector<8x256xf32> to vector<8x64xf32>
    %271 = vector.extract_strided_slice %267 {offsets = [0, 192], sizes = [8, 64], strides = [1, 1]} : vector<8x256xf32> to vector<8x64xf32>
    %272 = arith.mulf %269, %238 : vector<8x64xf32>
    %273 = arith.mulf %268, %270 : vector<8x64xf32>
    %274 = arith.addf %272, %273 : vector<8x64xf32>
    %275 = math.tanh %274 : vector<8x64xf32>
    %276 = arith.mulf %271, %275 : vector<8x64xf32>
    %277 = vector.extract_strided_slice %276 {offsets = [0, 0], sizes = [8, 32], strides = [1, 1]} : vector<8x64xf32> to vector<8x32xf32>
    %278 = arith.index_cast %c6_i32 : i32 to index
    %c0_88 = arith.constant 0 : index
    %c0_89 = arith.constant 0 : index
    %279 = vector.load %arg7[%278, %c0_88, %c0_89] : memref<8x8x64xf32, #tpu.memory_space<vmem>>, vector<1x8x32xf32>
    %280 = vector.shape_cast %279 : vector<1x8x32xf32> to vector<8x32xf32>
    %281 = vector.shape_cast %277 : vector<8x32xf32> to vector<1x8x32xf32>
    tpu.vector_store %arg7[%278, %c0_88, %c0_89], %281 {strides = array<i32>} : memref<8x8x64xf32, #tpu.memory_space<vmem>>, vector<1x8x32xf32>,
    %282 = vector.extract_strided_slice %276 {offsets = [0, 32], sizes = [8, 32], strides = [1, 1]} : vector<8x64xf32> to vector<8x32xf32>
    %283 = arith.index_cast %251 : i32 to index
    %c0_90 = arith.constant 0 : index
    %c32_91 = arith.constant 32 : index
    %284 = vector.load %arg7[%283, %c0_90, %c32_91] : memref<8x8x64xf32, #tpu.memory_space<vmem>>, vector<1x8x32xf32>
    %285 = vector.shape_cast %284 : vector<1x8x32xf32> to vector<8x32xf32>
    %286 = vector.shape_cast %282 : vector<8x32xf32> to vector<1x8x32xf32>
    tpu.vector_store %arg7[%283, %c0_90, %c32_91], %286 {strides = array<i32>} : memref<8x8x64xf32, #tpu.memory_space<vmem>>, vector<1x8x32xf32>,
    %c7_i32_92 = arith.constant 7 : i32
    %c7_i32_93 = arith.constant 7 : i32
    %287 = arith.subi %c7_i32_93, %c7_i32_92 : i32
    %288 = arith.index_cast %c7_i32_92 : i32 to index
    %c0_94 = arith.constant 0 : index
    %c0_95 = arith.constant 0 : index
    %289 = vector.load %arg9[%288, %c0_94, %c0_95] : memref<8x8x256xf32, #tpu.memory_space<vmem>>, vector<1x8x256xf32>
    %290 = vector.shape_cast %289 : vector<1x8x256xf32> to vector<8x256xf32>
    %291 = arith.index_cast %287 : i32 to index
    %c0_96 = arith.constant 0 : index
    %c0_97 = arith.constant 0 : index
    %292 = vector.load %arg9[%291, %c0_96, %c0_97] : memref<8x8x256xf32, #tpu.memory_space<vmem>>, vector<1x8x256xf32>
    %293 = vector.shape_cast %292 : vector<1x8x256xf32> to vector<8x256xf32>
    %294 = arith.select %28, %290, %293 : vector<8x256xi1>, vector<8x256xf32>
    %cst_98 = arith.constant dense<0.000000e+00> : vector<8x256xf32>
    %295 = tpu.matmul %276, %9, %cst_98 {dimension_numbers = #tpu.dot_dimension_numbers<[1], [0], [0], [1], [0, 0, 1, 1], [], []>} : vector<8x64xf32>, vector<64x256xf32>, vector<8x256xf32> -> vector<8x256xf32>
    %296 = arith.addf %294, %295 : vector<8x256xf32>
    %297 = math.tanh %296 : vector<8x256xf32>
    %298 = arith.negf %296 : vector<8x256xf32>
    %299 = math.exp %298 : vector<8x256xf32>
    %cst_99 = arith.constant 1.000000e+00 : f32
    %300 = vector.broadcast %cst_99 : f32 to vector<8x256xf32>
    %301 = arith.addf %300, %299 : vector<8x256xf32>
    %302 = arith.divf %300, %301 : vector<8x256xf32>
    %303 = arith.select %33, %297, %302 : vector<8x256xi1>, vector<8x256xf32>
    %304 = vector.extract_strided_slice %303 {offsets = [0, 0], sizes = [8, 64], strides = [1, 1]} : vector<8x256xf32> to vector<8x64xf32>
    %305 = vector.extract_strided_slice %303 {offsets = [0, 64], sizes = [8, 64], strides = [1, 1]} : vector<8x256xf32> to vector<8x64xf32>
    %306 = vector.extract_strided_slice %303 {offsets = [0, 128], sizes = [8, 64], strides = [1, 1]} : vector<8x256xf32> to vector<8x64xf32>
    %307 = vector.extract_strided_slice %303 {offsets = [0, 192], sizes = [8, 64], strides = [1, 1]} : vector<8x256xf32> to vector<8x64xf32>
    %308 = arith.mulf %305, %274 : vector<8x64xf32>
    %309 = arith.mulf %304, %306 : vector<8x64xf32>
    %310 = arith.addf %308, %309 : vector<8x64xf32>
    %311 = math.tanh %310 : vector<8x64xf32>
    %312 = arith.mulf %307, %311 : vector<8x64xf32>
    %313 = vector.extract_strided_slice %312 {offsets = [0, 0], sizes = [8, 32], strides = [1, 1]} : vector<8x64xf32> to vector<8x32xf32>
    %314 = arith.index_cast %c7_i32_92 : i32 to index
    %c0_100 = arith.constant 0 : index
    %c0_101 = arith.constant 0 : index
    %315 = vector.load %arg7[%314, %c0_100, %c0_101] : memref<8x8x64xf32, #tpu.memory_space<vmem>>, vector<1x8x32xf32>
    %316 = vector.shape_cast %315 : vector<1x8x32xf32> to vector<8x32xf32>
    %317 = vector.shape_cast %313 : vector<8x32xf32> to vector<1x8x32xf32>
    tpu.vector_store %arg7[%314, %c0_100, %c0_101], %317 {strides = array<i32>} : memref<8x8x64xf32, #tpu.memory_space<vmem>>, vector<1x8x32xf32>,
    %318 = vector.extract_strided_slice %312 {offsets = [0, 32], sizes = [8, 32], strides = [1, 1]} : vector<8x64xf32> to vector<8x32xf32>
    %319 = arith.index_cast %287 : i32 to index
    %c0_102 = arith.constant 0 : index
    %c32_103 = arith.constant 32 : index
    %320 = vector.load %arg7[%319, %c0_102, %c32_103] : memref<8x8x64xf32, #tpu.memory_space<vmem>>, vector<1x8x32xf32>
    %321 = vector.shape_cast %320 : vector<1x8x32xf32> to vector<8x32xf32>
    %322 = vector.shape_cast %318 : vector<8x32xf32> to vector<1x8x32xf32>
    tpu.vector_store %arg7[%319, %c0_102, %c32_103], %322 {strides = array<i32>} : memref<8x8x64xf32, #tpu.memory_space<vmem>>, vector<1x8x32xf32>,
    %c8_i32 = arith.constant 8 : i32
    %323 = tpu.concatenate %312, %310 in 1 : vector<8x64xf32>, vector<8x64xf32> -> vector<8x128xf32>
    %c0_104 = arith.constant 0 : index
    %c0_105 = arith.constant 0 : index
    %324 = vector.load %arg5[%c0_104, %c0_105] : memref<128x64xf32, #tpu.memory_space<vmem>>, vector<128x64xf32>
    %cst_106 = arith.constant dense<0.000000e+00> : vector<8x64xf32>
    %325 = tpu.matmul %323, %324, %cst_106 {dimension_numbers = #tpu.dot_dimension_numbers<[1], [0], [0], [1], [0, 0, 1, 1], [], []>} : vector<8x128xf32>, vector<128x64xf32>, vector<8x64xf32> -> vector<8x64xf32>
    %c0_107 = arith.constant 0 : index
    %c0_108 = arith.constant 0 : index
    %326 = vector.load %arg6[%c0_107, %c0_108] : memref<1x64xf32, #tpu.memory_space<vmem>>, vector<1x64xf32>
    %327 = vector.broadcast %326 : vector<1x64xf32> to vector<8x64xf32>
    %328 = arith.addf %325, %327 : vector<8x64xf32>
    %c0_109 = arith.constant 0 : index
    %c0_110 = arith.constant 0 : index
    %329 = vector.load %arg8[%c0_109, %c0_110] : memref<8x64xf32, #tpu.memory_space<vmem>>, vector<8x64xf32>
    tpu.vector_store %arg8[%c0_109, %c0_110], %328 {strides = array<i32>} : memref<8x64xf32, #tpu.memory_space<vmem>>, vector<8x64xf32>,
    return
  }
  func.func @transform_0(%arg0: i32) -> (i32, i32, i32) {
    %c0_i32 = arith.constant 0 : i32
    %c0_i32_0 = arith.constant 0 : i32
    %c0_i32_1 = arith.constant 0 : i32
    %c0_i32_2 = arith.constant 0 : i32
    return %c0_i32, %c0_i32_0, %c0_i32_1 : i32, i32, i32
  }
  func.func @transform_1(%arg0: i32) -> (i32, i32) {
    %c0_i32 = arith.constant 0 : i32
    %c0_i32_0 = arith.constant 0 : i32
    %c0_i32_1 = arith.constant 0 : i32
    return %c0_i32, %c0_i32_0 : i32, i32
  }
  func.func @transform_2(%arg0: i32) -> (i32, i32) {
    %c0_i32 = arith.constant 0 : i32
    %c0_i32_0 = arith.constant 0 : i32
    %c0_i32_1 = arith.constant 0 : i32
    return %c0_i32, %c0_i32_0 : i32, i32
  }
  func.func @transform_3(%arg0: i32) -> (i32, i32) {
    %c0_i32 = arith.constant 0 : i32
    %c0_i32_0 = arith.constant 0 : i32
    %c0_i32_1 = arith.constant 0 : i32
    return %c0_i32, %c0_i32_0 : i32, i32
  }
  func.func @transform_4(%arg0: i32) -> (i32, i32) {
    %c0_i32 = arith.constant 0 : i32
    %c0_i32_0 = arith.constant 0 : i32
    %c0_i32_1 = arith.constant 0 : i32
    return %c0_i32, %c0_i32_0 : i32, i32
  }
  func.func @transform_5(%arg0: i32) -> (i32, i32) {
    %c0_i32 = arith.constant 0 : i32
    %c0_i32_0 = arith.constant 0 : i32
    %c0_i32_1 = arith.constant 0 : i32
    return %c0_i32, %c0_i32_0 : i32, i32
  }
  func.func @transform_6(%arg0: i32) -> (i32, i32, i32) {
    %c0_i32 = arith.constant 0 : i32
    %c0_i32_0 = arith.constant 0 : i32
    %c0_i32_1 = arith.constant 0 : i32
    %c0_i32_2 = arith.constant 0 : i32
    return %c0_i32, %c0_i32_0, %c0_i32_1 : i32, i32, i32
  }
  func.func @transform_7(%arg0: i32) -> (i32, i32) {
    %c0_i32 = arith.constant 0 : i32
    %c0_i32_0 = arith.constant 0 : i32
    %c0_i32_1 = arith.constant 0 : i32
    return %c0_i32, %c0_i32_0 : i32, i32
  }
}

</mosaic_0001>

<llo_original>
// kernel: encoder_forward.3
$region0: #{encoder_forward.3}
  #allocation0 [shape = 'u32[]', space=smem, size = 0x4, offset = 0x4, fixed_abs, tag = 'smem constant byte address 0x4 - core index']
  #allocation1 [shape = 'u32[144,128]{1,0:T(1,128)}', space=vmem, size = 0x12000, scoped, tag = 'internal scratch']
  #allocation2 [shape = 'f32[8,8,256]{2,1,0:T(8,128)}', space=vmem, size = 0x10000, scoped, tag = 'scratch operand']
  %s0 = inlined_call_operand.vmem [shape: f32[8,8,64], index: 0, kind: input, shape index: {}]
  %s1 = inlined_call_operand.vmem [shape: f32[64,256], index: 1, kind: input, shape index: {}]
  %s2 = inlined_call_operand.vmem [shape: f32[64,256], index: 2, kind: input, shape index: {}]
  %s3 = inlined_call_operand.vmem [shape: f32[1,256], index: 3, kind: input, shape index: {}]
  %s4 = inlined_call_operand.vmem [shape: f32[8,8,64], index: 4, kind: output, shape index: {}]
  %s5 = sld [smem:[#allocation0]]
  $region26: #{encoder_forward.3} parent=0
    _
  %s7 = ssub.s32 1, %s5
  %s8 = scalar_select 0, %s7, %s5
  // Predicated region
  $region2: #{encoder_forward.3} parent=0 // pred_check
    _
  $region3: #{encoder_forward.3} parent=0 // pred_check_branch
    %10 = sbr.rel (0) target = $region5
  $region4: #{encoder_forward.3} parent=0 // pred_region
    _
  $region5: #{encoder_forward.3} parent=0 // pred_fallthru
    _
  // Predicated region
  $region6: #{encoder_forward.3} parent=0 // pred_check
    _
  $region7: #{encoder_forward.3} parent=0 // pred_check_branch
    %12 = sbr.rel (0) target = $region9
  $region8: #{encoder_forward.3} parent=0 // pred_region
    _
  $region9: #{encoder_forward.3} parent=0 // pred_fallthru
    _
  // Predicated region
  $region10: #{encoder_forward.3} parent=0 // pred_check
    _
  $region11: #{encoder_forward.3} parent=0 // pred_check_branch
    %14 = sbr.rel (0) target = $region13
  $region12: #{encoder_forward.3} parent=0 // pred_region
    _
  $region13: #{encoder_forward.3} parent=0 // pred_fallthru
    _
  // Predicated region
  $region14: #{encoder_forward.3} parent=0 // pred_check
    _
  $region15: #{encoder_forward.3} parent=0 // pred_check_branch
    %16 = sbr.rel (0) target = $region17
  $region16: #{encoder_forward.3} parent=0 // pred_region
    _
  $region17: #{encoder_forward.3} parent=0 // pred_fallthru
    _
  %v17 = vld [vmem:[%s0] sm:$0xff]
  %v18 = vld [vmem:[%s0 + $0x8] sm:$0xff]
  %v19 = vld [vmem:[%s0 + $0x10] sm:$0xff]
  %v20 = vld [vmem:[%s0 + $0x18] sm:$0xff]
  %v21 = vld [vmem:[%s0 + $0x20] sm:$0xff]
  %v22 = vld [vmem:[%s0 + $0x28] sm:$0xff]
  %v23 = vld [vmem:[%s0 + $0x30] sm:$0xff]
  %v24 = vld [vmem:[%s0 + $0x38] sm:$0xff]
  %v25 = vld [vmem:[%s1] sm:$0xff]
  %v26 = vld [vmem:[%s1 + $0x8] sm:$0xff]
  %v27 = vld [vmem:[%s1 + $0x10] sm:$0xff]
  %v28 = vld [vmem:[%s1 + $0x18] sm:$0xff]
  %v29 = vld [vmem:[%s1 + $0x20] sm:$0xff]
  %v30 = vld [vmem:[%s1 + $0x28] sm:$0xff]
  %v31 = vld [vmem:[%s1 + $0x30] sm:$0xff]
  %v32 = vld [vmem:[%s1 + $0x38] sm:$0xff]
  %v33 = vld [vmem:[%s1 + $0x40] sm:$0xff]
  %v34 = vld [vmem:[%s1 + $0x48] sm:$0xff]
  %v35 = vld [vmem:[%s1 + $0x50] sm:$0xff]
  %v36 = vld [vmem:[%s1 + $0x58] sm:$0xff]
  %v37 = vld [vmem:[%s1 + $0x60] sm:$0xff]
  %v38 = vld [vmem:[%s1 + $0x68] sm:$0xff]
  %v39 = vld [vmem:[%s1 + $0x70] sm:$0xff]
  %v40 = vld [vmem:[%s1 + $0x78] sm:$0xff]
  %v41 = vld [vmem:[%s3] sm:$0x3]
  %v43 = vlaneseq
  %v44 = vshrl.u32 %v43, 7
  %v45 = vsub.s32 0, %v44
  %v46 = vrot.slane %v41, %v45
  %v47 = vlaneseq
  %v48 = vshrl.u32 %v47, 7
  %v49 = vsub.s32 1, %v48
  %v50 = vrot.slane %v41, %v49
  %vm53 = vcmask 523264
  %v55 = vsel %vm53, %v17, 0
  %v58 = vsel %vm53, %v18, 0
  %v61 = vsel %vm53, %v19, 0
  %v64 = vsel %vm53, %v20, 0
  %v67 = vsel %vm53, %v21, 0
  %v70 = vsel %vm53, %v22, 0
  %v73 = vsel %vm53, %v23, 0
  %v76 = vsel %vm53, %v24, 0
  %78 = vmatprep.subr.mxu0 0.0
  %79 = vmatpush1.msra.mxu0 0.0
  %80 = vmatprep.subr.mxu0 0.0
  %81 = vmatpush1.msra.mxu0 0.0
  %82 = vmatprep.subr.mxu0 0.0
  %83 = vmatpush1.msra.mxu0 0.0
  %84 = vmatprep.subr.mxu0 0.0
  %85 = vmatpush1.msra.mxu0 0.0
  %86 = vmatprep.subr.mxu0 0.0
  %87 = vmatpush1.msra.mxu0 0.0
  %88 = vmatprep.subr.mxu0 0.0
  %89 = vmatpush1.msra.mxu0 0.0
  %90 = vmatprep.subr.mxu0 0.0
  %91 = vmatpush1.msra.mxu0 0.0
  %92 = vmatprep.subr.mxu0 0.0
  %93 = vmatpush1.msra.mxu0 0.0
  %94 = vmatprep.subr.mxu0 %v40
  %95 = vmatpush1.msra.mxu0 %v39
  %96 = vmatprep.subr.mxu0 %v38
  %97 = vmatpush1.msra.mxu0 %v37
  %98 = vmatprep.subr.mxu0 %v36
  %99 = vmatpush1.msra.mxu0 %v35
  %100 = vmatprep.subr.mxu0 %v34
  %101 = vmatpush1.msra.mxu0 %v33
  %102 = vmatprep.subr.mxu0 %v32
  %103 = vmatpush1.msra.mxu0 %v31
  %104 = vmatprep.subr.mxu0 %v30
  %105 = vmatpush1.msra.mxu0 %v29
  %106 = vmatprep.subr.mxu0 %v28
  %107 = vmatpush1.msra.mxu0 %v27
  %108 = vmatprep.subr.mxu0 %v26
  %109 = vmatpush1.msra.mxu0 %v25
  %110 = vmatprep.subr.mxu0 0.0
  %111 = vmatpush2.msra.mxu0 0.0
  %112 = vmatprep.subr.mxu0 0.0
  %113 = vmatpush2.msra.mxu0 0.0
  %114 = vmatprep.subr.mxu0 0.0
  %115 = vmatpush2.msra.mxu0 0.0
  %116 = vmatprep.subr.mxu0 0.0
  %117 = vmatpush2.msra.mxu0 0.0
  %118 = vmatprep.subr.mxu0 0.0
  %119 = vmatpush2.msra.mxu0 0.0
  %120 = vmatprep.subr.mxu0 0.0
  %121 = vmatpush2.msra.mxu0 0.0
  %122 = vmatprep.subr.mxu0 0.0
  %123 = vmatpush2.msra.mxu0 0.0
  %124 = vmatprep.subr.mxu0 0.0
  %125 = vmatpush2.msra.mxu0 0.0
  %126 = vmatprep.subr.mxu0 0.0
  %127 = vmatpush2.msra.mxu0 0.0
  %128 = vmatprep.subr.mxu0 0.0
  %129 = vmatpush2.msra.mxu0 0.0
  %130 = vmatprep.subr.mxu0 0.0
  %131 = vmatpush2.msra.mxu0 0.0
  %132 = vmatprep.subr.mxu0 0.0
  %133 = vmatpush2.msra.mxu0 0.0
  %134 = vmatprep.subr.mxu0 0.0
  %135 = vmatpush2.msra.mxu0 0.0
  %136 = vmatprep.subr.mxu0 0.0
  %137 = vmatpush2.msra.mxu0 0.0
  %138 = vmatprep.subr.mxu0 0.0
  %139 = vmatpush2.msra.mxu0 0.0
  %140 = vmatprep.subr.mxu0 0.0
  %141 = vmatpush2.msra.mxu0 0.0
  %142 = vmatprep.mubr.f32.mxu0 0.0
  %143 = vmatmul.mubr.f32.gmra.mxu0 %v55
  %v144 = vpop.f32.mrf.mxu0
  %v145 = vadd.f32 %v46, %v144
  %v146 = vpop.f32.mrf.mxu0
  %v147 = vadd.f32 %v50, %v146
  %148 = vmatprep.mubr.f32.mxu0 0.0
  %149 = vmatmul.mubr.f32.gmra.mxu0 %v58
  %v150 = vpop.f32.mrf.mxu0
  %v151 = vadd.f32 %v46, %v150
  %v152 = vpop.f32.mrf.mxu0
  %v153 = vadd.f32 %v50, %v152
  %154 = vmatprep.mubr.f32.mxu0 0.0
  %155 = vmatmul.mubr.f32.gmra.mxu0 %v61
  %v156 = vpop.f32.mrf.mxu0
  %v157 = vadd.f32 %v46, %v156
  %v158 = vpop.f32.mrf.mxu0
  %v159 = vadd.f32 %v50, %v158
  %160 = vmatprep.mubr.f32.mxu0 0.0
  %161 = vmatmul.mubr.f32.gmra.mxu0 %v64
  %v162 = vpop.f32.mrf.mxu0
  %v163 = vadd.f32 %v46, %v162
  %v164 = vpop.f32.mrf.mxu0
  %v165 = vadd.f32 %v50, %v164
  %166 = vmatprep.mubr.f32.mxu0 0.0
  %167 = vmatmul.mubr.f32.gmra.mxu0 %v67
  %v168 = vpop.f32.mrf.mxu0
  %v169 = vadd.f32 %v46, %v168
  %v170 = vpop.f32.mrf.mxu0
  %v171 = vadd.f32 %v50, %v170
  %172 = vmatprep.mubr.f32.mxu0 0.0
  %173 = vmatmul.mubr.f32.gmra.mxu0 %v70
  %v174 = vpop.f32.mrf.mxu0
  %v175 = vadd.f32 %v46, %v174
  %v176 = vpop.f32.mrf.mxu0
  %v177 = vadd.f32 %v50, %v176
  %178 = vmatprep.mubr.f32.mxu0 0.0
  %179 = vmatmul.mubr.f32.gmra.mxu0 %v73
  %v180 = vpop.f32.mrf.mxu0
  %v181 = vadd.f32 %v46, %v180
  %v182 = vpop.f32.mrf.mxu0
  %v183 = vadd.f32 %v50, %v182
  %184 = vmatprep.mubr.f32.mxu0 0.0
  %185 = vmatmul.mubr.f32.gmra.mxu0 %v76
  %v186 = vpop.f32.mrf.mxu0
  %v187 = vadd.f32 %v46, %v186
  %v188 = vpop.f32.mrf.mxu0
  %v189 = vadd.f32 %v50, %v188
  %190 = vdwg.mxu0
  %191 = vst [vmem:[#allocation2] sm:$0xff] %v145
  %192 = vst [vmem:[#allocation2 + $0x8] sm:$0xff] %v147
  %193 = vst [vmem:[#allocation2 + $0x10] sm:$0xff] %v151
  %194 = vst [vmem:[#allocation2 + $0x18] sm:$0xff] %v153
  %195 = vst [vmem:[#allocation2 + $0x20] sm:$0xff] %v157
  %196 = vst [vmem:[#allocation2 + $0x28] sm:$0xff] %v159
  %197 = vst [vmem:[#allocation2 + $0x30] sm:$0xff] %v163
  %198 = vst [vmem:[#allocation2 + $0x38] sm:$0xff] %v165
  %199 = vst [vmem:[#allocation2 + $0x40] sm:$0xff] %v169
  %200 = vst [vmem:[#allocation2 + $0x48] sm:$0xff] %v171
  %201 = vst [vmem:[#allocation2 + $0x50] sm:$0xff] %v175
  %202 = vst [vmem:[#allocation2 + $0x58] sm:$0xff] %v177
  %203 = vst [vmem:[#allocation2 + $0x60] sm:$0xff] %v181
  %204 = vst [vmem:[#allocation2 + $0x68] sm:$0xff] %v183
  %205 = vst [vmem:[#allocation2 + $0x70] sm:$0xff] %v187
  %206 = vst [vmem:[#allocation2 + $0x78] sm:$0xff] %v189
  %v207 = vld [vmem:[%s2] sm:$0xff]
  %v208 = vld [vmem:[%s2 + $0x8] sm:$0xff]
  %v209 = vld [vmem:[%s2 + $0x10] sm:$0xff]
  %v210 = vld [vmem:[%s2 + $0x18] sm:$0xff]
  %v211 = vld [vmem:[%s2 + $0x20] sm:$0xff]
  %v212 = vld [vmem:[%s2 + $0x28] sm:$0xff]
  %v213 = vld [vmem:[%s2 + $0x30] sm:$0xff]
  %v214 = vld [vmem:[%s2 + $0x38] sm:$0xff]
  %v215 = vld [vmem:[%s2 + $0x40] sm:$0xff]
  %v216 = vld [vmem:[%s2 + $0x48] sm:$0xff]
  %v217 = vld [vmem:[%s2 + $0x50] sm:$0xff]
  %v218 = vld [vmem:[%s2 + $0x58] sm:$0xff]
  %v219 = vld [vmem:[%s2 + $0x60] sm:$0xff]
  %v220 = vld [vmem:[%s2 + $0x68] sm:$0xff]
  %v221 = vld [vmem:[%s2 + $0x70] sm:$0xff]
  %v222 = vld [vmem:[%s2 + $0x78] sm:$0xff]
  %v223 = vlaneseq
  %v224 = vand.u32 %v223, 127
  %v225 = vadd.s32 %v224, 128
  %vm226 = vcmp.lt.s32.totalorder %v224, 0
  %v227 = vsub.s32 0, %v224
  %v228 = vsel %vm226, %v227, %v224
  %v229 = vshrl.u32 %v228, 6
  %v230 = vand.u32 %v228, 63
  %v231 = vsub.s32 0, %v230
  %v232 = vsel %vm226, %v231, %v230
  %vm233 = vcmp.lt.s32.totalorder %v225, 0
  %v234 = vsub.s32 0, %v225
  %v235 = vsel %vm233, %v234, %v225
  %v236 = vshrl.u32 %v235, 6
  %v237 = vand.u32 %v235, 63
  %v238 = vsub.s32 0, %v237
  %v239 = vsel %vm233, %v238, %v237
  %vm240 = vcmp.ne.s32.totalorder %v232, 0
  %vm241 = vcmp.ne.s32.totalorder %v239, 0
  %vm242 = vcmp.lt.s32.totalorder %v232, 0
  %vm243 = vcmp.lt.s32.totalorder %v239, 0
  %vm244 = vmand %vm242, %vm240
  %vm245 = vmand %vm243, %vm241
  %v246 = vadd.s32 %v232, 64
  %v247 = vadd.s32 %v239, 64
  %v248 = vsel %vm244, %v246, %v232
  %v249 = vsel %vm245, %v247, %v239
  %vm250 = vcmp.lt.s32.totalorder %v248, 32
  %vm251 = vcmp.lt.s32.totalorder %v249, 32
  %vm252 = vcmp.ge.s32.totalorder %v224, 128
  %vm253 = vcmp.ge.s32.totalorder %v225, 128
  %vm254 = vcmp.lt.s32.totalorder %v224, 192
  %vm255 = vcmp.lt.s32.totalorder %v225, 192
  %vm256 = vmand %vm252, %vm254
  %vm257 = vmand %vm253, %vm255
  %v258 = vld [vmem:[#allocation2] sm:$0xff]
  %v259 = vld [vmem:[#allocation2 + $0x8] sm:$0xff]
  %s260 = scalar_lea.vmem [#allocation2], 112
  %v261 = vld [vmem:[%s260] sm:$0xff]
  %v262 = vld [vmem:[%s260 + $0x8] sm:$0xff]
  %v263 = vsel %vm250, %v258, %v261
  %v264 = vsel %vm251, %v259, %v262
  %v266 = vsel %vm53, 0.0, 0
  %268 = vmatprep.subr.mxu0 0.0
  %269 = vmatpush1.msra.mxu0 0.0
  %270 = vmatprep.subr.mxu0 0.0
  %271 = vmatpush1.msra.mxu0 0.0
  %272 = vmatprep.subr.mxu0 0.0
  %273 = vmatpush1.msra.mxu0 0.0
  %274 = vmatprep.subr.mxu0 0.0
  %275 = vmatpush1.msra.mxu0 0.0
  %276 = vmatprep.subr.mxu0 0.0
  %277 = vmatpush1.msra.mxu0 0.0
  %278 = vmatprep.subr.mxu0 0.0
  %279 = vmatpush1.msra.mxu0 0.0
  %280 = vmatprep.subr.mxu0 0.0
  %281 = vmatpush1.msra.mxu0 0.0
  %282 = vmatprep.subr.mxu0 0.0
  %283 = vmatpush1.msra.mxu0 0.0
  %284 = vmatprep.subr.mxu0 %v222
  %285 = vmatpush1.msra.mxu0 %v221
  %286 = vmatprep.subr.mxu0 %v220
  %287 = vmatpush1.msra.mxu0 %v219
  %288 = vmatprep.subr.mxu0 %v218
  %289 = vmatpush1.msra.mxu0 %v217
  %290 = vmatprep.subr.mxu0 %v216
  %291 = vmatpush1.msra.mxu0 %v215
  %292 = vmatprep.subr.mxu0 %v214
  %293 = vmatpush1.msra.mxu0 %v213
  %294 = vmatprep.subr.mxu0 %v212
  %295 = vmatpush1.msra.mxu0 %v211
  %296 = vmatprep.subr.mxu0 %v210
  %297 = vmatpush1.msra.mxu0 %v209
  %298 = vmatprep.subr.mxu0 %v208
  %299 = vmatpush1.msra.mxu0 %v207
  %300 = vmatprep.subr.mxu0 0.0
  %301 = vmatpush2.msra.mxu0 0.0
  %302 = vmatprep.subr.mxu0 0.0
  %303 = vmatpush2.msra.mxu0 0.0
  %304 = vmatprep.subr.mxu0 0.0
  %305 = vmatpush2.msra.mxu0 0.0
  %306 = vmatprep.subr.mxu0 0.0
  %307 = vmatpush2.msra.mxu0 0.0
  %308 = vmatprep.subr.mxu0 0.0
  %309 = vmatpush2.msra.mxu0 0.0
  %310 = vmatprep.subr.mxu0 0.0
  %311 = vmatpush2.msra.mxu0 0.0
  %312 = vmatprep.subr.mxu0 0.0
  %313 = vmatpush2.msra.mxu0 0.0
  %314 = vmatprep.subr.mxu0 0.0
  %315 = vmatpush2.msra.mxu0 0.0
  %316 = vmatprep.subr.mxu0 0.0
  %317 = vmatpush2.msra.mxu0 0.0
  %318 = vmatprep.subr.mxu0 0.0
  %319 = vmatpush2.msra.mxu0 0.0
  %320 = vmatprep.subr.mxu0 0.0
  %321 = vmatpush2.msra.mxu0 0.0
  %322 = vmatprep.subr.mxu0 0.0
  %323 = vmatpush2.msra.mxu0 0.0
  %324 = vmatprep.subr.mxu0 0.0
  %325 = vmatpush2.msra.mxu0 0.0
  %326 = vmatprep.subr.mxu0 0.0
  %327 = vmatpush2.msra.mxu0 0.0
  %328 = vmatprep.subr.mxu0 0.0
  %329 = vmatpush2.msra.mxu0 0.0
  %330 = vmatprep.subr.mxu0 0.0
  %331 = vmatpush2.msra.mxu0 0.0
  %332 = vmatprep.mubr.f32.mxu0 0.0
  %333 = vmatmul.mubr.f32.gmra.mxu0 %v266
  %v334 = vpop.f32.mrf.mxu0
  %v335 = vadd.f32 0.0, %v334
  %v336 = vpop.f32.mrf.mxu0
  %v337 = vadd.f32 0.0, %v336
  %338 = vdwg.mxu0
  %v339 = vadd.f32 %v263, %v335
  %v340 = vadd.f32 %v264, %v337
  %v341 = vtanh.pop %v339
  %v342 = vtanh.pop %v340
  %v343 = vxor.u32 %v339, 2147483648
  %v344 = vxor.u32 %v340, 2147483648
  %v345 = vmul.f32 %v343, 1.442695
  %v346 = vpow.pop %v345
  %v347 = vmul.f32 %v344, 1.442695
  %v348 = vpow.pop %v347
  %v349 = vadd.f32 %v346, 1.0
  %v350 = vadd.f32 %v348, 1.0
  %v351 = vrcp.pop %v349
  %v352 = vmul.f32 1.0, %v351
  %v353 = vrcp.pop %v350
  %v354 = vmul.f32 1.0, %v353
  %v355 = vsel %vm256, %v341, %v352
  %v356 = vsel %vm257, %v342, %v354
  %v357 = vmul.f32 %v355, 0.0
  %v358 = vmul.f32 %v355, %v356
  %360 = vrot.lane.b32.xlu0 %v358, 64
  %v361 = vpop.permute.xlu0 %360
  %v363 = vadd.f32 %v357, %v361
  %v364 = vtanh.pop %v363
  %v365 = vmul.f32 %v356, %v364
  %367 = vrot.lane.b32.xlu0 %v365, 64
  %v368 = vpop.permute.xlu0 %367
  %vm370 = vcmask 261120
  %371 = vst.msk [vmem:[%s4] sm:$0xff] %vm370, %v368
  %s372 = scalar_lea.vmem %s4, 56
  %vm373 = vcmask 523520
  %374 = vst.msk [vmem:[%s372] sm:$0xff] %vm373, %v368
  %s375 = scalar_lea.vmem [#allocation2], 16
  %v376 = vld [vmem:[%s375] sm:$0xff]
  %v377 = vld [vmem:[%s375 + $0x8] sm:$0xff]
  %s378 = scalar_lea.vmem [#allocation2], 96
  %v379 = vld [vmem:[%s378] sm:$0xff]
  %v380 = vld [vmem:[%s378 + $0x8] sm:$0xff]
  %v381 = vsel %vm250, %v376, %v379
  %v382 = vsel %vm251, %v377, %v380
  %v383 = vsel %vm53, %v368, 0
  %385 = vmatprep.subr.mxu0 0.0
  %386 = vmatpush1.msra.mxu0 0.0
  %387 = vmatprep.subr.mxu0 0.0
  %388 = vmatpush1.msra.mxu0 0.0
  %389 = vmatprep.subr.mxu0 0.0
  %390 = vmatpush1.msra.mxu0 0.0
  %391 = vmatprep.subr.mxu0 0.0
  %392 = vmatpush1.msra.mxu0 0.0
  %393 = vmatprep.subr.mxu0 0.0
  %394 = vmatpush1.msra.mxu0 0.0
  %395 = vmatprep.subr.mxu0 0.0
  %396 = vmatpush1.msra.mxu0 0.0
  %397 = vmatprep.subr.mxu0 0.0
  %398 = vmatpush1.msra.mxu0 0.0
  %399 = vmatprep.subr.mxu0 0.0
  %400 = vmatpush1.msra.mxu0 0.0
  %401 = vmatprep.subr.mxu0 %v222
  %402 = vmatpush1.msra.mxu0 %v221
  %403 = vmatprep.subr.mxu0 %v220
  %404 = vmatpush1.msra.mxu0 %v219
  %405 = vmatprep.subr.mxu0 %v218
  %406 = vmatpush1.msra.mxu0 %v217
  %407 = vmatprep.subr.mxu0 %v216
  %408 = vmatpush1.msra.mxu0 %v215
  %409 = vmatprep.subr.mxu0 %v214
  %410 = vmatpush1.msra.mxu0 %v213
  %411 = vmatprep.subr.mxu0 %v212
  %412 = vmatpush1.msra.mxu0 %v211
  %413 = vmatprep.subr.mxu0 %v210
  %414 = vmatpush1.msra.mxu0 %v209
  %415 = vmatprep.subr.mxu0 %v208
  %416 = vmatpush1.msra.mxu0 %v207
  %417 = vmatprep.subr.mxu0 0.0
  %418 = vmatpush2.msra.mxu0 0.0
  %419 = vmatprep.subr.mxu0 0.0
  %420 = vmatpush2.msra.mxu0 0.0
  %421 = vmatprep.subr.mxu0 0.0
  %422 = vmatpush2.msra.mxu0 0.0
  %423 = vmatprep.subr.mxu0 0.0
  %424 = vmatpush2.msra.mxu0 0.0
  %425 = vmatprep.subr.mxu0 0.0
  %426 = vmatpush2.msra.mxu0 0.0
  %427 = vmatprep.subr.mxu0 0.0
  %428 = vmatpush2.msra.mxu0 0.0
  %429 = vmatprep.subr.mxu0 0.0
  %430 = vmatpush2.msra.mxu0 0.0
  %431 = vmatprep.subr.mxu0 0.0
  %432 = vmatpush2.msra.mxu0 0.0
  %433 = vmatprep.subr.mxu0 0.0
  %434 = vmatpush2.msra.mxu0 0.0
  %435 = vmatprep.subr.mxu0 0.0
  %436 = vmatpush2.msra.mxu0 0.0
  %437 = vmatprep.subr.mxu0 0.0
  %438 = vmatpush2.msra.mxu0 0.0
  %439 = vmatprep.subr.mxu0 0.0
  %440 = vmatpush2.msra.mxu0 0.0
  %441 = vmatprep.subr.mxu0 0.0
  %442 = vmatpush2.msra.mxu0 0.0
  %443 = vmatprep.subr.mxu0 0.0
  %444 = vmatpush2.msra.mxu0 0.0
  %445 = vmatprep.subr.mxu0 0.0
  %446 = vmatpush2.msra.mxu0 0.0
  %447 = vmatprep.subr.mxu0 0.0
  %448 = vmatpush2.msra.mxu0 0.0
  %449 = vmatprep.mubr.f32.mxu0 0.0
  %450 = vmatmul.mubr.f32.gmra.mxu0 %v383
  %v451 = vpop.f32.mrf.mxu0
  %v452 = vadd.f32 0.0, %v451
  %v453 = vpop.f32.mrf.mxu0
  %v454 = vadd.f32 0.0, %v453
  %455 = vdwg.mxu0
  %v456 = vadd.f32 %v381, %v452
  %v457 = vadd.f32 %v382, %v454
  %v458 = vtanh.pop %v456
  %v459 = vtanh.pop %v457
  %v460 = vxor.u32 %v456, 2147483648
  %v461 = vxor.u32 %v457, 2147483648
  %v462 = vmul.f32 %v460, 1.442695
  %v463 = vpow.pop %v462
  %v464 = vmul.f32 %v461, 1.442695
  %v465 = vpow.pop %v464
  %v466 = vadd.f32 %v463, 1.0
  %v467 = vadd.f32 %v465, 1.0
  %v468 = vrcp.pop %v466
  %v469 = vmul.f32 1.0, %v468
  %v470 = vrcp.pop %v467
  %v471 = vmul.f32 1.0, %v470
  %v472 = vsel %vm256, %v458, %v469
  %v473 = vsel %vm257, %v459, %v471
  %v474 = vmul.f32 %v472, %v363
  %v475 = vmul.f32 %v472, %v473
  %477 = vrot.lane.b32.xlu0 %v475, 64
  %v478 = vpop.permute.xlu0 %477
  %v480 = vadd.f32 %v474, %v478
  %v481 = vtanh.pop %v480
  %v482 = vmul.f32 %v473, %v481
  %484 = vrot.lane.b32.xlu0 %v482, 64
  %v485 = vpop.permute.xlu0 %484
  %s487 = scalar_lea.vmem %s4, 8
  %488 = vst.msk [vmem:[%s487] sm:$0xff] %vm370, %v485
  %s489 = scalar_lea.vmem %s4, 48
  %490 = vst.msk [vmem:[%s489] sm:$0xff] %vm373, %v485
  %s491 = scalar_lea.vmem [#allocation2], 32
  %v492 = vld [vmem:[%s491] sm:$0xff]
  %v493 = vld [vmem:[%s491 + $0x8] sm:$0xff]
  %s494 = scalar_lea.vmem [#allocation2], 80
  %v495 = vld [vmem:[%s494] sm:$0xff]
  %v496 = vld [vmem:[%s494 + $0x8] sm:$0xff]
  %v497 = vsel %vm250, %v492, %v495
  %v498 = vsel %vm251, %v493, %v496
  %v499 = vsel %vm53, %v485, 0
  %501 = vmatprep.subr.mxu0 0.0
  %502 = vmatpush1.msra.mxu0 0.0
  %503 = vmatprep.subr.mxu0 0.0
  %504 = vmatpush1.msra.mxu0 0.0
  %505 = vmatprep.subr.mxu0 0.0
  %506 = vmatpush1.msra.mxu0 0.0
  %507 = vmatprep.subr.mxu0 0.0
  %508 = vmatpush1.msra.mxu0 0.0
  %509 = vmatprep.subr.mxu0 0.0
  %510 = vmatpush1.msra.mxu0 0.0
  %511 = vmatprep.subr.mxu0 0.0
  %512 = vmatpush1.msra.mxu0 0.0
  %513 = vmatprep.subr.mxu0 0.0
  %514 = vmatpush1.msra.mxu0 0.0
  %515 = vmatprep.subr.mxu0 0.0
  %516 = vmatpush1.msra.mxu0 0.0
  %517 = vmatprep.subr.mxu0 %v222
  %518 = vmatpush1.msra.mxu0 %v221
  %519 = vmatprep.subr.mxu0 %v220
  %520 = vmatpush1.msra.mxu0 %v219
  %521 = vmatprep.subr.mxu0 %v218
  %522 = vmatpush1.msra.mxu0 %v217
  %523 = vmatprep.subr.mxu0 %v216
  %524 = vmatpush1.msra.mxu0 %v215
  %525 = vmatprep.subr.mxu0 %v214
  %526 = vmatpush1.msra.mxu0 %v213
  %527 = vmatprep.subr.mxu0 %v212
  %528 = vmatpush1.msra.mxu0 %v211
  %529 = vmatprep.subr.mxu0 %v210
  %530 = vmatpush1.msra.mxu0 %v209
  %531 = vmatprep.subr.mxu0 %v208
  %532 = vmatpush1.msra.mxu0 %v207
  %533 = vmatprep.subr.mxu0 0.0
  %534 = vmatpush2.msra.mxu0 0.0
  %535 = vmatprep.subr.mxu0 0.0
  %536 = vmatpush2.msra.mxu0 0.0
  %537 = vmatprep.subr.mxu0 0.0
  %538 = vmatpush2.msra.mxu0 0.0
  %539 = vmatprep.subr.mxu0 0.0
  %540 = vmatpush2.msra.mxu0 0.0
  %541 = vmatprep.subr.mxu0 0.0
  %542 = vmatpush2.msra.mxu0 0.0
  %543 = vmatprep.subr.mxu0 0.0
  %544 = vmatpush2.msra.mxu0 0.0
  %545 = vmatprep.subr.mxu0 0.0
  %546 = vmatpush2.msra.mxu0 0.0
  %547 = vmatprep.subr.mxu0 0.0
  %548 = vmatpush2.msra.mxu0 0.0
  %549 = vmatprep.subr.mxu0 0.0
  %550 = vmatpush2.msra.mxu0 0.0
  %551 = vmatprep.subr.mxu0 0.0
  %552 = vmatpush2.msra.mxu0 0.0
  %553 = vmatprep.subr.mxu0 0.0
  %554 = vmatpush2.msra.mxu0 0.0
  %555 = vmatprep.subr.mxu0 0.0
  %556 = vmatpush2.msra.mxu0 0.0
  %557 = vmatprep.subr.mxu0 0.0
  %558 = vmatpush2.msra.mxu0 0.0
  %559 = vmatprep.subr.mxu0 0.0
  %560 = vmatpush2.msra.mxu0 0.0
  %561 = vmatprep.subr.mxu0 0.0
  %562 = vmatpush2.msra.mxu0 0.0
  %563 = vmatprep.subr.mxu0 0.0
  %564 = vmatpush2.msra.mxu0 0.0
  %565 = vmatprep.mubr.f32.mxu0 0.0
  %566 = vmatmul.mubr.f32.gmra.mxu0 %v499
  %v567 = vpop.f32.mrf.mxu0
  %v568 = vadd.f32 0.0, %v567
  %v569 = vpop.f32.mrf.mxu0
  %v570 = vadd.f32 0.0, %v569
  %571 = vdwg.mxu0
  %v572 = vadd.f32 %v497, %v568
  %v573 = vadd.f32 %v498, %v570
  %v574 = vtanh.pop %v572
  %v575 = vtanh.pop %v573
  %v576 = vxor.u32 %v572, 2147483648
  %v577 = vxor.u32 %v573, 2147483648
  %v578 = vmul.f32 %v576, 1.442695
  %v579 = vpow.pop %v578
  %v580 = vmul.f32 %v577, 1.442695
  %v581 = vpow.pop %v580
  %v582 = vadd.f32 %v579, 1.0
  %v583 = vadd.f32 %v581, 1.0
  %v584 = vrcp.pop %v582
  %v585 = vmul.f32 1.0, %v584
  %v586 = vrcp.pop %v583
  %v587 = vmul.f32 1.0, %v586
  %v588 = vsel %vm256, %v574, %v585
  %v589 = vsel %vm257, %v575, %v587
  %v590 = vmul.f32 %v588, %v480
  %v591 = vmul.f32 %v588, %v589
  %593 = vrot.lane.b32.xlu0 %v591, 64
  %v594 = vpop.permute.xlu0 %593
  %v596 = vadd.f32 %v590, %v594
  %v597 = vtanh.pop %v596
  %v598 = vmul.f32 %v589, %v597
  %600 = vrot.lane.b32.xlu0 %v598, 64
  %v601 = vpop.permute.xlu0 %600
  %s603 = scalar_lea.vmem %s4, 16
  %604 = vst.msk [vmem:[%s603] sm:$0xff] %vm370, %v601
  %s605 = scalar_lea.vmem %s4, 40
  %606 = vst.msk [vmem:[%s605] sm:$0xff] %vm373, %v601
  %s607 = scalar_lea.vmem [#allocation2], 48
  %v608 = vld [vmem:[%s607] sm:$0xff]
  %v609 = vld [vmem:[%s607 + $0x8] sm:$0xff]
  %s610 = scalar_lea.vmem [#allocation2], 64
  %v611 = vld [vmem:[%s610] sm:$0xff]
  %v612 = vld [vmem:[%s610 + $0x8] sm:$0xff]
  %v613 = vsel %vm250, %v608, %v611
  %v614 = vsel %vm251, %v609, %v612
  %v615 = vsel %vm53, %v601, 0
  %617 = vmatprep.subr.mxu0 0.0
  %618 = vmatpush1.msra.mxu0 0.0
  %619 = vmatprep.subr.mxu0 0.0
  %620 = vmatpush1.msra.mxu0 0.0
  %621 = vmatprep.subr.mxu0 0.0
  %622 = vmatpush1.msra.mxu0 0.0
  %623 = vmatprep.subr.mxu0 0.0
  %624 = vmatpush1.msra.mxu0 0.0
  %625 = vmatprep.subr.mxu0 0.0
  %626 = vmatpush1.msra.mxu0 0.0
  %627 = vmatprep.subr.mxu0 0.0
  %628 = vmatpush1.msra.mxu0 0.0
  %629 = vmatprep.subr.mxu0 0.0
  %630 = vmatpush1.msra.mxu0 0.0
  %631 = vmatprep.subr.mxu0 0.0
  %632 = vmatpush1.msra.mxu0 0.0
  %633 = vmatprep.subr.mxu0 %v222
  %634 = vmatpush1.msra.mxu0 %v221
  %635 = vmatprep.subr.mxu0 %v220
  %636 = vmatpush1.msra.mxu0 %v219
  %637 = vmatprep.subr.mxu0 %v218
  %638 = vmatpush1.msra.mxu0 %v217
  %639 = vmatprep.subr.mxu0 %v216
  %640 = vmatpush1.msra.mxu0 %v215
  %641 = vmatprep.subr.mxu0 %v214
  %642 = vmatpush1.msra.mxu0 %v213
  %643 = vmatprep.subr.mxu0 %v212
  %644 = vmatpush1.msra.mxu0 %v211
  %645 = vmatprep.subr.mxu0 %v210
  %646 = vmatpush1.msra.mxu0 %v209
  %647 = vmatprep.subr.mxu0 %v208
  %648 = vmatpush1.msra.mxu0 %v207
  %649 = vmatprep.subr.mxu0 0.0
  %650 = vmatpush2.msra.mxu0 0.0
  %651 = vmatprep.subr.mxu0 0.0
  %652 = vmatpush2.msra.mxu0 0.0
  %653 = vmatprep.subr.mxu0 0.0
  %654 = vmatpush2.msra.mxu0 0.0
  %655 = vmatprep.subr.mxu0 0.0
  %656 = vmatpush2.msra.mxu0 0.0
  %657 = vmatprep.subr.mxu0 0.0
  %658 = vmatpush2.msra.mxu0 0.0
  %659 = vmatprep.subr.mxu0 0.0
  %660 = vmatpush2.msra.mxu0 0.0
  %661 = vmatprep.subr.mxu0 0.0
  %662 = vmatpush2.msra.mxu0 0.0
  %663 = vmatprep.subr.mxu0 0.0
  %664 = vmatpush2.msra.mxu0 0.0
  %665 = vmatprep.subr.mxu0 0.0
  %666 = vmatpush2.msra.mxu0 0.0
  %667 = vmatprep.subr.mxu0 0.0
  %668 = vmatpush2.msra.mxu0 0.0
  %669 = vmatprep.subr.mxu0 0.0
  %670 = vmatpush2.msra.mxu0 0.0
  %671 = vmatprep.subr.mxu0 0.0
  %672 = vmatpush2.msra.mxu0 0.0
  %673 = vmatprep.subr.mxu0 0.0
  %674 = vmatpush2.msra.mxu0 0.0
  %675 = vmatprep.subr.mxu0 0.0
  %676 = vmatpush2.msra.mxu0 0.0
  %677 = vmatprep.subr.mxu0 0.0
  %678 = vmatpush2.msra.mxu0 0.0
  %679 = vmatprep.subr.mxu0 0.0
  %680 = vmatpush2.msra.mxu0 0.0
  %681 = vmatprep.mubr.f32.mxu0 0.0
  %682 = vmatmul.mubr.f32.gmra.mxu0 %v615
  %v683 = vpop.f32.mrf.mxu0
  %v684 = vadd.f32 0.0, %v683
  %v685 = vpop.f32.mrf.mxu0
  %v686 = vadd.f32 0.0, %v685
  %687 = vdwg.mxu0
  %v688 = vadd.f32 %v613, %v684
  %v689 = vadd.f32 %v614, %v686
  %v690 = vtanh.pop %v688
  %v691 = vtanh.pop %v689
  %v692 = vxor.u32 %v688, 2147483648
  %v693 = vxor.u32 %v689, 2147483648
  %v694 = vmul.f32 %v692, 1.442695
  %v695 = vpow.pop %v694
  %v696 = vmul.f32 %v693, 1.442695
  %v697 = vpow.pop %v696
  %v698 = vadd.f32 %v695, 1.0
  %v699 = vadd.f32 %v697, 1.0
  %v700 = vrcp.pop %v698
  %v701 = vmul.f32 1.0, %v700
  %v702 = vrcp.pop %v699
  %v703 = vmul.f32 1.0, %v702
  %v704 = vsel %vm256, %v690, %v701
  %v705 = vsel %vm257, %v691, %v703
  %v706 = vmul.f32 %v704, %v596
  %v707 = vmul.f32 %v704, %v705
  %709 = vrot.lane.b32.xlu0 %v707, 64
  %v710 = vpop.permute.xlu0 %709
  %v712 = vadd.f32 %v706, %v710
  %v713 = vtanh.pop %v712
  %v714 = vmul.f32 %v705, %v713
  %716 = vrot.lane.b32.xlu0 %v714, 64
  %v717 = vpop.permute.xlu0 %716
  %s719 = scalar_lea.vmem %s4, 24
  %720 = vst.msk [vmem:[%s719] sm:$0xff] %vm370, %v717
  %s721 = scalar_lea.vmem %s4, 32
  %722 = vst.msk [vmem:[%s721] sm:$0xff] %vm373, %v717
  %v723 = vld [vmem:[%s610] sm:$0xff]
  %v724 = vld [vmem:[%s610 + $0x8] sm:$0xff]
  %v725 = vld [vmem:[%s607] sm:$0xff]
  %v726 = vld [vmem:[%s607 + $0x8] sm:$0xff]
  %v727 = vsel %vm250, %v723, %v725
  %v728 = vsel %vm251, %v724, %v726
  %v729 = vsel %vm53, %v717, 0
  %731 = vmatprep.subr.mxu0 0.0
  %732 = vmatpush1.msra.mxu0 0.0
  %733 = vmatprep.subr.mxu0 0.0
  %734 = vmatpush1.msra.mxu0 0.0
  %735 = vmatprep.subr.mxu0 0.0
  %736 = vmatpush1.msra.mxu0 0.0
  %737 = vmatprep.subr.mxu0 0.0
  %738 = vmatpush1.msra.mxu0 0.0
  %739 = vmatprep.subr.mxu0 0.0
  %740 = vmatpush1.msra.mxu0 0.0
  %741 = vmatprep.subr.mxu0 0.0
  %742 = vmatpush1.msra.mxu0 0.0
  %743 = vmatprep.subr.mxu0 0.0
  %744 = vmatpush1.msra.mxu0 0.0
  %745 = vmatprep.subr.mxu0 0.0
  %746 = vmatpush1.msra.mxu0 0.0
  %747 = vmatprep.subr.mxu0 %v222
  %748 = vmatpush1.msra.mxu0 %v221
  %749 = vmatprep.subr.mxu0 %v220
  %750 = vmatpush1.msra.mxu0 %v219
  %751 = vmatprep.subr.mxu0 %v218
  %752 = vmatpush1.msra.mxu0 %v217
  %753 = vmatprep.subr.mxu0 %v216
  %754 = vmatpush1.msra.mxu0 %v215
  %755 = vmatprep.subr.mxu0 %v214
  %756 = vmatpush1.msra.mxu0 %v213
  %757 = vmatprep.subr.mxu0 %v212
  %758 = vmatpush1.msra.mxu0 %v211
  %759 = vmatprep.subr.mxu0 %v210
  %760 = vmatpush1.msra.mxu0 %v209
  %761 = vmatprep.subr.mxu0 %v208
  %762 = vmatpush1.msra.mxu0 %v207
  %763 = vmatprep.subr.mxu0 0.0
  %764 = vmatpush2.msra.mxu0 0.0
  %765 = vmatprep.subr.mxu0 0.0
  %766 = vmatpush2.msra.mxu0 0.0
  %767 = vmatprep.subr.mxu0 0.0
  %768 = vmatpush2.msra.mxu0 0.0
  %769 = vmatprep.subr.mxu0 0.0
  %770 = vmatpush2.msra.mxu0 0.0
  %771 = vmatprep.subr.mxu0 0.0
  %772 = vmatpush2.msra.mxu0 0.0
  %773 = vmatprep.subr.mxu0 0.0
  %774 = vmatpush2.msra.mxu0 0.0
  %775 = vmatprep.subr.mxu0 0.0
  %776 = vmatpush2.msra.mxu0 0.0
  %777 = vmatprep.subr.mxu0 0.0
  %778 = vmatpush2.msra.mxu0 0.0
  %779 = vmatprep.subr.mxu0 0.0
  %780 = vmatpush2.msra.mxu0 0.0
  %781 = vmatprep.subr.mxu0 0.0
  %782 = vmatpush2.msra.mxu0 0.0
  %783 = vmatprep.subr.mxu0 0.0
  %784 = vmatpush2.msra.mxu0 0.0
  %785 = vmatprep.subr.mxu0 0.0
  %786 = vmatpush2.msra.mxu0 0.0
  %787 = vmatprep.subr.mxu0 0.0
  %788 = vmatpush2.msra.mxu0 0.0
  %789 = vmatprep.subr.mxu0 0.0
  %790 = vmatpush2.msra.mxu0 0.0
  %791 = vmatprep.subr.mxu0 0.0
  %792 = vmatpush2.msra.mxu0 0.0
  %793 = vmatprep.subr.mxu0 0.0
  %794 = vmatpush2.msra.mxu0 0.0
  %795 = vmatprep.mubr.f32.mxu0 0.0
  %796 = vmatmul.mubr.f32.gmra.mxu0 %v729
  %v797 = vpop.f32.mrf.mxu0
  %v798 = vadd.f32 0.0, %v797
  %v799 = vpop.f32.mrf.mxu0
  %v800 = vadd.f32 0.0, %v799
  %801 = vdwg.mxu0
  %v802 = vadd.f32 %v727, %v798
  %v803 = vadd.f32 %v728, %v800
  %v804 = vtanh.pop %v802
  %v805 = vtanh.pop %v803
  %v806 = vxor.u32 %v802, 2147483648
  %v807 = vxor.u32 %v803, 2147483648
  %v808 = vmul.f32 %v806, 1.442695
  %v809 = vpow.pop %v808
  %v810 = vmul.f32 %v807, 1.442695
  %v811 = vpow.pop %v810
  %v812 = vadd.f32 %v809, 1.0
  %v813 = vadd.f32 %v811, 1.0
  %v814 = vrcp.pop %v812
  %v815 = vmul.f32 1.0, %v814
  %v816 = vrcp.pop %v813
  %v817 = vmul.f32 1.0, %v816
  %v818 = vsel %vm256, %v804, %v815
  %v819 = vsel %vm257, %v805, %v817
  %v820 = vmul.f32 %v818, %v712
  %v821 = vmul.f32 %v818, %v819
  %823 = vrot.lane.b32.xlu0 %v821, 64
  %v824 = vpop.permute.xlu0 %823
  %v826 = vadd.f32 %v820, %v824
  %v827 = vtanh.pop %v826
  %v828 = vmul.f32 %v819, %v827
  %830 = vrot.lane.b32.xlu0 %v828, 64
  %v831 = vpop.permute.xlu0 %830
  %833 = vst.msk [vmem:[%s721] sm:$0xff] %vm370, %v831
  %834 = vst.msk [vmem:[%s719] sm:$0xff] %vm373, %v831
  %v835 = vld [vmem:[%s494] sm:$0xff]
  %v836 = vld [vmem:[%s494 + $0x8] sm:$0xff]
  %v837 = vld [vmem:[%s491] sm:$0xff]
  %v838 = vld [vmem:[%s491 + $0x8] sm:$0xff]
  %v839 = vsel %vm250, %v835, %v837
  %v840 = vsel %vm251, %v836, %v838
  %v841 = vsel %vm53, %v831, 0
  %843 = vmatprep.subr.mxu0 0.0
  %844 = vmatpush1.msra.mxu0 0.0
  %845 = vmatprep.subr.mxu0 0.0
  %846 = vmatpush1.msra.mxu0 0.0
  %847 = vmatprep.subr.mxu0 0.0
  %848 = vmatpush1.msra.mxu0 0.0
  %849 = vmatprep.subr.mxu0 0.0
  %850 = vmatpush1.msra.mxu0 0.0
  %851 = vmatprep.subr.mxu0 0.0
  %852 = vmatpush1.msra.mxu0 0.0
  %853 = vmatprep.subr.mxu0 0.0
  %854 = vmatpush1.msra.mxu0 0.0
  %855 = vmatprep.subr.mxu0 0.0
  %856 = vmatpush1.msra.mxu0 0.0
  %857 = vmatprep.subr.mxu0 0.0
  %858 = vmatpush1.msra.mxu0 0.0
  %859 = vmatprep.subr.mxu0 %v222
  %860 = vmatpush1.msra.mxu0 %v221
  %861 = vmatprep.subr.mxu0 %v220
  %862 = vmatpush1.msra.mxu0 %v219
  %863 = vmatprep.subr.mxu0 %v218
  %864 = vmatpush1.msra.mxu0 %v217
  %865 = vmatprep.subr.mxu0 %v216
  %866 = vmatpush1.msra.mxu0 %v215
  %867 = vmatprep.subr.mxu0 %v214
  %868 = vmatpush1.msra.mxu0 %v213
  %869 = vmatprep.subr.mxu0 %v212
  %870 = vmatpush1.msra.mxu0 %v211
  %871 = vmatprep.subr.mxu0 %v210
  %872 = vmatpush1.msra.mxu0 %v209
  %873 = vmatprep.subr.mxu0 %v208
  %874 = vmatpush1.msra.mxu0 %v207
  %875 = vmatprep.subr.mxu0 0.0
  %876 = vmatpush2.msra.mxu0 0.0
  %877 = vmatprep.subr.mxu0 0.0
  %878 = vmatpush2.msra.mxu0 0.0
  %879 = vmatprep.subr.mxu0 0.0
  %880 = vmatpush2.msra.mxu0 0.0
  %881 = vmatprep.subr.mxu0 0.0
  %882 = vmatpush2.msra.mxu0 0.0
  %883 = vmatprep.subr.mxu0 0.0
  %884 = vmatpush2.msra.mxu0 0.0
  %885 = vmatprep.subr.mxu0 0.0
  %886 = vmatpush2.msra.mxu0 0.0
  %887 = vmatprep.subr.mxu0 0.0
  %888 = vmatpush2.msra.mxu0 0.0
  %889 = vmatprep.subr.mxu0 0.0
  %890 = vmatpush2.msra.mxu0 0.0
  %891 = vmatprep.subr.mxu0 0.0
  %892 = vmatpush2.msra.mxu0 0.0
  %893 = vmatprep.subr.mxu0 0.0
  %894 = vmatpush2.msra.mxu0 0.0
  %895 = vmatprep.subr.mxu0 0.0
  %896 = vmatpush2.msra.mxu0 0.0
  %897 = vmatprep.subr.mxu0 0.0
  %898 = vmatpush2.msra.mxu0 0.0
  %899 = vmatprep.subr.mxu0 0.0
  %900 = vmatpush2.msra.mxu0 0.0
  %901 = vmatprep.subr.mxu0 0.0
  %902 = vmatpush2.msra.mxu0 0.0
  %903 = vmatprep.subr.mxu0 0.0
  %904 = vmatpush2.msra.mxu0 0.0
  %905 = vmatprep.subr.mxu0 0.0
  %906 = vmatpush2.msra.mxu0 0.0
  %907 = vmatprep.mubr.f32.mxu0 0.0
  %908 = vmatmul.mubr.f32.gmra.mxu0 %v841
  %v909 = vpop.f32.mrf.mxu0
  %v910 = vadd.f32 0.0, %v909
  %v911 = vpop.f32.mrf.mxu0
  %v912 = vadd.f32 0.0, %v911
  %913 = vdwg.mxu0
  %v914 = vadd.f32 %v839, %v910
  %v915 = vadd.f32 %v840, %v912
  %v916 = vtanh.pop %v914
  %v917 = vtanh.pop %v915
  %v918 = vxor.u32 %v914, 2147483648
  %v919 = vxor.u32 %v915, 2147483648
  %v920 = vmul.f32 %v918, 1.442695
  %v921 = vpow.pop %v920
  %v922 = vmul.f32 %v919, 1.442695
  %v923 = vpow.pop %v922
  %v924 = vadd.f32 %v921, 1.0
  %v925 = vadd.f32 %v923, 1.0
  %v926 = vrcp.pop %v924
  %v927 = vmul.f32 1.0, %v926
  %v928 = vrcp.pop %v925
  %v929 = vmul.f32 1.0, %v928
  %v930 = vsel %vm256, %v916, %v927
  %v931 = vsel %vm257, %v917, %v929
  %v932 = vmul.f32 %v930, %v826
  %v933 = vmul.f32 %v930, %v931
  %935 = vrot.lane.b32.xlu0 %v933, 64
  %v936 = vpop.permute.xlu0 %935
  %v938 = vadd.f32 %v932, %v936
  %v939 = vtanh.pop %v938
  %v940 = vmul.f32 %v931, %v939
  %942 = vrot.lane.b32.xlu0 %v940, 64
  %v943 = vpop.permute.xlu0 %942
  %945 = vst.msk [vmem:[%s605] sm:$0xff] %vm370, %v943
  %946 = vst.msk [vmem:[%s603] sm:$0xff] %vm373, %v943
  %v947 = vld [vmem:[%s378] sm:$0xff]
  %v948 = vld [vmem:[%s378 + $0x8] sm:$0xff]
  %v949 = vld [vmem:[%s375] sm:$0xff]
  %v950 = vld [vmem:[%s375 + $0x8] sm:$0xff]
  %v951 = vsel %vm250, %v947, %v949
  %v952 = vsel %vm251, %v948, %v950
  %v953 = vsel %vm53, %v943, 0
  %955 = vmatprep.subr.mxu0 0.0
  %956 = vmatpush1.msra.mxu0 0.0
  %957 = vmatprep.subr.mxu0 0.0
  %958 = vmatpush1.msra.mxu0 0.0
  %959 = vmatprep.subr.mxu0 0.0
  %960 = vmatpush1.msra.mxu0 0.0
  %961 = vmatprep.subr.mxu0 0.0
  %962 = vmatpush1.msra.mxu0 0.0
  %963 = vmatprep.subr.mxu0 0.0
  %964 = vmatpush1.msra.mxu0 0.0
  %965 = vmatprep.subr.mxu0 0.0
  %966 = vmatpush1.msra.mxu0 0.0
  %967 = vmatprep.subr.mxu0 0.0
  %968 = vmatpush1.msra.mxu0 0.0
  %969 = vmatprep.subr.mxu0 0.0
  %970 = vmatpush1.msra.mxu0 0.0
  %971 = vmatprep.subr.mxu0 %v222
  %972 = vmatpush1.msra.mxu0 %v221
  %973 = vmatprep.subr.mxu0 %v220
  %974 = vmatpush1.msra.mxu0 %v219
  %975 = vmatprep.subr.mxu0 %v218
  %976 = vmatpush1.msra.mxu0 %v217
  %977 = vmatprep.subr.mxu0 %v216
  %978 = vmatpush1.msra.mxu0 %v215
  %979 = vmatprep.subr.mxu0 %v214
  %980 = vmatpush1.msra.mxu0 %v213
  %981 = vmatprep.subr.mxu0 %v212
  %982 = vmatpush1.msra.mxu0 %v211
  %983 = vmatprep.subr.mxu0 %v210
  %984 = vmatpush1.msra.mxu0 %v209
  %985 = vmatprep.subr.mxu0 %v208
  %986 = vmatpush1.msra.mxu0 %v207
  %987 = vmatprep.subr.mxu0 0.0
  %988 = vmatpush2.msra.mxu0 0.0
  %989 = vmatprep.subr.mxu0 0.0
  %990 = vmatpush2.msra.mxu0 0.0
  %991 = vmatprep.subr.mxu0 0.0
  %992 = vmatpush2.msra.mxu0 0.0
  %993 = vmatprep.subr.mxu0 0.0
  %994 = vmatpush2.msra.mxu0 0.0
  %995 = vmatprep.subr.mxu0 0.0
  %996 = vmatpush2.msra.mxu0 0.0
  %997 = vmatprep.subr.mxu0 0.0
  %998 = vmatpush2.msra.mxu0 0.0
  %999 = vmatprep.subr.mxu0 0.0
  %1000 = vmatpush2.msra.mxu0 0.0
  %1001 = vmatprep.subr.mxu0 0.0
  %1002 = vmatpush2.msra.mxu0 0.0
  %1003 = vmatprep.subr.mxu0 0.0
  %1004 = vmatpush2.msra.mxu0 0.0
  %1005 = vmatprep.subr.mxu0 0.0
  %1006 = vmatpush2.msra.mxu0 0.0
  %1007 = vmatprep.subr.mxu0 0.0
  %1008 = vmatpush2.msra.mxu0 0.0
  %1009 = vmatprep.subr.mxu0 0.0
  %1010 = vmatpush2.msra.mxu0 0.0
  %1011 = vmatprep.subr.mxu0 0.0
  %1012 = vmatpush2.msra.mxu0 0.0
  %1013 = vmatprep.subr.mxu0 0.0
  %1014 = vmatpush2.msra.mxu0 0.0
  %1015 = vmatprep.subr.mxu0 0.0
  %1016 = vmatpush2.msra.mxu0 0.0
  %1017 = vmatprep.subr.mxu0 0.0
  %1018 = vmatpush2.msra.mxu0 0.0
  %1019 = vmatprep.mubr.f32.mxu0 0.0
  %1020 = vmatmul.mubr.f32.gmra.mxu0 %v953
  %v1021 = vpop.f32.mrf.mxu0
  %v1022 = vadd.f32 0.0, %v1021
  %v1023 = vpop.f32.mrf.mxu0
  %v1024 = vadd.f32 0.0, %v1023
  %1025 = vdwg.mxu0
  %v1026 = vadd.f32 %v951, %v1022
  %v1027 = vadd.f32 %v952, %v1024
  %v1028 = vtanh.pop %v1026
  %v1029 = vtanh.pop %v1027
  %v1030 = vxor.u32 %v1026, 2147483648
  %v1031 = vxor.u32 %v1027, 2147483648
  %v1032 = vmul.f32 %v1030, 1.442695
  %v1033 = vpow.pop %v1032
  %v1034 = vmul.f32 %v1031, 1.442695
  %v1035 = vpow.pop %v1034
  %v1036 = vadd.f32 %v1033, 1.0
  %v1037 = vadd.f32 %v1035, 1.0
  %v1038 = vrcp.pop %v1036
  %v1039 = vmul.f32 1.0, %v1038
  %v1040 = vrcp.pop %v1037
  %v1041 = vmul.f32 1.0, %v1040
  %v1042 = vsel %vm256, %v1028, %v1039
  %v1043 = vsel %vm257, %v1029, %v1041
  %v1044 = vmul.f32 %v1042, %v938
  %v1045 = vmul.f32 %v1042, %v1043
  %1047 = vrot.lane.b32.xlu0 %v1045, 64
  %v1048 = vpop.permute.xlu0 %1047
  %v1050 = vadd.f32 %v1044, %v1048
  %v1051 = vtanh.pop %v1050
  %v1052 = vmul.f32 %v1043, %v1051
  %1054 = vrot.lane.b32.xlu0 %v1052, 64
  %v1055 = vpop.permute.xlu0 %1054
  %1057 = vst.msk [vmem:[%s489] sm:$0xff] %vm370, %v1055
  %1058 = vst.msk [vmem:[%s487] sm:$0xff] %vm373, %v1055
  %v1059 = vld [vmem:[%s260] sm:$0xff]
  %v1060 = vld [vmem:[%s260 + $0x8] sm:$0xff]
  %v1061 = vld [vmem:[#allocation2] sm:$0xff]
  %v1062 = vld [vmem:[#allocation2 + $0x8] sm:$0xff]
  %v1063 = vsel %vm250, %v1059, %v1061
  %v1064 = vsel %vm251, %v1060, %v1062
  %v1065 = vsel %vm53, %v1055, 0
  %1067 = vmatprep.subr.mxu0 0.0
  %1068 = vmatpush1.msra.mxu0 0.0
  %1069 = vmatprep.subr.mxu0 0.0
  %1070 = vmatpush1.msra.mxu0 0.0
  %1071 = vmatprep.subr.mxu0 0.0
  %1072 = vmatpush1.msra.mxu0 0.0
  %1073 = vmatprep.subr.mxu0 0.0
  %1074 = vmatpush1.msra.mxu0 0.0
  %1075 = vmatprep.subr.mxu0 0.0
  %1076 = vmatpush1.msra.mxu0 0.0
  %1077 = vmatprep.subr.mxu0 0.0
  %1078 = vmatpush1.msra.mxu0 0.0
  %1079 = vmatprep.subr.mxu0 0.0
  %1080 = vmatpush1.msra.mxu0 0.0
  %1081 = vmatprep.subr.mxu0 0.0
  %1082 = vmatpush1.msra.mxu0 0.0
  %1083 = vmatprep.subr.mxu0 %v222
  %1084 = vmatpush1.msra.mxu0 %v221
  %1085 = vmatprep.subr.mxu0 %v220
  %1086 = vmatpush1.msra.mxu0 %v219
  %1087 = vmatprep.subr.mxu0 %v218
  %1088 = vmatpush1.msra.mxu0 %v217
  %1089 = vmatprep.subr.mxu0 %v216
  %1090 = vmatpush1.msra.mxu0 %v215
  %1091 = vmatprep.subr.mxu0 %v214
  %1092 = vmatpush1.msra.mxu0 %v213
  %1093 = vmatprep.subr.mxu0 %v212
  %1094 = vmatpush1.msra.mxu0 %v211
  %1095 = vmatprep.subr.mxu0 %v210
  %1096 = vmatpush1.msra.mxu0 %v209
  %1097 = vmatprep.subr.mxu0 %v208
  %1098 = vmatpush1.msra.mxu0 %v207
  %1099 = vmatprep.subr.mxu0 0.0
  %1100 = vmatpush2.msra.mxu0 0.0
  %1101 = vmatprep.subr.mxu0 0.0
  %1102 = vmatpush2.msra.mxu0 0.0
  %1103 = vmatprep.subr.mxu0 0.0
  %1104 = vmatpush2.msra.mxu0 0.0
  %1105 = vmatprep.subr.mxu0 0.0
  %1106 = vmatpush2.msra.mxu0 0.0
  %1107 = vmatprep.subr.mxu0 0.0
  %1108 = vmatpush2.msra.mxu0 0.0
  %1109 = vmatprep.subr.mxu0 0.0
  %1110 = vmatpush2.msra.mxu0 0.0
  %1111 = vmatprep.subr.mxu0 0.0
  %1112 = vmatpush2.msra.mxu0 0.0
  %1113 = vmatprep.subr.mxu0 0.0
  %1114 = vmatpush2.msra.mxu0 0.0
  %1115 = vmatprep.subr.mxu0 0.0
  %1116 = vmatpush2.msra.mxu0 0.0
  %1117 = vmatprep.subr.mxu0 0.0
  %1118 = vmatpush2.msra.mxu0 0.0
  %1119 = vmatprep.subr.mxu0 0.0
  %1120 = vmatpush2.msra.mxu0 0.0
  %1121 = vmatprep.subr.mxu0 0.0
  %1122 = vmatpush2.msra.mxu0 0.0
  %1123 = vmatprep.subr.mxu0 0.0
  %1124 = vmatpush2.msra.mxu0 0.0
  %1125 = vmatprep.subr.mxu0 0.0
  %1126 = vmatpush2.msra.mxu0 0.0
  %1127 = vmatprep.subr.mxu0 0.0
  %1128 = vmatpush2.msra.mxu0 0.0
  %1129 = vmatprep.subr.mxu0 0.0
  %1130 = vmatpush2.msra.mxu0 0.0
  %1131 = vmatprep.mubr.f32.mxu0 0.0
  %1132 = vmatmul.mubr.f32.gmra.mxu0 %v1065
  %v1133 = vpop.f32.mrf.mxu0
  %v1134 = vadd.f32 0.0, %v1133
  %v1135 = vpop.f32.mrf.mxu0
  %v1136 = vadd.f32 0.0, %v1135
  %1137 = vdwg.mxu0
  %v1138 = vadd.f32 %v1063, %v1134
  %v1139 = vadd.f32 %v1064, %v1136
  %v1140 = vtanh.pop %v1138
  %v1141 = vtanh.pop %v1139
  %v1142 = vxor.u32 %v1138, 2147483648
  %v1143 = vxor.u32 %v1139, 2147483648
  %v1144 = vmul.f32 %v1142, 1.442695
  %v1145 = vpow.pop %v1144
  %v1146 = vmul.f32 %v1143, 1.442695
  %v1147 = vpow.pop %v1146
  %v1148 = vadd.f32 %v1145, 1.0
  %v1149 = vadd.f32 %v1147, 1.0
  %v1150 = vrcp.pop %v1148
  %v1151 = vmul.f32 1.0, %v1150
  %v1152 = vrcp.pop %v1149
  %v1153 = vmul.f32 1.0, %v1152
  %v1154 = vsel %vm256, %v1140, %v1151
  %v1155 = vsel %vm257, %v1141, %v1153
  %v1156 = vmul.f32 %v1154, %v1050
  %v1157 = vmul.f32 %v1154, %v1155
  %1159 = vrot.lane.b32.xlu0 %v1157, 64
  %v1160 = vpop.permute.xlu0 %1159
  %v1162 = vadd.f32 %v1156, %v1160
  %v1163 = vtanh.pop %v1162
  %v1164 = vmul.f32 %v1155, %v1163
  %1166 = vrot.lane.b32.xlu0 %v1164, 64
  %v1167 = vpop.permute.xlu0 %1166
  %1169 = vst.msk [vmem:[%s372] sm:$0xff] %vm370, %v1167
  %1170 = vst.msk [vmem:[%s4] sm:$0xff] %vm373, %v1167
  // Predicated region
  $region18: #{encoder_forward.3} parent=0 // pred_check
    _
  $region19: #{encoder_forward.3} parent=0 // pred_check_branch
    %1172 = sbr.rel (0) target = $region21
  $region20: #{encoder_forward.3} parent=0 // pred_region
    _
  $region21: #{encoder_forward.3} parent=0 // pred_fallthru
    _
  // Predicated region
  $region22: #{encoder_forward.3} parent=0 // pred_check
    _
  $region23: #{encoder_forward.3} parent=0 // pred_check_branch
    %1174 = sbr.rel (0) target = $region25
  $region24: #{encoder_forward.3} parent=0 // pred_region
    _
  $region25: #{encoder_forward.3} parent=0 // pred_fallthru
    _

// kernel: encoder_forward.2
$region0: #{encoder_forward.2}
  #allocation0 [shape = 'u32[]', space=smem, size = 0x4, offset = 0x4, fixed_abs, tag = 'smem constant byte address 0x4 - core index']
  #allocation1 [shape = 'u32[144,128]{1,0:T(1,128)}', space=vmem, size = 0x12000, scoped, tag = 'internal scratch']
  #allocation2 [shape = 'f32[8,8,256]{2,1,0:T(8,128)}', space=vmem, size = 0x10000, scoped, tag = 'scratch operand']
  %s0 = inlined_call_operand.vmem [shape: f32[8,8,32], index: 0, kind: input, shape index: {}]
  %s1 = inlined_call_operand.vmem [shape: f32[32,256], index: 1, kind: input, shape index: {}]
  %s2 = inlined_call_operand.vmem [shape: f32[64,256], index: 2, kind: input, shape index: {}]
  %s3 = inlined_call_operand.vmem [shape: f32[1,256], index: 3, kind: input, shape index: {}]
  %s4 = inlined_call_operand.vmem [shape: f32[128,64], index: 4, kind: input, shape index: {}]
  %s5 = inlined_call_operand.vmem [shape: f32[1,64], index: 5, kind: input, shape index: {}]
  %s6 = inlined_call_operand.vmem [shape: f32[8,8,64], index: 6, kind: output, shape index: {0}]
  %s7 = inlined_call_operand.vmem [shape: f32[8,64], index: 7, kind: output, shape index: {1}]
  %8 = xla_tuple %s6, %s7
  %s9 = sld [smem:[#allocation0]]
  $region42: #{encoder_forward.2} parent=0
    _
  %s11 = ssub.s32 1, %s9
  %s12 = scalar_select 0, %s11, %s9
  // Predicated region
  $region2: #{encoder_forward.2} parent=0 // pred_check
    _
  $region3: #{encoder_forward.2} parent=0 // pred_check_branch
    %14 = sbr.rel (0) target = $region5
  $region4: #{encoder_forward.2} parent=0 // pred_region
    _
  $region5: #{encoder_forward.2} parent=0 // pred_fallthru
    _
  // Predicated region
  $region6: #{encoder_forward.2} parent=0 // pred_check
    _
  $region7: #{encoder_forward.2} parent=0 // pred_check_branch
    %16 = sbr.rel (0) target = $region9
  $region8: #{encoder_forward.2} parent=0 // pred_region
    _
  $region9: #{encoder_forward.2} parent=0 // pred_fallthru
    _
  // Predicated region
  $region10: #{encoder_forward.2} parent=0 // pred_check
    _
  $region11: #{encoder_forward.2} parent=0 // pred_check_branch
    %18 = sbr.rel (0) target = $region13
  $region12: #{encoder_forward.2} parent=0 // pred_region
    _
  $region13: #{encoder_forward.2} parent=0 // pred_fallthru
    _
  // Predicated region
  $region14: #{encoder_forward.2} parent=0 // pred_check
    _
  $region15: #{encoder_forward.2} parent=0 // pred_check_branch
    %20 = sbr.rel (0) target = $region17
  $region16: #{encoder_forward.2} parent=0 // pred_region
    _
  $region17: #{encoder_forward.2} parent=0 // pred_fallthru
    _
  // Predicated region
  $region18: #{encoder_forward.2} parent=0 // pred_check
    _
  $region19: #{encoder_forward.2} parent=0 // pred_check_branch
    %22 = sbr.rel (0) target = $region21
  $region20: #{encoder_forward.2} parent=0 // pred_region
    _
  $region21: #{encoder_forward.2} parent=0 // pred_fallthru
    _
  // Predicated region
  $region22: #{encoder_forward.2} parent=0 // pred_check
    _
  $region23: #{encoder_forward.2} parent=0 // pred_check_branch
    %24 = sbr.rel (0) target = $region25
  $region24: #{encoder_forward.2} parent=0 // pred_region
    _
  $region25: #{encoder_forward.2} parent=0 // pred_fallthru
    _
  %v25 = vld [vmem:[%s0] sm:$0xff]
  %v26 = vld [vmem:[%s0 + $0x8] sm:$0xff]
  %v27 = vld [vmem:[%s0 + $0x10] sm:$0xff]
  %v28 = vld [vmem:[%s0 + $0x18] sm:$0xff]
  %v29 = vld [vmem:[%s0 + $0x20] sm:$0xff]
  %v30 = vld [vmem:[%s0 + $0x28] sm:$0xff]
  %v31 = vld [vmem:[%s0 + $0x30] sm:$0xff]
  %v32 = vld [vmem:[%s0 + $0x38] sm:$0xff]
  %v33 = vld [vmem:[%s1] sm:$0xff]
  %v34 = vld [vmem:[%s1 + $0x8] sm:$0xff]
  %v35 = vld [vmem:[%s1 + $0x10] sm:$0xff]
  %v36 = vld [vmem:[%s1 + $0x18] sm:$0xff]
  %v37 = vld [vmem:[%s1 + $0x20] sm:$0xff]
  %v38 = vld [vmem:[%s1 + $0x28] sm:$0xff]
  %v39 = vld [vmem:[%s1 + $0x30] sm:$0xff]
  %v40 = vld [vmem:[%s1 + $0x38] sm:$0xff]
  %v41 = vld [vmem:[%s3] sm:$0x3]
  %v43 = vlaneseq
  %v44 = vshrl.u32 %v43, 7
  %v45 = vsub.s32 0, %v44
  %v46 = vrot.slane %v41, %v45
  %v47 = vlaneseq
  %v48 = vshrl.u32 %v47, 7
  %v49 = vsub.s32 1, %v48
  %v50 = vrot.slane %v41, %v49
  %vm53 = vcmask 261120
  %v55 = vsel %vm53, %v25, 0
  %v58 = vsel %vm53, %v26, 0
  %v61 = vsel %vm53, %v27, 0
  %v64 = vsel %vm53, %v28, 0
  %v67 = vsel %vm53, %v29, 0
  %v70 = vsel %vm53, %v30, 0
  %v73 = vsel %vm53, %v31, 0
  %v76 = vsel %vm53, %v32, 0
  %78 = vmatprep.subr.mxu0 0.0
  %79 = vmatpush1.msra.mxu0 0.0
  %80 = vmatprep.subr.mxu0 0.0
  %81 = vmatpush1.msra.mxu0 0.0
  %82 = vmatprep.subr.mxu0 0.0
  %83 = vmatpush1.msra.mxu0 0.0
  %84 = vmatprep.subr.mxu0 0.0
  %85 = vmatpush1.msra.mxu0 0.0
  %86 = vmatprep.subr.mxu0 0.0
  %87 = vmatpush1.msra.mxu0 0.0
  %88 = vmatprep.subr.mxu0 0.0
  %89 = vmatpush1.msra.mxu0 0.0
  %90 = vmatprep.subr.mxu0 0.0
  %91 = vmatpush1.msra.mxu0 0.0
  %92 = vmatprep.subr.mxu0 0.0
  %93 = vmatpush1.msra.mxu0 0.0
  %94 = vmatprep.subr.mxu0 0.0
  %95 = vmatpush1.msra.mxu0 0.0
  %96 = vmatprep.subr.mxu0 0.0
  %97 = vmatpush1.msra.mxu0 0.0
  %98 = vmatprep.subr.mxu0 0.0
  %99 = vmatpush1.msra.mxu0 0.0
  %100 = vmatprep.subr.mxu0 0.0
  %101 = vmatpush1.msra.mxu0 0.0
  %102 = vmatprep.subr.mxu0 %v40
  %103 = vmatpush1.msra.mxu0 %v39
  %104 = vmatprep.subr.mxu0 %v38
  %105 = vmatpush1.msra.mxu0 %v37
  %106 = vmatprep.subr.mxu0 %v36
  %107 = vmatpush1.msra.mxu0 %v35
  %108 = vmatprep.subr.mxu0 %v34
  %109 = vmatpush1.msra.mxu0 %v33
  %110 = vmatprep.subr.mxu0 0.0
  %111 = vmatpush2.msra.mxu0 0.0
  %112 = vmatprep.subr.mxu0 0.0
  %113 = vmatpush2.msra.mxu0 0.0
  %114 = vmatprep.subr.mxu0 0.0
  %115 = vmatpush2.msra.mxu0 0.0
  %116 = vmatprep.subr.mxu0 0.0
  %117 = vmatpush2.msra.mxu0 0.0
  %118 = vmatprep.subr.mxu0 0.0
  %119 = vmatpush2.msra.mxu0 0.0
  %120 = vmatprep.subr.mxu0 0.0
  %121 = vmatpush2.msra.mxu0 0.0
  %122 = vmatprep.subr.mxu0 0.0
  %123 = vmatpush2.msra.mxu0 0.0
  %124 = vmatprep.subr.mxu0 0.0
  %125 = vmatpush2.msra.mxu0 0.0
  %126 = vmatprep.subr.mxu0 0.0
  %127 = vmatpush2.msra.mxu0 0.0
  %128 = vmatprep.subr.mxu0 0.0
  %129 = vmatpush2.msra.mxu0 0.0
  %130 = vmatprep.subr.mxu0 0.0
  %131 = vmatpush2.msra.mxu0 0.0
  %132 = vmatprep.subr.mxu0 0.0
  %133 = vmatpush2.msra.mxu0 0.0
  %134 = vmatprep.subr.mxu0 0.0
  %135 = vmatpush2.msra.mxu0 0.0
  %136 = vmatprep.subr.mxu0 0.0
  %137 = vmatpush2.msra.mxu0 0.0
  %138 = vmatprep.subr.mxu0 0.0
  %139 = vmatpush2.msra.mxu0 0.0
  %140 = vmatprep.subr.mxu0 0.0
  %141 = vmatpush2.msra.mxu0 0.0
  %142 = vmatprep.mubr.f32.mxu0 0.0
  %143 = vmatmul.mubr.f32.gmra.mxu0 %v55
  %v144 = vpop.f32.mrf.mxu0
  %v145 = vadd.f32 %v46, %v144
  %v146 = vpop.f32.mrf.mxu0
  %v147 = vadd.f32 %v50, %v146
  %148 = vmatprep.mubr.f32.mxu0 0.0
  %149 = vmatmul.mubr.f32.gmra.mxu0 %v58
  %v150 = vpop.f32.mrf.mxu0
  %v151 = vadd.f32 %v46, %v150
  %v152 = vpop.f32.mrf.mxu0
  %v153 = vadd.f32 %v50, %v152
  %154 = vmatprep.mubr.f32.mxu0 0.0
  %155 = vmatmul.mubr.f32.gmra.mxu0 %v61
  %v156 = vpop.f32.mrf.mxu0
  %v157 = vadd.f32 %v46, %v156
  %v158 = vpop.f32.mrf.mxu0
  %v159 = vadd.f32 %v50, %v158
  %160 = vmatprep.mubr.f32.mxu0 0.0
  %161 = vmatmul.mubr.f32.gmra.mxu0 %v64
  %v162 = vpop.f32.mrf.mxu0
  %v163 = vadd.f32 %v46, %v162
  %v164 = vpop.f32.mrf.mxu0
  %v165 = vadd.f32 %v50, %v164
  %166 = vmatprep.mubr.f32.mxu0 0.0
  %167 = vmatmul.mubr.f32.gmra.mxu0 %v67
  %v168 = vpop.f32.mrf.mxu0
  %v169 = vadd.f32 %v46, %v168
  %v170 = vpop.f32.mrf.mxu0
  %v171 = vadd.f32 %v50, %v170
  %172 = vmatprep.mubr.f32.mxu0 0.0
  %173 = vmatmul.mubr.f32.gmra.mxu0 %v70
  %v174 = vpop.f32.mrf.mxu0
  %v175 = vadd.f32 %v46, %v174
  %v176 = vpop.f32.mrf.mxu0
  %v177 = vadd.f32 %v50, %v176
  %178 = vmatprep.mubr.f32.mxu0 0.0
  %179 = vmatmul.mubr.f32.gmra.mxu0 %v73
  %v180 = vpop.f32.mrf.mxu0
  %v181 = vadd.f32 %v46, %v180
  %v182 = vpop.f32.mrf.mxu0
  %v183 = vadd.f32 %v50, %v182
  %184 = vmatprep.mubr.f32.mxu0 0.0
  %185 = vmatmul.mubr.f32.gmra.mxu0 %v76
  %v186 = vpop.f32.mrf.mxu0
  %v187 = vadd.f32 %v46, %v186
  %v188 = vpop.f32.mrf.mxu0
  %v189 = vadd.f32 %v50, %v188
  %190 = vdwg.mxu0
  %191 = vst [vmem:[#allocation2] sm:$0xff] %v145
  %192 = vst [vmem:[#allocation2 + $0x8] sm:$0xff] %v147
  %193 = vst [vmem:[#allocation2 + $0x10] sm:$0xff] %v151
  %194 = vst [vmem:[#allocation2 + $0x18] sm:$0xff] %v153
  %195 = vst [vmem:[#allocation2 + $0x20] sm:$0xff] %v157
  %196 = vst [vmem:[#allocation2 + $0x28] sm:$0xff] %v159
  %197 = vst [vmem:[#allocation2 + $0x30] sm:$0xff] %v163
  %198 = vst [vmem:[#allocation2 + $0x38] sm:$0xff] %v165
  %199 = vst [vmem:[#allocation2 + $0x40] sm:$0xff] %v169
  %200 = vst [vmem:[#allocation2 + $0x48] sm:$0xff] %v171
  %201 = vst [vmem:[#allocation2 + $0x50] sm:$0xff] %v175
  %202 = vst [vmem:[#allocation2 + $0x58] sm:$0xff] %v177
  %203 = vst [vmem:[#allocation2 + $0x60] sm:$0xff] %v181
  %204 = vst [vmem:[#allocation2 + $0x68] sm:$0xff] %v183
  %205 = vst [vmem:[#allocation2 + $0x70] sm:$0xff] %v187
  %206 = vst [vmem:[#allocation2 + $0x78] sm:$0xff] %v189
  %v207 = vld [vmem:[%s2] sm:$0xff]
  %v208 = vld [vmem:[%s2 + $0x8] sm:$0xff]
  %v209 = vld [vmem:[%s2 + $0x10] sm:$0xff]
  %v210 = vld [vmem:[%s2 + $0x18] sm:$0xff]
  %v211 = vld [vmem:[%s2 + $0x20] sm:$0xff]
  %v212 = vld [vmem:[%s2 + $0x28] sm:$0xff]
  %v213 = vld [vmem:[%s2 + $0x30] sm:$0xff]
  %v214 = vld [vmem:[%s2 + $0x38] sm:$0xff]
  %v215 = vld [vmem:[%s2 + $0x40] sm:$0xff]
  %v216 = vld [vmem:[%s2 + $0x48] sm:$0xff]
  %v217 = vld [vmem:[%s2 + $0x50] sm:$0xff]
  %v218 = vld [vmem:[%s2 + $0x58] sm:$0xff]
  %v219 = vld [vmem:[%s2 + $0x60] sm:$0xff]
  %v220 = vld [vmem:[%s2 + $0x68] sm:$0xff]
  %v221 = vld [vmem:[%s2 + $0x70] sm:$0xff]
  %v222 = vld [vmem:[%s2 + $0x78] sm:$0xff]
  %v223 = vlaneseq
  %v224 = vand.u32 %v223, 127
  %v225 = vadd.s32 %v224, 128
  %vm226 = vcmp.lt.s32.totalorder %v224, 0
  %v227 = vsub.s32 0, %v224
  %v228 = vsel %vm226, %v227, %v224
  %v229 = vshrl.u32 %v228, 6
  %v230 = vand.u32 %v228, 63
  %v231 = vsub.s32 0, %v230
  %v232 = vsel %vm226, %v231, %v230
  %vm233 = vcmp.lt.s32.totalorder %v225, 0
  %v234 = vsub.s32 0, %v225
  %v235 = vsel %vm233, %v234, %v225
  %v236 = vshrl.u32 %v235, 6
  %v237 = vand.u32 %v235, 63
  %v238 = vsub.s32 0, %v237
  %v239 = vsel %vm233, %v238, %v237
  %vm240 = vcmp.ne.s32.totalorder %v232, 0
  %vm241 = vcmp.ne.s32.totalorder %v239, 0
  %vm242 = vcmp.lt.s32.totalorder %v232, 0
  %vm243 = vcmp.lt.s32.totalorder %v239, 0
  %vm244 = vmand %vm242, %vm240
  %vm245 = vmand %vm243, %vm241
  %v246 = vadd.s32 %v232, 64
  %v247 = vadd.s32 %v239, 64
  %v248 = vsel %vm244, %v246, %v232
  %v249 = vsel %vm245, %v247, %v239
  %vm250 = vcmp.lt.s32.totalorder %v248, 32
  %vm251 = vcmp.lt.s32.totalorder %v249, 32
  %vm252 = vcmp.ge.s32.totalorder %v224, 128
  %vm253 = vcmp.ge.s32.totalorder %v225, 128
  %vm254 = vcmp.lt.s32.totalorder %v224, 192
  %vm255 = vcmp.lt.s32.totalorder %v225, 192
  %vm256 = vmand %vm252, %vm254
  %vm257 = vmand %vm253, %vm255
  %v258 = vld [vmem:[#allocation2] sm:$0xff]
  %v259 = vld [vmem:[#allocation2 + $0x8] sm:$0xff]
  %s260 = scalar_lea.vmem [#allocation2], 112
  %v261 = vld [vmem:[%s260] sm:$0xff]
  %v262 = vld [vmem:[%s260 + $0x8] sm:$0xff]
  %v263 = vsel %vm250, %v258, %v261
  %v264 = vsel %vm251, %v259, %v262
  %vm265 = vcmask 523264
  %v267 = vsel %vm265, 0.0, 0
  %269 = vmatprep.subr.mxu0 0.0
  %270 = vmatpush1.msra.mxu0 0.0
  %271 = vmatprep.subr.mxu0 0.0
  %272 = vmatpush1.msra.mxu0 0.0
  %273 = vmatprep.subr.mxu0 0.0
  %274 = vmatpush1.msra.mxu0 0.0
  %275 = vmatprep.subr.mxu0 0.0
  %276 = vmatpush1.msra.mxu0 0.0
  %277 = vmatprep.subr.mxu0 0.0
  %278 = vmatpush1.msra.mxu0 0.0
  %279 = vmatprep.subr.mxu0 0.0
  %280 = vmatpush1.msra.mxu0 0.0
  %281 = vmatprep.subr.mxu0 0.0
  %282 = vmatpush1.msra.mxu0 0.0
  %283 = vmatprep.subr.mxu0 0.0
  %284 = vmatpush1.msra.mxu0 0.0
  %285 = vmatprep.subr.mxu0 %v222
  %286 = vmatpush1.msra.mxu0 %v221
  %287 = vmatprep.subr.mxu0 %v220
  %288 = vmatpush1.msra.mxu0 %v219
  %289 = vmatprep.subr.mxu0 %v218
  %290 = vmatpush1.msra.mxu0 %v217
  %291 = vmatprep.subr.mxu0 %v216
  %292 = vmatpush1.msra.mxu0 %v215
  %293 = vmatprep.subr.mxu0 %v214
  %294 = vmatpush1.msra.mxu0 %v213
  %295 = vmatprep.subr.mxu0 %v212
  %296 = vmatpush1.msra.mxu0 %v211
  %297 = vmatprep.subr.mxu0 %v210
  %298 = vmatpush1.msra.mxu0 %v209
  %299 = vmatprep.subr.mxu0 %v208
  %300 = vmatpush1.msra.mxu0 %v207
  %301 = vmatprep.subr.mxu0 0.0
  %302 = vmatpush2.msra.mxu0 0.0
  %303 = vmatprep.subr.mxu0 0.0
  %304 = vmatpush2.msra.mxu0 0.0
  %305 = vmatprep.subr.mxu0 0.0
  %306 = vmatpush2.msra.mxu0 0.0
  %307 = vmatprep.subr.mxu0 0.0
  %308 = vmatpush2.msra.mxu0 0.0
  %309 = vmatprep.subr.mxu0 0.0
  %310 = vmatpush2.msra.mxu0 0.0
  %311 = vmatprep.subr.mxu0 0.0
  %312 = vmatpush2.msra.mxu0 0.0
  %313 = vmatprep.subr.mxu0 0.0
  %314 = vmatpush2.msra.mxu0 0.0
  %315 = vmatprep.subr.mxu0 0.0
  %316 = vmatpush2.msra.mxu0 0.0
  %317 = vmatprep.subr.mxu0 0.0
  %318 = vmatpush2.msra.mxu0 0.0
  %319 = vmatprep.subr.mxu0 0.0
  %320 = vmatpush2.msra.mxu0 0.0
  %321 = vmatprep.subr.mxu0 0.0
  %322 = vmatpush2.msra.mxu0 0.0
  %323 = vmatprep.subr.mxu0 0.0
  %324 = vmatpush2.msra.mxu0 0.0
  %325 = vmatprep.subr.mxu0 0.0
  %326 = vmatpush2.msra.mxu0 0.0
  %327 = vmatprep.subr.mxu0 0.0
  %328 = vmatpush2.msra.mxu0 0.0
  %329 = vmatprep.subr.mxu0 0.0
  %330 = vmatpush2.msra.mxu0 0.0
  %331 = vmatprep.subr.mxu0 0.0
  %332 = vmatpush2.msra.mxu0 0.0
  %333 = vmatprep.mubr.f32.mxu0 0.0
  %334 = vmatmul.mubr.f32.gmra.mxu0 %v267
  %v335 = vpop.f32.mrf.mxu0
  %v336 = vadd.f32 0.0, %v335
  %v337 = vpop.f32.mrf.mxu0
  %v338 = vadd.f32 0.0, %v337
  %339 = vdwg.mxu0
  %v340 = vadd.f32 %v263, %v336
  %v341 = vadd.f32 %v264, %v338
  %v342 = vtanh.pop %v340
  %v343 = vtanh.pop %v341
  %v344 = vxor.u32 %v340, 2147483648
  %v345 = vxor.u32 %v341, 2147483648
  %v346 = vmul.f32 %v344, 1.442695
  %v347 = vpow.pop %v346
  %v348 = vmul.f32 %v345, 1.442695
  %v349 = vpow.pop %v348
  %v350 = vadd.f32 %v347, 1.0
  %v351 = vadd.f32 %v349, 1.0
  %v352 = vrcp.pop %v350
  %v353 = vmul.f32 1.0, %v352
  %v354 = vrcp.pop %v351
  %v355 = vmul.f32 1.0, %v354
  %v356 = vsel %vm256, %v342, %v353
  %v357 = vsel %vm257, %v343, %v355
  %v358 = vmul.f32 %v356, 0.0
  %v359 = vmul.f32 %v356, %v357
  %361 = vrot.lane.b32.xlu0 %v359, 64
  %v362 = vpop.permute.xlu0 %361
  %v364 = vadd.f32 %v358, %v362
  %v365 = vtanh.pop %v364
  %v366 = vmul.f32 %v357, %v365
  %368 = vrot.lane.b32.xlu0 %v366, 64
  %v369 = vpop.permute.xlu0 %368
  %371 = vst.msk [vmem:[%s6] sm:$0xff] %vm53, %v369
  %s372 = scalar_lea.vmem %s6, 56
  %vm373 = vcmask 523520
  %374 = vst.msk [vmem:[%s372] sm:$0xff] %vm373, %v369
  %s375 = scalar_lea.vmem [#allocation2], 16
  %v376 = vld [vmem:[%s375] sm:$0xff]
  %v377 = vld [vmem:[%s375 + $0x8] sm:$0xff]
  %s378 = scalar_lea.vmem [#allocation2], 96
  %v379 = vld [vmem:[%s378] sm:$0xff]
  %v380 = vld [vmem:[%s378 + $0x8] sm:$0xff]
  %v381 = vsel %vm250, %v376, %v379
  %v382 = vsel %vm251, %v377, %v380
  %v383 = vsel %vm265, %v369, 0
  %385 = vmatprep.subr.mxu0 0.0
  %386 = vmatpush1.msra.mxu0 0.0
  %387 = vmatprep.subr.mxu0 0.0
  %388 = vmatpush1.msra.mxu0 0.0
  %389 = vmatprep.subr.mxu0 0.0
  %390 = vmatpush1.msra.mxu0 0.0
  %391 = vmatprep.subr.mxu0 0.0
  %392 = vmatpush1.msra.mxu0 0.0
  %393 = vmatprep.subr.mxu0 0.0
  %394 = vmatpush1.msra.mxu0 0.0
  %395 = vmatprep.subr.mxu0 0.0
  %396 = vmatpush1.msra.mxu0 0.0
  %397 = vmatprep.subr.mxu0 0.0
  %398 = vmatpush1.msra.mxu0 0.0
  %399 = vmatprep.subr.mxu0 0.0
  %400 = vmatpush1.msra.mxu0 0.0
  %401 = vmatprep.subr.mxu0 %v222
  %402 = vmatpush1.msra.mxu0 %v221
  %403 = vmatprep.subr.mxu0 %v220
  %404 = vmatpush1.msra.mxu0 %v219
  %405 = vmatprep.subr.mxu0 %v218
  %406 = vmatpush1.msra.mxu0 %v217
  %407 = vmatprep.subr.mxu0 %v216
  %408 = vmatpush1.msra.mxu0 %v215
  %409 = vmatprep.subr.mxu0 %v214
  %410 = vmatpush1.msra.mxu0 %v213
  %411 = vmatprep.subr.mxu0 %v212
  %412 = vmatpush1.msra.mxu0 %v211
  %413 = vmatprep.subr.mxu0 %v210
  %414 = vmatpush1.msra.mxu0 %v209
  %415 = vmatprep.subr.mxu0 %v208
  %416 = vmatpush1.msra.mxu0 %v207
  %417 = vmatprep.subr.mxu0 0.0
  %418 = vmatpush2.msra.mxu0 0.0
  %419 = vmatprep.subr.mxu0 0.0
  %420 = vmatpush2.msra.mxu0 0.0
  %421 = vmatprep.subr.mxu0 0.0
  %422 = vmatpush2.msra.mxu0 0.0
  %423 = vmatprep.subr.mxu0 0.0
  %424 = vmatpush2.msra.mxu0 0.0
  %425 = vmatprep.subr.mxu0 0.0
  %426 = vmatpush2.msra.mxu0 0.0
  %427 = vmatprep.subr.mxu0 0.0
  %428 = vmatpush2.msra.mxu0 0.0
  %429 = vmatprep.subr.mxu0 0.0
  %430 = vmatpush2.msra.mxu0 0.0
  %431 = vmatprep.subr.mxu0 0.0
  %432 = vmatpush2.msra.mxu0 0.0
  %433 = vmatprep.subr.mxu0 0.0
  %434 = vmatpush2.msra.mxu0 0.0
  %435 = vmatprep.subr.mxu0 0.0
  %436 = vmatpush2.msra.mxu0 0.0
  %437 = vmatprep.subr.mxu0 0.0
  %438 = vmatpush2.msra.mxu0 0.0
  %439 = vmatprep.subr.mxu0 0.0
  %440 = vmatpush2.msra.mxu0 0.0
  %441 = vmatprep.subr.mxu0 0.0
  %442 = vmatpush2.msra.mxu0 0.0
  %443 = vmatprep.subr.mxu0 0.0
  %444 = vmatpush2.msra.mxu0 0.0
  %445 = vmatprep.subr.mxu0 0.0
  %446 = vmatpush2.msra.mxu0 0.0
  %447 = vmatprep.subr.mxu0 0.0
  %448 = vmatpush2.msra.mxu0 0.0
  %449 = vmatprep.mubr.f32.mxu0 0.0
  %450 = vmatmul.mubr.f32.gmra.mxu0 %v383
  %v451 = vpop.f32.mrf.mxu0
  %v452 = vadd.f32 0.0, %v451
  %v453 = vpop.f32.mrf.mxu0
  %v454 = vadd.f32 0.0, %v453
  %455 = vdwg.mxu0
  %v456 = vadd.f32 %v381, %v452
  %v457 = vadd.f32 %v382, %v454
  %v458 = vtanh.pop %v456
  %v459 = vtanh.pop %v457
  %v460 = vxor.u32 %v456, 2147483648
  %v461 = vxor.u32 %v457, 2147483648
  %v462 = vmul.f32 %v460, 1.442695
  %v463 = vpow.pop %v462
  %v464 = vmul.f32 %v461, 1.442695
  %v465 = vpow.pop %v464
  %v466 = vadd.f32 %v463, 1.0
  %v467 = vadd.f32 %v465, 1.0
  %v468 = vrcp.pop %v466
  %v469 = vmul.f32 1.0, %v468
  %v470 = vrcp.pop %v467
  %v471 = vmul.f32 1.0, %v470
  %v472 = vsel %vm256, %v458, %v469
  %v473 = vsel %vm257, %v459, %v471
  %v474 = vmul.f32 %v472, %v364
  %v475 = vmul.f32 %v472, %v473
  %477 = vrot.lane.b32.xlu0 %v475, 64
  %v478 = vpop.permute.xlu0 %477
  %v480 = vadd.f32 %v474, %v478
  %v481 = vtanh.pop %v480
  %v482 = vmul.f32 %v473, %v481
  %484 = vrot.lane.b32.xlu0 %v482, 64
  %v485 = vpop.permute.xlu0 %484
  %s487 = scalar_lea.vmem %s6, 8
  %488 = vst.msk [vmem:[%s487] sm:$0xff] %vm53, %v485
  %s489 = scalar_lea.vmem %s6, 48
  %490 = vst.msk [vmem:[%s489] sm:$0xff] %vm373, %v485
  %s491 = scalar_lea.vmem [#allocation2], 32
  %v492 = vld [vmem:[%s491] sm:$0xff]
  %v493 = vld [vmem:[%s491 + $0x8] sm:$0xff]
  %s494 = scalar_lea.vmem [#allocation2], 80
  %v495 = vld [vmem:[%s494] sm:$0xff]
  %v496 = vld [vmem:[%s494 + $0x8] sm:$0xff]
  %v497 = vsel %vm250, %v492, %v495
  %v498 = vsel %vm251, %v493, %v496
  %v499 = vsel %vm265, %v485, 0
  %501 = vmatprep.subr.mxu0 0.0
  %502 = vmatpush1.msra.mxu0 0.0
  %503 = vmatprep.subr.mxu0 0.0
  %504 = vmatpush1.msra.mxu0 0.0
  %505 = vmatprep.subr.mxu0 0.0
  %506 = vmatpush1.msra.mxu0 0.0
  %507 = vmatprep.subr.mxu0 0.0
  %508 = vmatpush1.msra.mxu0 0.0
  %509 = vmatprep.subr.mxu0 0.0
  %510 = vmatpush1.msra.mxu0 0.0
  %511 = vmatprep.subr.mxu0 0.0
  %512 = vmatpush1.msra.mxu0 0.0
  %513 = vmatprep.subr.mxu0 0.0
  %514 = vmatpush1.msra.mxu0 0.0
  %515 = vmatprep.subr.mxu0 0.0
  %516 = vmatpush1.msra.mxu0 0.0
  %517 = vmatprep.subr.mxu0 %v222
  %518 = vmatpush1.msra.mxu0 %v221
  %519 = vmatprep.subr.mxu0 %v220
  %520 = vmatpush1.msra.mxu0 %v219
  %521 = vmatprep.subr.mxu0 %v218
  %522 = vmatpush1.msra.mxu0 %v217
  %523 = vmatprep.subr.mxu0 %v216
  %524 = vmatpush1.msra.mxu0 %v215
  %525 = vmatprep.subr.mxu0 %v214
  %526 = vmatpush1.msra.mxu0 %v213
  %527 = vmatprep.subr.mxu0 %v212
  %528 = vmatpush1.msra.mxu0 %v211
  %529 = vmatprep.subr.mxu0 %v210
  %530 = vmatpush1.msra.mxu0 %v209
  %531 = vmatprep.subr.mxu0 %v208
  %532 = vmatpush1.msra.mxu0 %v207
  %533 = vmatprep.subr.mxu0 0.0
  %534 = vmatpush2.msra.mxu0 0.0
  %535 = vmatprep.subr.mxu0 0.0
  %536 = vmatpush2.msra.mxu0 0.0
  %537 = vmatprep.subr.mxu0 0.0
  %538 = vmatpush2.msra.mxu0 0.0
  %539 = vmatprep.subr.mxu0 0.0
  %540 = vmatpush2.msra.mxu0 0.0
  %541 = vmatprep.subr.mxu0 0.0
  %542 = vmatpush2.msra.mxu0 0.0
  %543 = vmatprep.subr.mxu0 0.0
  %544 = vmatpush2.msra.mxu0 0.0
  %545 = vmatprep.subr.mxu0 0.0
  %546 = vmatpush2.msra.mxu0 0.0
  %547 = vmatprep.subr.mxu0 0.0
  %548 = vmatpush2.msra.mxu0 0.0
  %549 = vmatprep.subr.mxu0 0.0
  %550 = vmatpush2.msra.mxu0 0.0
  %551 = vmatprep.subr.mxu0 0.0
  %552 = vmatpush2.msra.mxu0 0.0
  %553 = vmatprep.subr.mxu0 0.0
  %554 = vmatpush2.msra.mxu0 0.0
  %555 = vmatprep.subr.mxu0 0.0
  %556 = vmatpush2.msra.mxu0 0.0
  %557 = vmatprep.subr.mxu0 0.0
  %558 = vmatpush2.msra.mxu0 0.0
  %559 = vmatprep.subr.mxu0 0.0
  %560 = vmatpush2.msra.mxu0 0.0
  %561 = vmatprep.subr.mxu0 0.0
  %562 = vmatpush2.msra.mxu0 0.0
  %563 = vmatprep.subr.mxu0 0.0
  %564 = vmatpush2.msra.mxu0 0.0
  %565 = vmatprep.mubr.f32.mxu0 0.0
  %566 = vmatmul.mubr.f32.gmra.mxu0 %v499
  %v567 = vpop.f32.mrf.mxu0
  %v568 = vadd.f32 0.0, %v567
  %v569 = vpop.f32.mrf.mxu0
  %v570 = vadd.f32 0.0, %v569
  %571 = vdwg.mxu0
  %v572 = vadd.f32 %v497, %v568
  %v573 = vadd.f32 %v498, %v570
  %v574 = vtanh.pop %v572
  %v575 = vtanh.pop %v573
  %v576 = vxor.u32 %v572, 2147483648
  %v577 = vxor.u32 %v573, 2147483648
  %v578 = vmul.f32 %v576, 1.442695
  %v579 = vpow.pop %v578
  %v580 = vmul.f32 %v577, 1.442695
  %v581 = vpow.pop %v580
  %v582 = vadd.f32 %v579, 1.0
  %v583 = vadd.f32 %v581, 1.0
  %v584 = vrcp.pop %v582
  %v585 = vmul.f32 1.0, %v584
  %v586 = vrcp.pop %v583
  %v587 = vmul.f32 1.0, %v586
  %v588 = vsel %vm256, %v574, %v585
  %v589 = vsel %vm257, %v575, %v587
  %v590 = vmul.f32 %v588, %v480
  %v591 = vmul.f32 %v588, %v589
  %593 = vrot.lane.b32.xlu0 %v591, 64
  %v594 = vpop.permute.xlu0 %593
  %v596 = vadd.f32 %v590, %v594
  %v597 = vtanh.pop %v596
  %v598 = vmul.f32 %v589, %v597
  %600 = vrot.lane.b32.xlu0 %v598, 64
  %v601 = vpop.permute.xlu0 %600
  %s603 = scalar_lea.vmem %s6, 16
  %604 = vst.msk [vmem:[%s603] sm:$0xff] %vm53, %v601
  %s605 = scalar_lea.vmem %s6, 40
  %606 = vst.msk [vmem:[%s605] sm:$0xff] %vm373, %v601
  %s607 = scalar_lea.vmem [#allocation2], 48
  %v608 = vld [vmem:[%s607] sm:$0xff]
  %v609 = vld [vmem:[%s607 + $0x8] sm:$0xff]
  %s610 = scalar_lea.vmem [#allocation2], 64
  %v611 = vld [vmem:[%s610] sm:$0xff]
  %v612 = vld [vmem:[%s610 + $0x8] sm:$0xff]
  %v613 = vsel %vm250, %v608, %v611
  %v614 = vsel %vm251, %v609, %v612
  %v615 = vsel %vm265, %v601, 0
  %617 = vmatprep.subr.mxu0 0.0
  %618 = vmatpush1.msra.mxu0 0.0
  %619 = vmatprep.subr.mxu0 0.0
  %620 = vmatpush1.msra.mxu0 0.0
  %621 = vmatprep.subr.mxu0 0.0
  %622 = vmatpush1.msra.mxu0 0.0
  %623 = vmatprep.subr.mxu0 0.0
  %624 = vmatpush1.msra.mxu0 0.0
  %625 = vmatprep.subr.mxu0 0.0
  %626 = vmatpush1.msra.mxu0 0.0
  %627 = vmatprep.subr.mxu0 0.0
  %628 = vmatpush1.msra.mxu0 0.0
  %629 = vmatprep.subr.mxu0 0.0
  %630 = vmatpush1.msra.mxu0 0.0
  %631 = vmatprep.subr.mxu0 0.0
  %632 = vmatpush1.msra.mxu0 0.0
  %633 = vmatprep.subr.mxu0 %v222
  %634 = vmatpush1.msra.mxu0 %v221
  %635 = vmatprep.subr.mxu0 %v220
  %636 = vmatpush1.msra.mxu0 %v219
  %637 = vmatprep.subr.mxu0 %v218
  %638 = vmatpush1.msra.mxu0 %v217
  %639 = vmatprep.subr.mxu0 %v216
  %640 = vmatpush1.msra.mxu0 %v215
  %641 = vmatprep.subr.mxu0 %v214
  %642 = vmatpush1.msra.mxu0 %v213
  %643 = vmatprep.subr.mxu0 %v212
  %644 = vmatpush1.msra.mxu0 %v211
  %645 = vmatprep.subr.mxu0 %v210
  %646 = vmatpush1.msra.mxu0 %v209
  %647 = vmatprep.subr.mxu0 %v208
  %648 = vmatpush1.msra.mxu0 %v207
  %649 = vmatprep.subr.mxu0 0.0
  %650 = vmatpush2.msra.mxu0 0.0
  %651 = vmatprep.subr.mxu0 0.0
  %652 = vmatpush2.msra.mxu0 0.0
  %653 = vmatprep.subr.mxu0 0.0
  %654 = vmatpush2.msra.mxu0 0.0
  %655 = vmatprep.subr.mxu0 0.0
  %656 = vmatpush2.msra.mxu0 0.0
  %657 = vmatprep.subr.mxu0 0.0
  %658 = vmatpush2.msra.mxu0 0.0
  %659 = vmatprep.subr.mxu0 0.0
  %660 = vmatpush2.msra.mxu0 0.0
  %661 = vmatprep.subr.mxu0 0.0
  %662 = vmatpush2.msra.mxu0 0.0
  %663 = vmatprep.subr.mxu0 0.0
  %664 = vmatpush2.msra.mxu0 0.0
  %665 = vmatprep.subr.mxu0 0.0
  %666 = vmatpush2.msra.mxu0 0.0
  %667 = vmatprep.subr.mxu0 0.0
  %668 = vmatpush2.msra.mxu0 0.0
  %669 = vmatprep.subr.mxu0 0.0
  %670 = vmatpush2.msra.mxu0 0.0
  %671 = vmatprep.subr.mxu0 0.0
  %672 = vmatpush2.msra.mxu0 0.0
  %673 = vmatprep.subr.mxu0 0.0
  %674 = vmatpush2.msra.mxu0 0.0
  %675 = vmatprep.subr.mxu0 0.0
  %676 = vmatpush2.msra.mxu0 0.0
  %677 = vmatprep.subr.mxu0 0.0
  %678 = vmatpush2.msra.mxu0 0.0
  %679 = vmatprep.subr.mxu0 0.0
  %680 = vmatpush2.msra.mxu0 0.0
  %681 = vmatprep.mubr.f32.mxu0 0.0
  %682 = vmatmul.mubr.f32.gmra.mxu0 %v615
  %v683 = vpop.f32.mrf.mxu0
  %v684 = vadd.f32 0.0, %v683
  %v685 = vpop.f32.mrf.mxu0
  %v686 = vadd.f32 0.0, %v685
  %687 = vdwg.mxu0
  %v688 = vadd.f32 %v613, %v684
  %v689 = vadd.f32 %v614, %v686
  %v690 = vtanh.pop %v688
  %v691 = vtanh.pop %v689
  %v692 = vxor.u32 %v688, 2147483648
  %v693 = vxor.u32 %v689, 2147483648
  %v694 = vmul.f32 %v692, 1.442695
  %v695 = vpow.pop %v694
  %v696 = vmul.f32 %v693, 1.442695
  %v697 = vpow.pop %v696
  %v698 = vadd.f32 %v695, 1.0
  %v699 = vadd.f32 %v697, 1.0
  %v700 = vrcp.pop %v698
  %v701 = vmul.f32 1.0, %v700
  %v702 = vrcp.pop %v699
  %v703 = vmul.f32 1.0, %v702
  %v704 = vsel %vm256, %v690, %v701
  %v705 = vsel %vm257, %v691, %v703
  %v706 = vmul.f32 %v704, %v596
  %v707 = vmul.f32 %v704, %v705
  %709 = vrot.lane.b32.xlu0 %v707, 64
  %v710 = vpop.permute.xlu0 %709
  %v712 = vadd.f32 %v706, %v710
  %v713 = vtanh.pop %v712
  %v714 = vmul.f32 %v705, %v713
  %716 = vrot.lane.b32.xlu0 %v714, 64
  %v717 = vpop.permute.xlu0 %716
  %s719 = scalar_lea.vmem %s6, 24
  %720 = vst.msk [vmem:[%s719] sm:$0xff] %vm53, %v717
  %s721 = scalar_lea.vmem %s6, 32
  %722 = vst.msk [vmem:[%s721] sm:$0xff] %vm373, %v717
  %v723 = vld [vmem:[%s610] sm:$0xff]
  %v724 = vld [vmem:[%s610 + $0x8] sm:$0xff]
  %v725 = vld [vmem:[%s607] sm:$0xff]
  %v726 = vld [vmem:[%s607 + $0x8] sm:$0xff]
  %v727 = vsel %vm250, %v723, %v725
  %v728 = vsel %vm251, %v724, %v726
  %v729 = vsel %vm265, %v717, 0
  %731 = vmatprep.subr.mxu0 0.0
  %732 = vmatpush1.msra.mxu0 0.0
  %733 = vmatprep.subr.mxu0 0.0
  %734 = vmatpush1.msra.mxu0 0.0
  %735 = vmatprep.subr.mxu0 0.0
  %736 = vmatpush1.msra.mxu0 0.0
  %737 = vmatprep.subr.mxu0 0.0
  %738 = vmatpush1.msra.mxu0 0.0
  %739 = vmatprep.subr.mxu0 0.0
  %740 = vmatpush1.msra.mxu0 0.0
  %741 = vmatprep.subr.mxu0 0.0
  %742 = vmatpush1.msra.mxu0 0.0
  %743 = vmatprep.subr.mxu0 0.0
  %744 = vmatpush1.msra.mxu0 0.0
  %745 = vmatprep.subr.mxu0 0.0
  %746 = vmatpush1.msra.mxu0 0.0
  %747 = vmatprep.subr.mxu0 %v222
  %748 = vmatpush1.msra.mxu0 %v221
  %749 = vmatprep.subr.mxu0 %v220
  %750 = vmatpush1.msra.mxu0 %v219
  %751 = vmatprep.subr.mxu0 %v218
  %752 = vmatpush1.msra.mxu0 %v217
  %753 = vmatprep.subr.mxu0 %v216
  %754 = vmatpush1.msra.mxu0 %v215
  %755 = vmatprep.subr.mxu0 %v214
  %756 = vmatpush1.msra.mxu0 %v213
  %757 = vmatprep.subr.mxu0 %v212
  %758 = vmatpush1.msra.mxu0 %v211
  %759 = vmatprep.subr.mxu0 %v210
  %760 = vmatpush1.msra.mxu0 %v209
  %761 = vmatprep.subr.mxu0 %v208
  %762 = vmatpush1.msra.mxu0 %v207
  %763 = vmatprep.subr.mxu0 0.0
  %764 = vmatpush2.msra.mxu0 0.0
  %765 = vmatprep.subr.mxu0 0.0
  %766 = vmatpush2.msra.mxu0 0.0
  %767 = vmatprep.subr.mxu0 0.0
  %768 = vmatpush2.msra.mxu0 0.0
  %769 = vmatprep.subr.mxu0 0.0
  %770 = vmatpush2.msra.mxu0 0.0
  %771 = vmatprep.subr.mxu0 0.0
  %772 = vmatpush2.msra.mxu0 0.0
  %773 = vmatprep.subr.mxu0 0.0
  %774 = vmatpush2.msra.mxu0 0.0
  %775 = vmatprep.subr.mxu0 0.0
  %776 = vmatpush2.msra.mxu0 0.0
  %777 = vmatprep.subr.mxu0 0.0
  %778 = vmatpush2.msra.mxu0 0.0
  %779 = vmatprep.subr.mxu0 0.0
  %780 = vmatpush2.msra.mxu0 0.0
  %781 = vmatprep.subr.mxu0 0.0
  %782 = vmatpush2.msra.mxu0 0.0
  %783 = vmatprep.subr.mxu0 0.0
  %784 = vmatpush2.msra.mxu0 0.0
  %785 = vmatprep.subr.mxu0 0.0
  %786 = vmatpush2.msra.mxu0 0.0
  %787 = vmatprep.subr.mxu0 0.0
  %788 = vmatpush2.msra.mxu0 0.0
  %789 = vmatprep.subr.mxu0 0.0
  %790 = vmatpush2.msra.mxu0 0.0
  %791 = vmatprep.subr.mxu0 0.0
  %792 = vmatpush2.msra.mxu0 0.0
  %793 = vmatprep.subr.mxu0 0.0
  %794 = vmatpush2.msra.mxu0 0.0
  %795 = vmatprep.mubr.f32.mxu0 0.0
  %796 = vmatmul.mubr.f32.gmra.mxu0 %v729
  %v797 = vpop.f32.mrf.mxu0
  %v798 = vadd.f32 0.0, %v797
  %v799 = vpop.f32.mrf.mxu0
  %v800 = vadd.f32 0.0, %v799
  %801 = vdwg.mxu0
  %v802 = vadd.f32 %v727, %v798
  %v803 = vadd.f32 %v728, %v800
  %v804 = vtanh.pop %v802
  %v805 = vtanh.pop %v803
  %v806 = vxor.u32 %v802, 2147483648
  %v807 = vxor.u32 %v803, 2147483648
  %v808 = vmul.f32 %v806, 1.442695
  %v809 = vpow.pop %v808
  %v810 = vmul.f32 %v807, 1.442695
  %v811 = vpow.pop %v810
  %v812 = vadd.f32 %v809, 1.0
  %v813 = vadd.f32 %v811, 1.0
  %v814 = vrcp.pop %v812
  %v815 = vmul.f32 1.0, %v814
  %v816 = vrcp.pop %v813
  %v817 = vmul.f32 1.0, %v816
  %v818 = vsel %vm256, %v804, %v815
  %v819 = vsel %vm257, %v805, %v817
  %v820 = vmul.f32 %v818, %v712
  %v821 = vmul.f32 %v818, %v819
  %823 = vrot.lane.b32.xlu0 %v821, 64
  %v824 = vpop.permute.xlu0 %823
  %v826 = vadd.f32 %v820, %v824
  %v827 = vtanh.pop %v826
  %v828 = vmul.f32 %v819, %v827
  %830 = vrot.lane.b32.xlu0 %v828, 64
  %v831 = vpop.permute.xlu0 %830
  %833 = vst.msk [vmem:[%s721] sm:$0xff] %vm53, %v831
  %834 = vst.msk [vmem:[%s719] sm:$0xff] %vm373, %v831
  %v835 = vld [vmem:[%s494] sm:$0xff]
  %v836 = vld [vmem:[%s494 + $0x8] sm:$0xff]
  %v837 = vld [vmem:[%s491] sm:$0xff]
  %v838 = vld [vmem:[%s491 + $0x8] sm:$0xff]
  %v839 = vsel %vm250, %v835, %v837
  %v840 = vsel %vm251, %v836, %v838
  %v841 = vsel %vm265, %v831, 0
  %843 = vmatprep.subr.mxu0 0.0
  %844 = vmatpush1.msra.mxu0 0.0
  %845 = vmatprep.subr.mxu0 0.0
  %846 = vmatpush1.msra.mxu0 0.0
  %847 = vmatprep.subr.mxu0 0.0
  %848 = vmatpush1.msra.mxu0 0.0
  %849 = vmatprep.subr.mxu0 0.0
  %850 = vmatpush1.msra.mxu0 0.0
  %851 = vmatprep.subr.mxu0 0.0
  %852 = vmatpush1.msra.mxu0 0.0
  %853 = vmatprep.subr.mxu0 0.0
  %854 = vmatpush1.msra.mxu0 0.0
  %855 = vmatprep.subr.mxu0 0.0
  %856 = vmatpush1.msra.mxu0 0.0
  %857 = vmatprep.subr.mxu0 0.0
  %858 = vmatpush1.msra.mxu0 0.0
  %859 = vmatprep.subr.mxu0 %v222
  %860 = vmatpush1.msra.mxu0 %v221
  %861 = vmatprep.subr.mxu0 %v220
  %862 = vmatpush1.msra.mxu0 %v219
  %863 = vmatprep.subr.mxu0 %v218
  %864 = vmatpush1.msra.mxu0 %v217
  %865 = vmatprep.subr.mxu0 %v216
  %866 = vmatpush1.msra.mxu0 %v215
  %867 = vmatprep.subr.mxu0 %v214
  %868 = vmatpush1.msra.mxu0 %v213
  %869 = vmatprep.subr.mxu0 %v212
  %870 = vmatpush1.msra.mxu0 %v211
  %871 = vmatprep.subr.mxu0 %v210
  %872 = vmatpush1.msra.mxu0 %v209
  %873 = vmatprep.subr.mxu0 %v208
  %874 = vmatpush1.msra.mxu0 %v207
  %875 = vmatprep.subr.mxu0 0.0
  %876 = vmatpush2.msra.mxu0 0.0
  %877 = vmatprep.subr.mxu0 0.0
  %878 = vmatpush2.msra.mxu0 0.0
  %879 = vmatprep.subr.mxu0 0.0
  %880 = vmatpush2.msra.mxu0 0.0
  %881 = vmatprep.subr.mxu0 0.0
  %882 = vmatpush2.msra.mxu0 0.0
  %883 = vmatprep.subr.mxu0 0.0
  %884 = vmatpush2.msra.mxu0 0.0
  %885 = vmatprep.subr.mxu0 0.0
  %886 = vmatpush2.msra.mxu0 0.0
  %887 = vmatprep.subr.mxu0 0.0
  %888 = vmatpush2.msra.mxu0 0.0
  %889 = vmatprep.subr.mxu0 0.0
  %890 = vmatpush2.msra.mxu0 0.0
  %891 = vmatprep.subr.mxu0 0.0
  %892 = vmatpush2.msra.mxu0 0.0
  %893 = vmatprep.subr.mxu0 0.0
  %894 = vmatpush2.msra.mxu0 0.0
  %895 = vmatprep.subr.mxu0 0.0
  %896 = vmatpush2.msra.mxu0 0.0
  %897 = vmatprep.subr.mxu0 0.0
  %898 = vmatpush2.msra.mxu0 0.0
  %899 = vmatprep.subr.mxu0 0.0
  %900 = vmatpush2.msra.mxu0 0.0
  %901 = vmatprep.subr.mxu0 0.0
  %902 = vmatpush2.msra.mxu0 0.0
  %903 = vmatprep.subr.mxu0 0.0
  %904 = vmatpush2.msra.mxu0 0.0
  %905 = vmatprep.subr.mxu0 0.0
  %906 = vmatpush2.msra.mxu0 0.0
  %907 = vmatprep.mubr.f32.mxu0 0.0
  %908 = vmatmul.mubr.f32.gmra.mxu0 %v841
  %v909 = vpop.f32.mrf.mxu0
  %v910 = vadd.f32 0.0, %v909
  %v911 = vpop.f32.mrf.mxu0
  %v912 = vadd.f32 0.0, %v911
  %913 = vdwg.mxu0
  %v914 = vadd.f32 %v839, %v910
  %v915 = vadd.f32 %v840, %v912
  %v916 = vtanh.pop %v914
  %v917 = vtanh.pop %v915
  %v918 = vxor.u32 %v914, 2147483648
  %v919 = vxor.u32 %v915, 2147483648
  %v920 = vmul.f32 %v918, 1.442695
  %v921 = vpow.pop %v920
  %v922 = vmul.f32 %v919, 1.442695
  %v923 = vpow.pop %v922
  %v924 = vadd.f32 %v921, 1.0
  %v925 = vadd.f32 %v923, 1.0
  %v926 = vrcp.pop %v924
  %v927 = vmul.f32 1.0, %v926
  %v928 = vrcp.pop %v925
  %v929 = vmul.f32 1.0, %v928
  %v930 = vsel %vm256, %v916, %v927
  %v931 = vsel %vm257, %v917, %v929
  %v932 = vmul.f32 %v930, %v826
  %v933 = vmul.f32 %v930, %v931
  %935 = vrot.lane.b32.xlu0 %v933, 64
  %v936 = vpop.permute.xlu0 %935
  %v938 = vadd.f32 %v932, %v936
  %v939 = vtanh.pop %v938
  %v940 = vmul.f32 %v931, %v939
  %942 = vrot.lane.b32.xlu0 %v940, 64
  %v943 = vpop.permute.xlu0 %942
  %945 = vst.msk [vmem:[%s605] sm:$0xff] %vm53, %v943
  %946 = vst.msk [vmem:[%s603] sm:$0xff] %vm373, %v943
  %v947 = vld [vmem:[%s378] sm:$0xff]
  %v948 = vld [vmem:[%s378 + $0x8] sm:$0xff]
  %v949 = vld [vmem:[%s375] sm:$0xff]
  %v950 = vld [vmem:[%s375 + $0x8] sm:$0xff]
  %v951 = vsel %vm250, %v947, %v949
  %v952 = vsel %vm251, %v948, %v950
  %v953 = vsel %vm265, %v943, 0
  %955 = vmatprep.subr.mxu0 0.0
  %956 = vmatpush1.msra.mxu0 0.0
  %957 = vmatprep.subr.mxu0 0.0
  %958 = vmatpush1.msra.mxu0 0.0
  %959 = vmatprep.subr.mxu0 0.0
  %960 = vmatpush1.msra.mxu0 0.0
  %961 = vmatprep.subr.mxu0 0.0
  %962 = vmatpush1.msra.mxu0 0.0
  %963 = vmatprep.subr.mxu0 0.0
  %964 = vmatpush1.msra.mxu0 0.0
  %965 = vmatprep.subr.mxu0 0.0
  %966 = vmatpush1.msra.mxu0 0.0
  %967 = vmatprep.subr.mxu0 0.0
  %968 = vmatpush1.msra.mxu0 0.0
  %969 = vmatprep.subr.mxu0 0.0
  %970 = vmatpush1.msra.mxu0 0.0
  %971 = vmatprep.subr.mxu0 %v222
  %972 = vmatpush1.msra.mxu0 %v221
  %973 = vmatprep.subr.mxu0 %v220
  %974 = vmatpush1.msra.mxu0 %v219
  %975 = vmatprep.subr.mxu0 %v218
  %976 = vmatpush1.msra.mxu0 %v217
  %977 = vmatprep.subr.mxu0 %v216
  %978 = vmatpush1.msra.mxu0 %v215
  %979 = vmatprep.subr.mxu0 %v214
  %980 = vmatpush1.msra.mxu0 %v213
  %981 = vmatprep.subr.mxu0 %v212
  %982 = vmatpush1.msra.mxu0 %v211
  %983 = vmatprep.subr.mxu0 %v210
  %984 = vmatpush1.msra.mxu0 %v209
  %985 = vmatprep.subr.mxu0 %v208
  %986 = vmatpush1.msra.mxu0 %v207
  %987 = vmatprep.subr.mxu0 0.0
  %988 = vmatpush2.msra.mxu0 0.0
  %989 = vmatprep.subr.mxu0 0.0
  %990 = vmatpush2.msra.mxu0 0.0
  %991 = vmatprep.subr.mxu0 0.0
  %992 = vmatpush2.msra.mxu0 0.0
  %993 = vmatprep.subr.mxu0 0.0
  %994 = vmatpush2.msra.mxu0 0.0
  %995 = vmatprep.subr.mxu0 0.0
  %996 = vmatpush2.msra.mxu0 0.0
  %997 = vmatprep.subr.mxu0 0.0
  %998 = vmatpush2.msra.mxu0 0.0
  %999 = vmatprep.subr.mxu0 0.0
  %1000 = vmatpush2.msra.mxu0 0.0
  %1001 = vmatprep.subr.mxu0 0.0
  %1002 = vmatpush2.msra.mxu0 0.0
  %1003 = vmatprep.subr.mxu0 0.0
  %1004 = vmatpush2.msra.mxu0 0.0
  %1005 = vmatprep.subr.mxu0 0.0
  %1006 = vmatpush2.msra.mxu0 0.0
  %1007 = vmatprep.subr.mxu0 0.0
  %1008 = vmatpush2.msra.mxu0 0.0
  %1009 = vmatprep.subr.mxu0 0.0
  %1010 = vmatpush2.msra.mxu0 0.0
  %1011 = vmatprep.subr.mxu0 0.0
  %1012 = vmatpush2.msra.mxu0 0.0
  %1013 = vmatprep.subr.mxu0 0.0
  %1014 = vmatpush2.msra.mxu0 0.0
  %1015 = vmatprep.subr.mxu0 0.0
  %1016 = vmatpush2.msra.mxu0 0.0
  %1017 = vmatprep.subr.mxu0 0.0
  %1018 = vmatpush2.msra.mxu0 0.0
  %1019 = vmatprep.mubr.f32.mxu0 0.0
  %1020 = vmatmul.mubr.f32.gmra.mxu0 %v953
  %v1021 = vpop.f32.mrf.mxu0
  %v1022 = vadd.f32 0.0, %v1021
  %v1023 = vpop.f32.mrf.mxu0
  %v1024 = vadd.f32 0.0, %v1023
  %1025 = vdwg.mxu0
  %v1026 = vadd.f32 %v951, %v1022
  %v1027 = vadd.f32 %v952, %v1024
  %v1028 = vtanh.pop %v1026
  %v1029 = vtanh.pop %v1027
  %v1030 = vxor.u32 %v1026, 2147483648
  %v1031 = vxor.u32 %v1027, 2147483648
  %v1032 = vmul.f32 %v1030, 1.442695
  %v1033 = vpow.pop %v1032
  %v1034 = vmul.f32 %v1031, 1.442695
  %v1035 = vpow.pop %v1034
  %v1036 = vadd.f32 %v1033, 1.0
  %v1037 = vadd.f32 %v1035, 1.0
  %v1038 = vrcp.pop %v1036
  %v1039 = vmul.f32 1.0, %v1038
  %v1040 = vrcp.pop %v1037
  %v1041 = vmul.f32 1.0, %v1040
  %v1042 = vsel %vm256, %v1028, %v1039
  %v1043 = vsel %vm257, %v1029, %v1041
  %v1044 = vmul.f32 %v1042, %v938
  %v1045 = vmul.f32 %v1042, %v1043
  %1047 = vrot.lane.b32.xlu0 %v1045, 64
  %v1048 = vpop.permute.xlu0 %1047
  %v1050 = vadd.f32 %v1044, %v1048
  %v1051 = vtanh.pop %v1050
  %v1052 = vmul.f32 %v1043, %v1051
  %1054 = vrot.lane.b32.xlu0 %v1052, 64
  %v1055 = vpop.permute.xlu0 %1054
  %1057 = vst.msk [vmem:[%s489] sm:$0xff] %vm53, %v1055
  %1058 = vst.msk [vmem:[%s487] sm:$0xff] %vm373, %v1055
  %v1059 = vld [vmem:[%s260] sm:$0xff]
  %v1060 = vld [vmem:[%s260 + $0x8] sm:$0xff]
  %v1061 = vld [vmem:[#allocation2] sm:$0xff]
  %v1062 = vld [vmem:[#allocation2 + $0x8] sm:$0xff]
  %v1063 = vsel %vm250, %v1059, %v1061
  %v1064 = vsel %vm251, %v1060, %v1062
  %v1065 = vsel %vm265, %v1055, 0
  %1067 = vmatprep.subr.mxu0 0.0
  %1068 = vmatpush1.msra.mxu0 0.0
  %1069 = vmatprep.subr.mxu0 0.0
  %1070 = vmatpush1.msra.mxu0 0.0
  %1071 = vmatprep.subr.mxu0 0.0
  %1072 = vmatpush1.msra.mxu0 0.0
  %1073 = vmatprep.subr.mxu0 0.0
  %1074 = vmatpush1.msra.mxu0 0.0
  %1075 = vmatprep.subr.mxu0 0.0
  %1076 = vmatpush1.msra.mxu0 0.0
  %1077 = vmatprep.subr.mxu0 0.0
  %1078 = vmatpush1.msra.mxu0 0.0
  %1079 = vmatprep.subr.mxu0 0.0
  %1080 = vmatpush1.msra.mxu0 0.0
  %1081 = vmatprep.subr.mxu0 0.0
  %1082 = vmatpush1.msra.mxu0 0.0
  %1083 = vmatprep.subr.mxu0 %v222
  %1084 = vmatpush1.msra.mxu0 %v221
  %1085 = vmatprep.subr.mxu0 %v220
  %1086 = vmatpush1.msra.mxu0 %v219
  %1087 = vmatprep.subr.mxu0 %v218
  %1088 = vmatpush1.msra.mxu0 %v217
  %1089 = vmatprep.subr.mxu0 %v216
  %1090 = vmatpush1.msra.mxu0 %v215
  %1091 = vmatprep.subr.mxu0 %v214
  %1092 = vmatpush1.msra.mxu0 %v213
  %1093 = vmatprep.subr.mxu0 %v212
  %1094 = vmatpush1.msra.mxu0 %v211
  %1095 = vmatprep.subr.mxu0 %v210
  %1096 = vmatpush1.msra.mxu0 %v209
  %1097 = vmatprep.subr.mxu0 %v208
  %1098 = vmatpush1.msra.mxu0 %v207
  %1099 = vmatprep.subr.mxu0 0.0
  %1100 = vmatpush2.msra.mxu0 0.0
  %1101 = vmatprep.subr.mxu0 0.0
  %1102 = vmatpush2.msra.mxu0 0.0
  %1103 = vmatprep.subr.mxu0 0.0
  %1104 = vmatpush2.msra.mxu0 0.0
  %1105 = vmatprep.subr.mxu0 0.0
  %1106 = vmatpush2.msra.mxu0 0.0
  %1107 = vmatprep.subr.mxu0 0.0
  %1108 = vmatpush2.msra.mxu0 0.0
  %1109 = vmatprep.subr.mxu0 0.0
  %1110 = vmatpush2.msra.mxu0 0.0
  %1111 = vmatprep.subr.mxu0 0.0
  %1112 = vmatpush2.msra.mxu0 0.0
  %1113 = vmatprep.subr.mxu0 0.0
  %1114 = vmatpush2.msra.mxu0 0.0
  %1115 = vmatprep.subr.mxu0 0.0
  %1116 = vmatpush2.msra.mxu0 0.0
  %1117 = vmatprep.subr.mxu0 0.0
  %1118 = vmatpush2.msra.mxu0 0.0
  %1119 = vmatprep.subr.mxu0 0.0
  %1120 = vmatpush2.msra.mxu0 0.0
  %1121 = vmatprep.subr.mxu0 0.0
  %1122 = vmatpush2.msra.mxu0 0.0
  %1123 = vmatprep.subr.mxu0 0.0
  %1124 = vmatpush2.msra.mxu0 0.0
  %1125 = vmatprep.subr.mxu0 0.0
  %1126 = vmatpush2.msra.mxu0 0.0
  %1127 = vmatprep.subr.mxu0 0.0
  %1128 = vmatpush2.msra.mxu0 0.0
  %1129 = vmatprep.subr.mxu0 0.0
  %1130 = vmatpush2.msra.mxu0 0.0
  %1131 = vmatprep.mubr.f32.mxu0 0.0
  %1132 = vmatmul.mubr.f32.gmra.mxu0 %v1065
  %v1133 = vpop.f32.mrf.mxu0
  %v1134 = vadd.f32 0.0, %v1133
  %v1135 = vpop.f32.mrf.mxu0
  %v1136 = vadd.f32 0.0, %v1135
  %1137 = vdwg.mxu0
  %v1138 = vadd.f32 %v1063, %v1134
  %v1139 = vadd.f32 %v1064, %v1136
  %v1140 = vtanh.pop %v1138
  %v1141 = vtanh.pop %v1139
  %v1142 = vxor.u32 %v1138, 2147483648
  %v1143 = vxor.u32 %v1139, 2147483648
  %v1144 = vmul.f32 %v1142, 1.442695
  %v1145 = vpow.pop %v1144
  %v1146 = vmul.f32 %v1143, 1.442695
  %v1147 = vpow.pop %v1146
  %v1148 = vadd.f32 %v1145, 1.0
  %v1149 = vadd.f32 %v1147, 1.0
  %v1150 = vrcp.pop %v1148
  %v1151 = vmul.f32 1.0, %v1150
  %v1152 = vrcp.pop %v1149
  %v1153 = vmul.f32 1.0, %v1152
  %v1154 = vsel %vm256, %v1140, %v1151
  %v1155 = vsel %vm257, %v1141, %v1153
  %v1156 = vmul.f32 %v1154, %v1050
  %v1157 = vmul.f32 %v1154, %v1155
  %1159 = vrot.lane.b32.xlu0 %v1157, 64
  %v1160 = vpop.permute.xlu0 %1159
  %v1162 = vadd.f32 %v1156, %v1160
  %v1163 = vtanh.pop %v1162
  %v1164 = vmul.f32 %v1155, %v1163
  %1166 = vrot.lane.b32.xlu0 %v1164, 64
  %v1167 = vpop.permute.xlu0 %1166
  %1169 = vst.msk [vmem:[%s372] sm:$0xff] %vm53, %v1167
  %1170 = vst.msk [vmem:[%s6] sm:$0xff] %vm373, %v1167
  %v1171 = vsel %vm265, %v1167, %v1162
  %v1172 = vld [vmem:[%s4] sm:$0xff]
  %v1173 = vld [vmem:[%s4 + $0x8] sm:$0xff]
  %v1174 = vld [vmem:[%s4 + $0x10] sm:$0xff]
  %v1175 = vld [vmem:[%s4 + $0x18] sm:$0xff]
  %v1176 = vld [vmem:[%s4 + $0x20] sm:$0xff]
  %v1177 = vld [vmem:[%s4 + $0x28] sm:$0xff]
  %v1178 = vld [vmem:[%s4 + $0x30] sm:$0xff]
  %v1179 = vld [vmem:[%s4 + $0x38] sm:$0xff]
  %v1180 = vld [vmem:[%s4 + $0x40] sm:$0xff]
  %v1181 = vld [vmem:[%s4 + $0x48] sm:$0xff]
  %v1182 = vld [vmem:[%s4 + $0x50] sm:$0xff]
  %v1183 = vld [vmem:[%s4 + $0x58] sm:$0xff]
  %v1184 = vld [vmem:[%s4 + $0x60] sm:$0xff]
  %v1185 = vld [vmem:[%s4 + $0x68] sm:$0xff]
  %v1186 = vld [vmem:[%s4 + $0x70] sm:$0xff]
  %v1187 = vld [vmem:[%s4 + $0x78] sm:$0xff]
  %v1188 = vld [vmem:[%s5] sm:$0x1]
  %v1190 = vlaneseq
  %v1191 = vshrl.u32 %v1190, 7
  %v1192 = vsub.s32 0, %v1191
  %v1193 = vrot.slane %v1188, %v1192
  %1195 = vmatprep.subr.mxu0 0.0
  %1196 = vmatpush1.msra.mxu0 %v1187
  %1197 = vmatprep.subr.mxu0 0.0
  %1198 = vmatpush1.msra.mxu0 %v1186
  %1199 = vmatprep.subr.mxu0 0.0
  %1200 = vmatpush1.msra.mxu0 %v1185
  %1201 = vmatprep.subr.mxu0 0.0
  %1202 = vmatpush1.msra.mxu0 %v1184
  %1203 = vmatprep.subr.mxu0 0.0
  %1204 = vmatpush1.msra.mxu0 %v1183
  %1205 = vmatprep.subr.mxu0 0.0
  %1206 = vmatpush1.msra.mxu0 %v1182
  %1207 = vmatprep.subr.mxu0 0.0
  %1208 = vmatpush1.msra.mxu0 %v1181
  %1209 = vmatprep.subr.mxu0 0.0
  %1210 = vmatpush1.msra.mxu0 %v1180
  %1211 = vmatprep.subr.mxu0 0.0
  %1212 = vmatpush1.msra.mxu0 %v1179
  %1213 = vmatprep.subr.mxu0 0.0
  %1214 = vmatpush1.msra.mxu0 %v1178
  %1215 = vmatprep.subr.mxu0 0.0
  %1216 = vmatpush1.msra.mxu0 %v1177
  %1217 = vmatprep.subr.mxu0 0.0
  %1218 = vmatpush1.msra.mxu0 %v1176
  %1219 = vmatprep.subr.mxu0 0.0
  %1220 = vmatpush1.msra.mxu0 %v1175
  %1221 = vmatprep.subr.mxu0 0.0
  %1222 = vmatpush1.msra.mxu0 %v1174
  %1223 = vmatprep.subr.mxu0 0.0
  %1224 = vmatpush1.msra.mxu0 %v1173
  %1225 = vmatprep.subr.mxu0 0.0
  %1226 = vmatpush1.msra.mxu0 %v1172
  %1227 = vmatprep.subr.mxu0 0.0
  %1228 = vmatpush2.msra.mxu0 0.0
  %1229 = vmatprep.subr.mxu0 0.0
  %1230 = vmatpush2.msra.mxu0 0.0
  %1231 = vmatprep.subr.mxu0 0.0
  %1232 = vmatpush2.msra.mxu0 0.0
  %1233 = vmatprep.subr.mxu0 0.0
  %1234 = vmatpush2.msra.mxu0 0.0
  %1235 = vmatprep.subr.mxu0 0.0
  %1236 = vmatpush2.msra.mxu0 0.0
  %1237 = vmatprep.subr.mxu0 0.0
  %1238 = vmatpush2.msra.mxu0 0.0
  %1239 = vmatprep.subr.mxu0 0.0
  %1240 = vmatpush2.msra.mxu0 0.0
  %1241 = vmatprep.subr.mxu0 0.0
  %1242 = vmatpush2.msra.mxu0 0.0
  %1243 = vmatprep.subr.mxu0 0.0
  %1244 = vmatpush2.msra.mxu0 0.0
  %1245 = vmatprep.subr.mxu0 0.0
  %1246 = vmatpush2.msra.mxu0 0.0
  %1247 = vmatprep.subr.mxu0 0.0
  %1248 = vmatpush2.msra.mxu0 0.0
  %1249 = vmatprep.subr.mxu0 0.0
  %1250 = vmatpush2.msra.mxu0 0.0
  %1251 = vmatprep.subr.mxu0 0.0
  %1252 = vmatpush2.msra.mxu0 0.0
  %1253 = vmatprep.subr.mxu0 0.0
  %1254 = vmatpush2.msra.mxu0 0.0
  %1255 = vmatprep.subr.mxu0 0.0
  %1256 = vmatpush2.msra.mxu0 0.0
  %1257 = vmatprep.subr.mxu0 0.0
  %1258 = vmatpush2.msra.mxu0 0.0
  %1259 = vmatprep.mubr.f32.mxu0 0.0
  %1260 = vmatmul.mubr.f32.gmra.mxu0 %v1171
  %v1261 = vpop.f32.mrf.mxu0
  %v1262 = vadd.f32 %v1193, %v1261
  %v1263 = vpop.f32.mrf.mxu0
  %1264 = vdwg.mxu0
  %1265 = vst.msk [vmem:[%s7] sm:$0xff] %vm265, %v1262
  // Predicated region
  $region26: #{encoder_forward.2} parent=0 // pred_check
    _
  $region27: #{encoder_forward.2} parent=0 // pred_check_branch
    %1267 = sbr.rel (0) target = $region29
  $region28: #{encoder_forward.2} parent=0 // pred_region
    _
  $region29: #{encoder_forward.2} parent=0 // pred_fallthru
    _
  // Predicated region
  $region30: #{encoder_forward.2} parent=0 // pred_check
    _
  $region31: #{encoder_forward.2} parent=0 // pred_check_branch
    %1269 = sbr.rel (0) target = $region33
  $region32: #{encoder_forward.2} parent=0 // pred_region
    _
  $region33: #{encoder_forward.2} parent=0 // pred_fallthru
    _
  // Predicated region
  $region34: #{encoder_forward.2} parent=0 // pred_check
    _
  $region35: #{encoder_forward.2} parent=0 // pred_check_branch
    %1271 = sbr.rel (0) target = $region37
  $region36: #{encoder_forward.2} parent=0 // pred_region
    _
  $region37: #{encoder_forward.2} parent=0 // pred_fallthru
    _
  // Predicated region
  $region38: #{encoder_forward.2} parent=0 // pred_check
    _
  $region39: #{encoder_forward.2} parent=0 // pred_check_branch
    %1273 = sbr.rel (0) target = $region41
  $region40: #{encoder_forward.2} parent=0 // pred_region
    _
  $region41: #{encoder_forward.2} parent=0 // pred_fallthru
    _

</llo_original>
